<compile_context>
chip_gen: v7x
topology: tpu7x:2x2x1
jax: 0.10.0
libtpu: 0.0.40
codegen_flags: <defaults>
</compile_context>

<pallas_src>
import jax
import jax.numpy as jnp
from jax import lax
from jax.experimental import pallas as pl
from jax.experimental.pallas import tpu as pltpu

GN_EPS = 1e-5  # PyG GraphNorm default eps


def _round_up(a, b):
    return (a + b - 1) // b * b


def _dotT(a, b):
    """(K, I), (K, J) -> (I, J): contract the leading (sublane) axis of both."""
    return lax.dot_general(a, b, (((0,), (0,)), ((), ())),
                           preferred_element_type=jnp.float32)


# --------------------------------------------------------------------------
# Kernel
# --------------------------------------------------------------------------
def make_gine_kernel(N, M, Np, Mp, B, node_dim, edge_dim, D, depth,
                     need_node_emb, need_edge_emb):
    """N/M real nodes/edges, Np/Mp padded (multiples of 8), B graphs, D=model_dim."""
    f32 = jnp.float32

    def kernel(idx_ref, x_ref, e_ref, w_ref, v_ref, out_ref):
        # ---- index rows from the single lane-dense (8, L) int32 buffer ----
        src_row = idx_ref[0:1, 0:Mp]      # (1, Mp) source node of each edge
        dst_row = idx_ref[1:2, 0:Mp]      # (1, Mp) target node of each edge
        eb_row = idx_ref[2:3, 0:Mp]       # (1, Mp) graph id of each edge
        nb_row = idx_ref[3:4, 0:Np]       # (1, Np) graph id of each node

        # ---- transposed one-hot gather/scatter matrices (only 2 big ones) ----
        iota_nm = lax.broadcasted_iota(jnp.int32, (Np, Mp), 0)
        G_srcT = (iota_nm == src_row).astype(f32)   # (Np,Mp): p[src] = dotT(G_srcT, p)
        G_dstT = (iota_nm == dst_row).astype(f32)   # (Np,Mp): scatter-add = G_dstT @ msg

        # per-graph segment matrices (tiny)
        SegN = (lax.broadcasted_iota(jnp.int32, (B, Np), 0) == nb_row).astype(f32)
        SegE = (lax.broadcasted_iota(jnp.int32, (B, Mp), 0) == eb_row).astype(f32)
        cntN = jnp.maximum(jnp.sum(SegN, axis=1, keepdims=True), 1.0)   # (B,1)
        cntE = jnp.maximum(jnp.sum(SegE, axis=1, keepdims=True), 1.0)

        if Np != N:  # masks only materialized when padding exists
            node_valid = (lax.broadcasted_iota(jnp.int32, (Np, 1), 0) < N).astype(f32)
        if Mp != M:
            edge_valid = (lax.broadcasted_iota(jnp.int32, (Mp, 1), 0) < M).astype(f32)

        # ---- point-of-use loaders for the packed parameter buffers ----
        wo = [0]
        vo = [0]

        def take_w(rows, cols):
            Wb = w_ref[wo[0]:wo[0] + rows, 0:cols]
            wo[0] += _round_up(rows, 8)          # blocks are padded to 8-row multiples
            return Wb

        def take_v():
            v = v_ref[vo[0]:vo[0] + 1, :]
            vo[0] += 1
            return v

        def silu(z):
            return z * jax.nn.sigmoid(z)

        def graph_norm(h, seg, cnt, gamma, beta, ms):
            # per-graph E[h], E[h^2]; tiny (B,2D) concat, one wide broadcast matmul
            s1 = jnp.dot(seg, h, preferred_element_type=f32) / cnt       # (B, D)
            s2 = jnp.dot(seg, h * h, preferred_element_type=f32) / cnt   # (B, D)
            stats = jnp.concatenate([s1, s2], axis=1)                    # (B, 2D)
            per = _dotT(seg, stats)                                       # (R, 2D)
            mu, ex2 = per[:, :D], per[:, D:]
            out = h - ms * mu
            # E[(h - ms*mu)^2] = E[h^2] - ms*(2-ms)*mu^2  (matches PyG GraphNorm)
            var = jnp.maximum(ex2 - ms * (2.0 - ms) * (mu * mu), 0.0)
            return gamma * out * lax.rsqrt(var + GN_EPS) + beta

        # ---- node / edge embeddings ----
        x = x_ref[...]
        e = e_ref[...]
        if need_node_emb:
            x = jnp.dot(x, take_w(node_dim, D), preferred_element_type=f32) + take_v()
        if need_edge_emb:
            e = jnp.dot(e, take_w(edge_dim, D), preferred_element_type=f32) + take_v()

        for _ in range(depth):
            # ---------------- GINELayer (node update) ----------------
            dx = jnp.dot(x, take_w(D, D), preferred_element_type=f32) + take_v()  # lin1
            # conv.lin and the edge layer's e-term share LHS `e`: one 256-wide matmul
            e2 = jnp.dot(e, take_w(D, 2 * D), preferred_element_type=f32)         # (M, 2D)
            b_conv = take_v()
            dx_src = _dotT(G_srcT, dx)                                            # dx[src]
            msg = silu(dx_src + e2[:, :D] + b_conv)                               # conv.message
            agg = jnp.dot(G_dstT, msg, preferred_element_type=f32)                # add-aggregate
            eps_row = take_v()                                                    # conv eps
            dx = silu(agg + (1.0 + eps_row) * dx)   # conv.nn / lin2 = Identity, dropout p=0
            gamma, beta, ms = take_v(), take_v(), take_v()
            x = graph_norm(x + dx, SegN, cntN, gamma, beta, ms)
            if Np != N:
                x = x * node_valid

            # ---------------- GINEEdgeLayer (edge update, uses updated x) -------
            pq = jnp.dot(x, take_w(D, 2 * D), preferred_element_type=f32)   # x@[Wsrc|Wdst]
            b_e = take_v()
            xsum = _dotT(G_srcT, pq[:, :D]) + _dotT(G_dstT, pq[:, D:])       # project->gather
            de = silu(e2[:, D:] + xsum + b_e)
            gamma, beta, ms = take_v(), take_v(), take_v()
            e = graph_norm(e + de, SegE, cntE, gamma, beta, ms)
            if Mp != M:
                e = e * edge_valid

        x = jnp.dot(x, take_w(D, D), preferred_element_type=f32) + take_v()  # final linear
        out_ref[...] = x.astype(out_ref.dtype)

        # trace-time guards against parameter mis-packing
        assert wo[0] == w_ref.shape[0], (wo[0], w_ref.shape)
        assert vo[0] == v_ref.shape[0], (vo[0], v_ref.shape)

    return kernel


# --------------------------------------------------------------------------
# Parameters
# --------------------------------------------------------------------------
def init_params(key, node_dim, edge_dim, D, depth):
    def nxt():
        nonlocal key
        key, s = jax.random.split(key)
        return s

    def lin(din, dout):
        W = jax.random.normal(nxt(), (din, dout), jnp.float32) / jnp.sqrt(float(din))
        b = 0.01 * jax.random.normal(nxt(), (dout,), jnp.float32)
        return W, b

    def norm():
        return (1.0 + 0.1 * jax.random.normal(nxt(), (D,), jnp.float32),   # weight
                0.05 * jax.random.normal(nxt(), (D,), jnp.float32),        # bias
                1.0 + 0.1 * jax.random.normal(nxt(), (D,), jnp.float32))   # mean_scale

    p = {}
    if node_dim != D:
        p['node_emb'] = lin(node_dim, D)
    if edge_dim != D:
        p['edge_emb'] = lin(edge_dim, D)
    p['layers'] = []
    for _ in range(depth):
        p['layers'].append(dict(
            lin1=lin(D, D),
            conv_lin=lin(D, D),
            eps=0.05 * jax.random.normal(nxt(), (), jnp.float32),  # train_eps param
            norm=norm(),
            e_lin1=lin(3 * D, D),     # rows ordered [e | x_src | x_dst]
            e_norm=norm(),
        ))
    p['final'] = lin(D, D)
    return p


def pack_params(params, D):
    """Pack weights into one (rows, 2D) buffer (blocks padded to 8-row multiples,
    same-LHS blocks concatenated to 256-wide outputs) and all 1-D params into one
    (n_vec, D) buffer, in the exact order the kernel consumes them."""
    D2 = 2 * D
    w_blocks, v_rows = [], []

    def add_w(W):
        r, c = W.shape
        Wp = jnp.zeros((_round_up(r, 8), D2), jnp.float32)
        Wp = Wp.at[:r, :c].set(W.astype(jnp.float32))
        w_blocks.append(Wp)

    if 'node_emb' in params:
        add_w(params['node_emb'][0]); v_rows.append(params['node_emb'][1])
    if 'edge_emb' in params:
        add_w(params['edge_emb'][0]); v_rows.append(params['edge_emb'][1])
    for lyr in params['layers']:
        We_full = lyr['e_lin1'][0]                       # (3D, D): [e | x_src | x_dst]
        W_e, W_src, W_dst = We_full[:D], We_full[D:2 * D], We_full[2 * D:]
        add_w(lyr['lin1'][0])                                           # (D, D)
        add_w(jnp.concatenate([lyr['conv_lin'][0], W_e], axis=1))       # (D, 2D)
        add_w(jnp.concatenate([W_src, W_dst], axis=1))                  # (D, 2D)
        v_rows += [lyr['lin1'][1], lyr['conv_lin'][1],
                   jnp.full((D,), lyr['eps'], jnp.float32),
                   *lyr['norm'],
                   lyr['e_lin1'][1],
                   *lyr['e_norm']]
    add_w(params['final'][0]); v_rows.append(params['final'][1])
    return jnp.concatenate(w_blocks, axis=0), jnp.stack(v_rows, axis=0)


# --------------------------------------------------------------------------
# Wrapper
# --------------------------------------------------------------------------
def _vmem_limit_bytes():
    cap = 128 * 1024 * 1024
    try:
        cap = int(pltpu.get_tpu_info().vmem_capacity_bytes)
    except Exception:
        pass
    # ~75% of physical VMEM: ~96 MiB on v5e/v6e (128 MiB), ~48 MiB on v7x (64 MiB)
    return int(min(max(cap * 3 // 4, 32 * 1024 * 1024), 110 * 1024 * 1024))


def gine_forward(x, e, edge_index, batch, num_graphs, params,
                 node_dim, edge_dim, model_dim, depth):
    N, M = x.shape[0], e.shape[0]
    D = model_dim
    Np, Mp = _round_up(N, 8), _round_up(M, 8)
    need_node_emb = node_dim != D
    need_edge_emb = edge_dim != D

    W_all, V_all = pack_params(params, D)

    src = edge_index[0].astype(jnp.int32)
    dst = edge_index[1].astype(jnp.int32)
    batch = batch.astype(jnp.int32)
    eb = batch[src]                                   # graph id of each edge

    # single lane-dense (8, L) index buffer; -1 marks padding (never matches iota)
    L = max(Mp, Np)
    idx = jnp.full((8, L), -1, jnp.int32)
    idx = (idx.at[0, :M].set(src).at[1, :M].set(dst)
              .at[2, :M].set(eb).at[3, :N].set(batch))

    xp = jnp.zeros((Np, node_dim), jnp.float32).at[:N].set(x.astype(jnp.float32))
    ep = jnp.zeros((Mp, edge_dim), jnp.float32).at[:M].set(e.astype(jnp.float32))

    kernel = make_gine_kernel(N, M, Np, Mp, num_graphs, node_dim, edge_dim, D,
                              depth, need_node_emb, need_edge_emb)
    vmem = pl.BlockSpec(memory_space=pltpu.MemorySpace.VMEM)
    out = pl.pallas_call(
        kernel,
        out_shape=jax.ShapeDtypeStruct((Np, D), jnp.float32),
        in_specs=[vmem] * 5,
        out_specs=vmem,
        compiler_params=pltpu.CompilerParams(vmem_limit_bytes=_vmem_limit_bytes()),
    )(idx, xp, ep, W_all, V_all)
    return out[:N]


# --------------------------------------------------------------------------
# Pure-JAX reference (mirrors the PyTorch forward in eval mode, e_mask=None)
# --------------------------------------------------------------------------
def gine_reference(x, e, edge_index, batch, num_graphs, params,
                   node_dim, edge_dim, model_dim, depth):
    src, dst = edge_index[0], edge_index[1]
    N = x.shape[0]

    def silu(z):
        return z * jax.nn.sigmoid(z)

    def graph_norm(h, seg, w, b, ms):
        counts = jnp.maximum(
            jax.ops.segment_sum(jnp.ones((h.shape[0],), jnp.float32), seg,
                                num_segments=num_graphs), 1.0)[:, None]
        mean = jax.ops.segment_sum(h, seg, num_segments=num_graphs) / counts
        out = h - mean[seg] * ms
        var = jax.ops.segment_sum(out * out, seg, num_segments=num_graphs) / counts
        std = jnp.sqrt(var + GN_EPS)
        return w * out / std[seg] + b

    if 'node_emb' in params:
        W, b = params['node_emb']; x = x @ W + b
    if 'edge_emb' in params:
        W, b = params['edge_emb']; e = e @ W + b
    eb = batch[src]
    for lyr in params['layers']:
        W1, b1 = lyr['lin1']
        Wc, bc = lyr['conv_lin']
        dx = x @ W1 + b1
        elin = e @ Wc + bc
        msg = silu(dx[src] + elin)
        agg = jax.ops.segment_sum(msg, dst, num_segments=N)
        dx = silu(agg + (1.0 + lyr['eps']) * dx)
        nw, nb, nms = lyr['norm']
        x = graph_norm(x + dx, batch, nw, nb, nms)
        We, be = lyr['e_lin1']
        de = silu(jnp.concatenate([e, x[src], x[dst]], axis=1) @ We + be)
        ew, ebb, ems = lyr['e_norm']
        e = graph_norm(e + de, eb, ew, ebb, ems)
    Wf, bf = params['final']
    return x @ Wf + bf


# --------------------------------------------------------------------------
if __name__ == "__main__":
    node_dim, edge_dim, model_dim, depth = 16, 8, 128, 2
    num_graphs = 2
    nodes_per_graph, edges_per_graph = 12, 24
    N = num_graphs * nodes_per_graph      # 24 nodes
    M = num_graphs * edges_per_graph      # 48 edges

    key = jax.random.PRNGKey(0)
    k_x, k_e, k_ei, k_p = jax.random.split(key, 4)
    x = jax.random.normal(k_x, (N, node_dim), jnp.float32)
    e = jax.random.normal(k_e, (M, edge_dim), jnp.float32)

    batch = jnp.repeat(jnp.arange(num_graphs, dtype=jnp.int32), nodes_per_graph)
    ei = jax.random.randint(k_ei, (2, M), 0, nodes_per_graph, dtype=jnp.int32)
    offsets = jnp.repeat(jnp.arange(num_graphs, dtype=jnp.int32) * nodes_per_graph,
                         edges_per_graph)
    edge_index = ei + offsets[None, :]    # edges stay within their own graph

    params = init_params(k_p, node_dim, edge_dim, model_dim, depth)

    out = gine_forward(x, e, edge_index, batch, num_graphs, params,
                       node_dim, edge_dim, model_dim, depth)
    out = jax.block_until_ready(out)

    ref = gine_reference(x, e, edge_index, batch, num_graphs, params,
                         node_dim, edge_dim, model_dim, depth)
    assert out.shape == (N, model_dim), out.shape
    max_err = float(jnp.max(jnp.abs(out - ref)))
    assert jnp.allclose(out, ref, atol=2e-4, rtol=2e-4), max_err
    print("KERNEL_OK")
</pallas_src>

<mosaic_0001>
module attributes {stable_mosaic.version = 11 : i64} {
  func.func @kernel(%arg0: memref<8x48xi32, #tpu.memory_space<vmem>>, %arg1: memref<24x16xf32, #tpu.memory_space<vmem>>, %arg2: memref<48x8xf32, #tpu.memory_space<vmem>>, %arg3: memref<920x256xf32, #tpu.memory_space<vmem>>, %arg4: memref<23x128xf32, #tpu.memory_space<vmem>>, %arg5: memref<24x128xf32, #tpu.memory_space<vmem>>) attributes {dimension_semantics = [], scalar_prefetch = 0 : i64, scratch_operands = 0 : i64, tpu.core_type = #tpu.core_type<tc>} {
    %c0 = arith.constant 0 : index
    %c0_0 = arith.constant 0 : index
    %0 = vector.load %arg0[%c0, %c0_0] : memref<8x48xi32, #tpu.memory_space<vmem>>, vector<1x48xi32>
    %c1 = arith.constant 1 : index
    %c0_1 = arith.constant 0 : index
    %1 = vector.load %arg0[%c1, %c0_1] : memref<8x48xi32, #tpu.memory_space<vmem>>, vector<1x48xi32>
    %c2 = arith.constant 2 : index
    %c0_2 = arith.constant 0 : index
    %2 = vector.load %arg0[%c2, %c0_2] : memref<8x48xi32, #tpu.memory_space<vmem>>, vector<1x48xi32>
    %c3 = arith.constant 3 : index
    %c0_3 = arith.constant 0 : index
    %3 = vector.load %arg0[%c3, %c0_3] : memref<8x48xi32, #tpu.memory_space<vmem>>, vector<1x24xi32>
    %4 = tpu.iota {dimensions = array<i32: 0>} : vector<24x48xi32>
    %5 = vector.broadcast %0 : vector<1x48xi32> to vector<24x48xi32>
    %6 = arith.cmpi eq, %4, %5 : vector<24x48xi32>
    %7 = arith.extui %6 : vector<24x48xi1> to vector<24x48xi32>
    %8 = arith.sitofp %7 : vector<24x48xi32> to vector<24x48xf32>
    %9 = vector.broadcast %1 : vector<1x48xi32> to vector<24x48xi32>
    %10 = arith.cmpi eq, %4, %9 : vector<24x48xi32>
    %11 = arith.extui %10 : vector<24x48xi1> to vector<24x48xi32>
    %12 = arith.sitofp %11 : vector<24x48xi32> to vector<24x48xf32>
    %13 = tpu.iota {dimensions = array<i32: 0>} : vector<2x24xi32>
    %14 = vector.broadcast %3 : vector<1x24xi32> to vector<2x24xi32>
    %15 = arith.cmpi eq, %13, %14 : vector<2x24xi32>
    %16 = arith.extui %15 : vector<2x24xi1> to vector<2x24xi32>
    %17 = arith.sitofp %16 : vector<2x24xi32> to vector<2x24xf32>
    %18 = tpu.iota {dimensions = array<i32: 0>} : vector<2x48xi32>
    %19 = vector.broadcast %2 : vector<1x48xi32> to vector<2x48xi32>
    %20 = arith.cmpi eq, %18, %19 : vector<2x48xi32>
    %21 = arith.extui %20 : vector<2x48xi1> to vector<2x48xi32>
    %22 = arith.sitofp %21 : vector<2x48xi32> to vector<2x48xf32>
    %cst = arith.constant dense<0.000000e+00> : vector<2xf32>
    %23 = vector.multi_reduction <add>, %17, %cst [1] : vector<2x24xf32> to vector<2xf32>
    %24 = vector.shape_cast %23 : vector<2xf32> to vector<2x1xf32>
    %cst_4 = arith.constant 1.000000e+00 : f32
    %25 = vector.broadcast %cst_4 : f32 to vector<2x1xf32>
    %26 = arith.maximumf %24, %25 : vector<2x1xf32>
    %cst_5 = arith.constant dense<0.000000e+00> : vector<2xf32>
    %27 = vector.multi_reduction <add>, %22, %cst_5 [1] : vector<2x48xf32> to vector<2xf32>
    %28 = vector.shape_cast %27 : vector<2xf32> to vector<2x1xf32>
    %cst_6 = arith.constant 1.000000e+00 : f32
    %29 = vector.broadcast %cst_6 : f32 to vector<2x1xf32>
    %30 = arith.maximumf %28, %29 : vector<2x1xf32>
    %c0_7 = arith.constant 0 : index
    %c0_8 = arith.constant 0 : index
    %31 = vector.load %arg1[%c0_7, %c0_8] : memref<24x16xf32, #tpu.memory_space<vmem>>, vector<24x16xf32>
    %c0_9 = arith.constant 0 : index
    %c0_10 = arith.constant 0 : index
    %32 = vector.load %arg2[%c0_9, %c0_10] : memref<48x8xf32, #tpu.memory_space<vmem>>, vector<48x8xf32>
    %c0_11 = arith.constant 0 : index
    %c0_12 = arith.constant 0 : index
    %33 = vector.load %arg3[%c0_11, %c0_12] : memref<920x256xf32, #tpu.memory_space<vmem>>, vector<16x128xf32>
    %cst_13 = arith.constant dense<0.000000e+00> : vector<24x128xf32>
    %34 = tpu.matmul %31, %33, %cst_13 {dimension_numbers = #tpu.dot_dimension_numbers<[1], [0], [0], [1], [0, 0, 1, 1], [], []>} : vector<24x16xf32>, vector<16x128xf32>, vector<24x128xf32> -> vector<24x128xf32>
    %c0_14 = arith.constant 0 : index
    %c0_15 = arith.constant 0 : index
    %35 = vector.load %arg4[%c0_14, %c0_15] : memref<23x128xf32, #tpu.memory_space<vmem>>, vector<1x128xf32>
    %36 = vector.broadcast %35 : vector<1x128xf32> to vector<24x128xf32>
    %37 = arith.addf %34, %36 : vector<24x128xf32>
    %c16 = arith.constant 16 : index
    %c0_16 = arith.constant 0 : index
    %38 = vector.load %arg3[%c16, %c0_16] : memref<920x256xf32, #tpu.memory_space<vmem>>, vector<8x128xf32>
    %cst_17 = arith.constant dense<0.000000e+00> : vector<48x128xf32>
    %39 = tpu.matmul %32, %38, %cst_17 {dimension_numbers = #tpu.dot_dimension_numbers<[1], [0], [0], [1], [0, 0, 1, 1], [], []>} : vector<48x8xf32>, vector<8x128xf32>, vector<48x128xf32> -> vector<48x128xf32>
    %c1_18 = arith.constant 1 : index
    %c0_19 = arith.constant 0 : index
    %40 = vector.load %arg4[%c1_18, %c0_19] : memref<23x128xf32, #tpu.memory_space<vmem>>, vector<1x128xf32>
    %41 = vector.broadcast %40 : vector<1x128xf32> to vector<48x128xf32>
    %42 = arith.addf %39, %41 : vector<48x128xf32>
    %c24 = arith.constant 24 : index
    %c0_20 = arith.constant 0 : index
    %43 = vector.load %arg3[%c24, %c0_20] : memref<920x256xf32, #tpu.memory_space<vmem>>, vector<128x128xf32>
    %cst_21 = arith.constant dense<0.000000e+00> : vector<24x128xf32>
    %44 = tpu.matmul %37, %43, %cst_21 {dimension_numbers = #tpu.dot_dimension_numbers<[1], [0], [0], [1], [0, 0, 1, 1], [], []>} : vector<24x128xf32>, vector<128x128xf32>, vector<24x128xf32> -> vector<24x128xf32>
    %c2_22 = arith.constant 2 : index
    %c0_23 = arith.constant 0 : index
    %45 = vector.load %arg4[%c2_22, %c0_23] : memref<23x128xf32, #tpu.memory_space<vmem>>, vector<1x128xf32>
    %46 = vector.broadcast %45 : vector<1x128xf32> to vector<24x128xf32>
    %47 = arith.addf %44, %46 : vector<24x128xf32>
    %c152 = arith.constant 152 : index
    %c0_24 = arith.constant 0 : index
    %48 = vector.load %arg3[%c152, %c0_24] : memref<920x256xf32, #tpu.memory_space<vmem>>, vector<128x256xf32>
    %cst_25 = arith.constant dense<0.000000e+00> : vector<48x256xf32>
    %49 = tpu.matmul %42, %48, %cst_25 {dimension_numbers = #tpu.dot_dimension_numbers<[1], [0], [0], [1], [0, 0, 1, 1], [], []>} : vector<48x128xf32>, vector<128x256xf32>, vector<48x256xf32> -> vector<48x256xf32>
    %c3_26 = arith.constant 3 : index
    %c0_27 = arith.constant 0 : index
    %50 = vector.load %arg4[%c3_26, %c0_27] : memref<23x128xf32, #tpu.memory_space<vmem>>, vector<1x128xf32>
    %cst_28 = arith.constant dense<0.000000e+00> : vector<48x128xf32>
    %51 = tpu.matmul %8, %47, %cst_28 {dimension_numbers = #tpu.dot_dimension_numbers<[0], [0], [1], [1], [0, 1, 1, 1], [], []>} : vector<24x48xf32>, vector<24x128xf32>, vector<48x128xf32> -> vector<48x128xf32>
    %52 = vector.extract_strided_slice %49 {offsets = [0, 0], sizes = [48, 128], strides = [1, 1]} : vector<48x256xf32> to vector<48x128xf32>
    %53 = arith.addf %51, %52 : vector<48x128xf32>
    %54 = vector.broadcast %50 : vector<1x128xf32> to vector<48x128xf32>
    %55 = arith.addf %53, %54 : vector<48x128xf32>
    %56 = arith.negf %55 : vector<48x128xf32>
    %57 = math.exp %56 : vector<48x128xf32>
    %cst_29 = arith.constant 1.000000e+00 : f32
    %58 = vector.broadcast %cst_29 : f32 to vector<48x128xf32>
    %59 = arith.addf %58, %57 : vector<48x128xf32>
    %60 = arith.divf %58, %59 : vector<48x128xf32>
    %61 = arith.mulf %55, %60 : vector<48x128xf32>
    %cst_30 = arith.constant dense<0.000000e+00> : vector<24x128xf32>
    %62 = tpu.matmul %12, %61, %cst_30 {dimension_numbers = #tpu.dot_dimension_numbers<[1], [0], [0], [1], [0, 0, 1, 1], [], []>} : vector<24x48xf32>, vector<48x128xf32>, vector<24x128xf32> -> vector<24x128xf32>
    %c4 = arith.constant 4 : index
    %c0_31 = arith.constant 0 : index
    %63 = vector.load %arg4[%c4, %c0_31] : memref<23x128xf32, #tpu.memory_space<vmem>>, vector<1x128xf32>
    %cst_32 = arith.constant 1.000000e+00 : f32
    %64 = vector.broadcast %cst_32 : f32 to vector<1x128xf32>
    %65 = arith.addf %64, %63 : vector<1x128xf32>
    %66 = vector.broadcast %65 : vector<1x128xf32> to vector<24x128xf32>
    %67 = arith.mulf %66, %47 : vector<24x128xf32>
    %68 = arith.addf %62, %67 : vector<24x128xf32>
    %69 = arith.negf %68 : vector<24x128xf32>
    %70 = math.exp %69 : vector<24x128xf32>
    %cst_33 = arith.constant 1.000000e+00 : f32
    %71 = vector.broadcast %cst_33 : f32 to vector<24x128xf32>
    %72 = arith.addf %71, %70 : vector<24x128xf32>
    %73 = arith.divf %71, %72 : vector<24x128xf32>
    %74 = arith.mulf %68, %73 : vector<24x128xf32>
    %c5 = arith.constant 5 : index
    %c0_34 = arith.constant 0 : index
    %75 = vector.load %arg4[%c5, %c0_34] : memref<23x128xf32, #tpu.memory_space<vmem>>, vector<1x128xf32>
    %c6 = arith.constant 6 : index
    %c0_35 = arith.constant 0 : index
    %76 = vector.load %arg4[%c6, %c0_35] : memref<23x128xf32, #tpu.memory_space<vmem>>, vector<1x128xf32>
    %c7 = arith.constant 7 : index
    %c0_36 = arith.constant 0 : index
    %77 = vector.load %arg4[%c7, %c0_36] : memref<23x128xf32, #tpu.memory_space<vmem>>, vector<1x128xf32>
    %78 = arith.addf %37, %74 : vector<24x128xf32>
    %cst_37 = arith.constant dense<0.000000e+00> : vector<2x128xf32>
    %79 = tpu.matmul %17, %78, %cst_37 {dimension_numbers = #tpu.dot_dimension_numbers<[1], [0], [0], [1], [0, 0, 1, 1], [], []>} : vector<2x24xf32>, vector<24x128xf32>, vector<2x128xf32> -> vector<2x128xf32>
    %80 = vector.broadcast %26 : vector<2x1xf32> to vector<2x128xf32>
    %81 = arith.divf %79, %80 : vector<2x128xf32>
    %82 = arith.mulf %78, %78 : vector<24x128xf32>
    %cst_38 = arith.constant dense<0.000000e+00> : vector<2x128xf32>
    %83 = tpu.matmul %17, %82, %cst_38 {dimension_numbers = #tpu.dot_dimension_numbers<[1], [0], [0], [1], [0, 0, 1, 1], [], []>} : vector<2x24xf32>, vector<24x128xf32>, vector<2x128xf32> -> vector<2x128xf32>
    %84 = vector.broadcast %26 : vector<2x1xf32> to vector<2x128xf32>
    %85 = arith.divf %83, %84 : vector<2x128xf32>
    %86 = tpu.concatenate %81, %85 in 1 : vector<2x128xf32>, vector<2x128xf32> -> vector<2x256xf32>
    %cst_39 = arith.constant dense<0.000000e+00> : vector<24x256xf32>
    %87 = tpu.matmul %17, %86, %cst_39 {dimension_numbers = #tpu.dot_dimension_numbers<[0], [0], [1], [1], [0, 1, 1, 1], [], []>} : vector<2x24xf32>, vector<2x256xf32>, vector<24x256xf32> -> vector<24x256xf32>
    %88 = vector.extract_strided_slice %87 {offsets = [0, 0], sizes = [24, 128], strides = [1, 1]} : vector<24x256xf32> to vector<24x128xf32>
    %89 = vector.extract_strided_slice %87 {offsets = [0, 128], sizes = [24, 128], strides = [1, 1]} : vector<24x256xf32> to vector<24x128xf32>
    %90 = vector.broadcast %77 : vector<1x128xf32> to vector<24x128xf32>
    %91 = arith.mulf %90, %88 : vector<24x128xf32>
    %92 = arith.subf %78, %91 : vector<24x128xf32>
    %cst_40 = arith.constant 2.000000e+00 : f32
    %93 = vector.broadcast %cst_40 : f32 to vector<1x128xf32>
    %94 = arith.subf %93, %77 : vector<1x128xf32>
    %95 = arith.mulf %77, %94 : vector<1x128xf32>
    %96 = arith.mulf %88, %88 : vector<24x128xf32>
    %97 = vector.broadcast %95 : vector<1x128xf32> to vector<24x128xf32>
    %98 = arith.mulf %97, %96 : vector<24x128xf32>
    %99 = arith.subf %89, %98 : vector<24x128xf32>
    %cst_41 = arith.constant 0.000000e+00 : f32
    %100 = vector.broadcast %cst_41 : f32 to vector<24x128xf32>
    %101 = arith.maximumf %99, %100 : vector<24x128xf32>
    %102 = vector.broadcast %75 : vector<1x128xf32> to vector<24x128xf32>
    %103 = arith.mulf %102, %92 : vector<24x128xf32>
    %cst_42 = arith.constant 9.99999974E-6 : f32
    %104 = vector.broadcast %cst_42 : f32 to vector<24x128xf32>
    %105 = arith.addf %101, %104 : vector<24x128xf32>
    %106 = math.rsqrt %105 : vector<24x128xf32>
    %107 = arith.mulf %103, %106 : vector<24x128xf32>
    %108 = vector.broadcast %76 : vector<1x128xf32> to vector<24x128xf32>
    %109 = arith.addf %107, %108 : vector<24x128xf32>
    %c280 = arith.constant 280 : index
    %c0_43 = arith.constant 0 : index
    %110 = vector.load %arg3[%c280, %c0_43] : memref<920x256xf32, #tpu.memory_space<vmem>>, vector<128x256xf32>
    %cst_44 = arith.constant dense<0.000000e+00> : vector<24x256xf32>
    %111 = tpu.matmul %109, %110, %cst_44 {dimension_numbers = #tpu.dot_dimension_numbers<[1], [0], [0], [1], [0, 0, 1, 1], [], []>} : vector<24x128xf32>, vector<128x256xf32>, vector<24x256xf32> -> vector<24x256xf32>
    %c8 = arith.constant 8 : index
    %c0_45 = arith.constant 0 : index
    %112 = vector.load %arg4[%c8, %c0_45] : memref<23x128xf32, #tpu.memory_space<vmem>>, vector<1x128xf32>
    %113 = vector.extract_strided_slice %111 {offsets = [0, 0], sizes = [24, 128], strides = [1, 1]} : vector<24x256xf32> to vector<24x128xf32>
    %cst_46 = arith.constant dense<0.000000e+00> : vector<48x128xf32>
    %114 = tpu.matmul %8, %113, %cst_46 {dimension_numbers = #tpu.dot_dimension_numbers<[0], [0], [1], [1], [0, 1, 1, 1], [], []>} : vector<24x48xf32>, vector<24x128xf32>, vector<48x128xf32> -> vector<48x128xf32>
    %115 = vector.extract_strided_slice %111 {offsets = [0, 128], sizes = [24, 128], strides = [1, 1]} : vector<24x256xf32> to vector<24x128xf32>
    %cst_47 = arith.constant dense<0.000000e+00> : vector<48x128xf32>
    %116 = tpu.matmul %12, %115, %cst_47 {dimension_numbers = #tpu.dot_dimension_numbers<[0], [0], [1], [1], [0, 1, 1, 1], [], []>} : vector<24x48xf32>, vector<24x128xf32>, vector<48x128xf32> -> vector<48x128xf32>
    %117 = arith.addf %114, %116 : vector<48x128xf32>
    %118 = vector.extract_strided_slice %49 {offsets = [0, 128], sizes = [48, 128], strides = [1, 1]} : vector<48x256xf32> to vector<48x128xf32>
    %119 = arith.addf %118, %117 : vector<48x128xf32>
    %120 = vector.broadcast %112 : vector<1x128xf32> to vector<48x128xf32>
    %121 = arith.addf %119, %120 : vector<48x128xf32>
    %122 = arith.negf %121 : vector<48x128xf32>
    %123 = math.exp %122 : vector<48x128xf32>
    %cst_48 = arith.constant 1.000000e+00 : f32
    %124 = vector.broadcast %cst_48 : f32 to vector<48x128xf32>
    %125 = arith.addf %124, %123 : vector<48x128xf32>
    %126 = arith.divf %124, %125 : vector<48x128xf32>
    %127 = arith.mulf %121, %126 : vector<48x128xf32>
    %c9 = arith.constant 9 : index
    %c0_49 = arith.constant 0 : index
    %128 = vector.load %arg4[%c9, %c0_49] : memref<23x128xf32, #tpu.memory_space<vmem>>, vector<1x128xf32>
    %c10 = arith.constant 10 : index
    %c0_50 = arith.constant 0 : index
    %129 = vector.load %arg4[%c10, %c0_50] : memref<23x128xf32, #tpu.memory_space<vmem>>, vector<1x128xf32>
    %c11 = arith.constant 11 : index
    %c0_51 = arith.constant 0 : index
    %130 = vector.load %arg4[%c11, %c0_51] : memref<23x128xf32, #tpu.memory_space<vmem>>, vector<1x128xf32>
    %131 = arith.addf %42, %127 : vector<48x128xf32>
    %cst_52 = arith.constant dense<0.000000e+00> : vector<2x128xf32>
    %132 = tpu.matmul %22, %131, %cst_52 {dimension_numbers = #tpu.dot_dimension_numbers<[1], [0], [0], [1], [0, 0, 1, 1], [], []>} : vector<2x48xf32>, vector<48x128xf32>, vector<2x128xf32> -> vector<2x128xf32>
    %133 = vector.broadcast %30 : vector<2x1xf32> to vector<2x128xf32>
    %134 = arith.divf %132, %133 : vector<2x128xf32>
    %135 = arith.mulf %131, %131 : vector<48x128xf32>
    %cst_53 = arith.constant dense<0.000000e+00> : vector<2x128xf32>
    %136 = tpu.matmul %22, %135, %cst_53 {dimension_numbers = #tpu.dot_dimension_numbers<[1], [0], [0], [1], [0, 0, 1, 1], [], []>} : vector<2x48xf32>, vector<48x128xf32>, vector<2x128xf32> -> vector<2x128xf32>
    %137 = vector.broadcast %30 : vector<2x1xf32> to vector<2x128xf32>
    %138 = arith.divf %136, %137 : vector<2x128xf32>
    %139 = tpu.concatenate %134, %138 in 1 : vector<2x128xf32>, vector<2x128xf32> -> vector<2x256xf32>
    %cst_54 = arith.constant dense<0.000000e+00> : vector<48x256xf32>
    %140 = tpu.matmul %22, %139, %cst_54 {dimension_numbers = #tpu.dot_dimension_numbers<[0], [0], [1], [1], [0, 1, 1, 1], [], []>} : vector<2x48xf32>, vector<2x256xf32>, vector<48x256xf32> -> vector<48x256xf32>
    %141 = vector.extract_strided_slice %140 {offsets = [0, 0], sizes = [48, 128], strides = [1, 1]} : vector<48x256xf32> to vector<48x128xf32>
    %142 = vector.extract_strided_slice %140 {offsets = [0, 128], sizes = [48, 128], strides = [1, 1]} : vector<48x256xf32> to vector<48x128xf32>
    %143 = vector.broadcast %130 : vector<1x128xf32> to vector<48x128xf32>
    %144 = arith.mulf %143, %141 : vector<48x128xf32>
    %145 = arith.subf %131, %144 : vector<48x128xf32>
    %cst_55 = arith.constant 2.000000e+00 : f32
    %146 = vector.broadcast %cst_55 : f32 to vector<1x128xf32>
    %147 = arith.subf %146, %130 : vector<1x128xf32>
    %148 = arith.mulf %130, %147 : vector<1x128xf32>
    %149 = arith.mulf %141, %141 : vector<48x128xf32>
    %150 = vector.broadcast %148 : vector<1x128xf32> to vector<48x128xf32>
    %151 = arith.mulf %150, %149 : vector<48x128xf32>
    %152 = arith.subf %142, %151 : vector<48x128xf32>
    %cst_56 = arith.constant 0.000000e+00 : f32
    %153 = vector.broadcast %cst_56 : f32 to vector<48x128xf32>
    %154 = arith.maximumf %152, %153 : vector<48x128xf32>
    %155 = vector.broadcast %128 : vector<1x128xf32> to vector<48x128xf32>
    %156 = arith.mulf %155, %145 : vector<48x128xf32>
    %cst_57 = arith.constant 9.99999974E-6 : f32
    %157 = vector.broadcast %cst_57 : f32 to vector<48x128xf32>
    %158 = arith.addf %154, %157 : vector<48x128xf32>
    %159 = math.rsqrt %158 : vector<48x128xf32>
    %160 = arith.mulf %156, %159 : vector<48x128xf32>
    %161 = vector.broadcast %129 : vector<1x128xf32> to vector<48x128xf32>
    %162 = arith.addf %160, %161 : vector<48x128xf32>
    %c408 = arith.constant 408 : index
    %c0_58 = arith.constant 0 : index
    %163 = vector.load %arg3[%c408, %c0_58] : memref<920x256xf32, #tpu.memory_space<vmem>>, vector<128x128xf32>
    %cst_59 = arith.constant dense<0.000000e+00> : vector<24x128xf32>
    %164 = tpu.matmul %109, %163, %cst_59 {dimension_numbers = #tpu.dot_dimension_numbers<[1], [0], [0], [1], [0, 0, 1, 1], [], []>} : vector<24x128xf32>, vector<128x128xf32>, vector<24x128xf32> -> vector<24x128xf32>
    %c12 = arith.constant 12 : index
    %c0_60 = arith.constant 0 : index
    %165 = vector.load %arg4[%c12, %c0_60] : memref<23x128xf32, #tpu.memory_space<vmem>>, vector<1x128xf32>
    %166 = vector.broadcast %165 : vector<1x128xf32> to vector<24x128xf32>
    %167 = arith.addf %164, %166 : vector<24x128xf32>
    %c536 = arith.constant 536 : index
    %c0_61 = arith.constant 0 : index
    %168 = vector.load %arg3[%c536, %c0_61] : memref<920x256xf32, #tpu.memory_space<vmem>>, vector<128x256xf32>
    %cst_62 = arith.constant dense<0.000000e+00> : vector<48x256xf32>
    %169 = tpu.matmul %162, %168, %cst_62 {dimension_numbers = #tpu.dot_dimension_numbers<[1], [0], [0], [1], [0, 0, 1, 1], [], []>} : vector<48x128xf32>, vector<128x256xf32>, vector<48x256xf32> -> vector<48x256xf32>
    %c13 = arith.constant 13 : index
    %c0_63 = arith.constant 0 : index
    %170 = vector.load %arg4[%c13, %c0_63] : memref<23x128xf32, #tpu.memory_space<vmem>>, vector<1x128xf32>
    %cst_64 = arith.constant dense<0.000000e+00> : vector<48x128xf32>
    %171 = tpu.matmul %8, %167, %cst_64 {dimension_numbers = #tpu.dot_dimension_numbers<[0], [0], [1], [1], [0, 1, 1, 1], [], []>} : vector<24x48xf32>, vector<24x128xf32>, vector<48x128xf32> -> vector<48x128xf32>
    %172 = vector.extract_strided_slice %169 {offsets = [0, 0], sizes = [48, 128], strides = [1, 1]} : vector<48x256xf32> to vector<48x128xf32>
    %173 = arith.addf %171, %172 : vector<48x128xf32>
    %174 = vector.broadcast %170 : vector<1x128xf32> to vector<48x128xf32>
    %175 = arith.addf %173, %174 : vector<48x128xf32>
    %176 = arith.negf %175 : vector<48x128xf32>
    %177 = math.exp %176 : vector<48x128xf32>
    %cst_65 = arith.constant 1.000000e+00 : f32
    %178 = vector.broadcast %cst_65 : f32 to vector<48x128xf32>
    %179 = arith.addf %178, %177 : vector<48x128xf32>
    %180 = arith.divf %178, %179 : vector<48x128xf32>
    %181 = arith.mulf %175, %180 : vector<48x128xf32>
    %cst_66 = arith.constant dense<0.000000e+00> : vector<24x128xf32>
    %182 = tpu.matmul %12, %181, %cst_66 {dimension_numbers = #tpu.dot_dimension_numbers<[1], [0], [0], [1], [0, 0, 1, 1], [], []>} : vector<24x48xf32>, vector<48x128xf32>, vector<24x128xf32> -> vector<24x128xf32>
    %c14 = arith.constant 14 : index
    %c0_67 = arith.constant 0 : index
    %183 = vector.load %arg4[%c14, %c0_67] : memref<23x128xf32, #tpu.memory_space<vmem>>, vector<1x128xf32>
    %cst_68 = arith.constant 1.000000e+00 : f32
    %184 = vector.broadcast %cst_68 : f32 to vector<1x128xf32>
    %185 = arith.addf %184, %183 : vector<1x128xf32>
    %186 = vector.broadcast %185 : vector<1x128xf32> to vector<24x128xf32>
    %187 = arith.mulf %186, %167 : vector<24x128xf32>
    %188 = arith.addf %182, %187 : vector<24x128xf32>
    %189 = arith.negf %188 : vector<24x128xf32>
    %190 = math.exp %189 : vector<24x128xf32>
    %cst_69 = arith.constant 1.000000e+00 : f32
    %191 = vector.broadcast %cst_69 : f32 to vector<24x128xf32>
    %192 = arith.addf %191, %190 : vector<24x128xf32>
    %193 = arith.divf %191, %192 : vector<24x128xf32>
    %194 = arith.mulf %188, %193 : vector<24x128xf32>
    %c15 = arith.constant 15 : index
    %c0_70 = arith.constant 0 : index
    %195 = vector.load %arg4[%c15, %c0_70] : memref<23x128xf32, #tpu.memory_space<vmem>>, vector<1x128xf32>
    %c16_71 = arith.constant 16 : index
    %c0_72 = arith.constant 0 : index
    %196 = vector.load %arg4[%c16_71, %c0_72] : memref<23x128xf32, #tpu.memory_space<vmem>>, vector<1x128xf32>
    %c17 = arith.constant 17 : index
    %c0_73 = arith.constant 0 : index
    %197 = vector.load %arg4[%c17, %c0_73] : memref<23x128xf32, #tpu.memory_space<vmem>>, vector<1x128xf32>
    %198 = arith.addf %109, %194 : vector<24x128xf32>
    %cst_74 = arith.constant dense<0.000000e+00> : vector<2x128xf32>
    %199 = tpu.matmul %17, %198, %cst_74 {dimension_numbers = #tpu.dot_dimension_numbers<[1], [0], [0], [1], [0, 0, 1, 1], [], []>} : vector<2x24xf32>, vector<24x128xf32>, vector<2x128xf32> -> vector<2x128xf32>
    %200 = vector.broadcast %26 : vector<2x1xf32> to vector<2x128xf32>
    %201 = arith.divf %199, %200 : vector<2x128xf32>
    %202 = arith.mulf %198, %198 : vector<24x128xf32>
    %cst_75 = arith.constant dense<0.000000e+00> : vector<2x128xf32>
    %203 = tpu.matmul %17, %202, %cst_75 {dimension_numbers = #tpu.dot_dimension_numbers<[1], [0], [0], [1], [0, 0, 1, 1], [], []>} : vector<2x24xf32>, vector<24x128xf32>, vector<2x128xf32> -> vector<2x128xf32>
    %204 = vector.broadcast %26 : vector<2x1xf32> to vector<2x128xf32>
    %205 = arith.divf %203, %204 : vector<2x128xf32>
    %206 = tpu.concatenate %201, %205 in 1 : vector<2x128xf32>, vector<2x128xf32> -> vector<2x256xf32>
    %cst_76 = arith.constant dense<0.000000e+00> : vector<24x256xf32>
    %207 = tpu.matmul %17, %206, %cst_76 {dimension_numbers = #tpu.dot_dimension_numbers<[0], [0], [1], [1], [0, 1, 1, 1], [], []>} : vector<2x24xf32>, vector<2x256xf32>, vector<24x256xf32> -> vector<24x256xf32>
    %208 = vector.extract_strided_slice %207 {offsets = [0, 0], sizes = [24, 128], strides = [1, 1]} : vector<24x256xf32> to vector<24x128xf32>
    %209 = vector.extract_strided_slice %207 {offsets = [0, 128], sizes = [24, 128], strides = [1, 1]} : vector<24x256xf32> to vector<24x128xf32>
    %210 = vector.broadcast %197 : vector<1x128xf32> to vector<24x128xf32>
    %211 = arith.mulf %210, %208 : vector<24x128xf32>
    %212 = arith.subf %198, %211 : vector<24x128xf32>
    %cst_77 = arith.constant 2.000000e+00 : f32
    %213 = vector.broadcast %cst_77 : f32 to vector<1x128xf32>
    %214 = arith.subf %213, %197 : vector<1x128xf32>
    %215 = arith.mulf %197, %214 : vector<1x128xf32>
    %216 = arith.mulf %208, %208 : vector<24x128xf32>
    %217 = vector.broadcast %215 : vector<1x128xf32> to vector<24x128xf32>
    %218 = arith.mulf %217, %216 : vector<24x128xf32>
    %219 = arith.subf %209, %218 : vector<24x128xf32>
    %cst_78 = arith.constant 0.000000e+00 : f32
    %220 = vector.broadcast %cst_78 : f32 to vector<24x128xf32>
    %221 = arith.maximumf %219, %220 : vector<24x128xf32>
    %222 = vector.broadcast %195 : vector<1x128xf32> to vector<24x128xf32>
    %223 = arith.mulf %222, %212 : vector<24x128xf32>
    %cst_79 = arith.constant 9.99999974E-6 : f32
    %224 = vector.broadcast %cst_79 : f32 to vector<24x128xf32>
    %225 = arith.addf %221, %224 : vector<24x128xf32>
    %226 = math.rsqrt %225 : vector<24x128xf32>
    %227 = arith.mulf %223, %226 : vector<24x128xf32>
    %228 = vector.broadcast %196 : vector<1x128xf32> to vector<24x128xf32>
    %229 = arith.addf %227, %228 : vector<24x128xf32>
    %c792 = arith.constant 792 : index
    %c0_80 = arith.constant 0 : index
    %230 = vector.load %arg3[%c792, %c0_80] : memref<920x256xf32, #tpu.memory_space<vmem>>, vector<128x128xf32>
    %cst_81 = arith.constant dense<0.000000e+00> : vector<24x128xf32>
    %231 = tpu.matmul %229, %230, %cst_81 {dimension_numbers = #tpu.dot_dimension_numbers<[1], [0], [0], [1], [0, 0, 1, 1], [], []>} : vector<24x128xf32>, vector<128x128xf32>, vector<24x128xf32> -> vector<24x128xf32>
    %c22 = arith.constant 22 : index
    %c0_82 = arith.constant 0 : index
    %232 = vector.load %arg4[%c22, %c0_82] : memref<23x128xf32, #tpu.memory_space<vmem>>, vector<1x128xf32>
    %233 = vector.broadcast %232 : vector<1x128xf32> to vector<24x128xf32>
    %234 = arith.addf %231, %233 : vector<24x128xf32>
    %c0_83 = arith.constant 0 : index
    %c0_84 = arith.constant 0 : index
    %235 = vector.load %arg5[%c0_83, %c0_84] : memref<24x128xf32, #tpu.memory_space<vmem>>, vector<24x128xf32>
    tpu.vector_store %arg5[%c0_83, %c0_84], %234 {strides = array<i32>} : memref<24x128xf32, #tpu.memory_space<vmem>>, vector<24x128xf32>,
    return
  }
}

</mosaic_0001>

<llo_original>
// kernel: tpu_custom_call.1
$region0: #{tpu_custom_call.1}
  #allocation0 [shape = 'u32[]', space=smem, size = 0x4, offset = 0x4, fixed_abs, tag = 'smem constant byte address 0x4 - core index']
  #allocation1 [shape = 'u32[144,128]{1,0:T(1,128)}', space=vmem, size = 0x12000, scoped, tag = 'internal scratch']
  %s0 = inlined_call_operand.hbm [shape: s32[8,48], index: 0, kind: input, shape index: {}]
  %s1 = inlined_call_operand.hbm [shape: f32[24,16], index: 1, kind: input, shape index: {}]
  %s2 = inlined_call_operand.hbm [shape: f32[48,8], index: 2, kind: input, shape index: {}]
  %s3 = inlined_call_operand.hbm [shape: f32[920,256], index: 3, kind: input, shape index: {}]
  %s4 = inlined_call_operand.hbm [shape: f32[23,128], index: 4, kind: input, shape index: {}]
  %s5 = inlined_call_operand.hbm [shape: f32[24,128], index: 5, kind: output, shape index: {}]
  %s6 = sld [smem:[#allocation0]]
  $region50: #{tpu_custom_call.1} parent=0
    _
  %s8 = ssub.s32 1, %s6
  %s9 = scalar_select 0, %s8, %s6
  $region1: #{tpu_custom_call.1} parent=0
    #allocation2 [shape = 'u8[4096]{0}', space=vmem, size = 0x1000, scoped, tag = 'input window, operand 0, single buffered']
    #allocation3 [shape = 's32[1]{0}', space=sflag, size = 0x4, scoped, tag = 'scoped memory for tpu_custom_call.1']
    #allocation4 [shape = 's32[1]{0}', space=sflag, size = 0x4, scoped, tag = 'scoped memory for tpu_custom_call.1']
    #allocation5 [shape = 'u8[12288]{0}', space=vmem, size = 0x3000, scoped, tag = 'input window, operand 1, single buffered']
    #allocation6 [shape = 's32[1]{0}', space=sflag, size = 0x4, scoped, tag = 'scoped memory for tpu_custom_call.1']
    #allocation7 [shape = 'u8[24576]{0}', space=vmem, size = 0x6000, scoped, tag = 'input window, operand 2, single buffered']
    #allocation8 [shape = 'u8[942080]{0}', space=vmem, size = 0xe6000, scoped, tag = 'input window, operand 3, single buffered']
    #allocation9 [shape = 's32[1]{0}', space=sflag, size = 0x4, scoped, tag = 'scoped memory for tpu_custom_call.1']
    #allocation10 [shape = 'u8[12288]{0}', space=vmem, size = 0x3000, scoped, tag = 'input window, operand 4, single buffered']
    #allocation11 [shape = 'u8[12288]{0}', space=vmem, size = 0x3000, scoped, tag = 'output window, operand 0, single buffered']
    %10 = vsyncpa [#allocation3], 0
    %11 = vsyncpa [#allocation6], 0
    %12 = vsyncpa [#allocation9], 0
    %13 = vsyncpa [#allocation4], 0
    // Predicated region
    $region2: #{tpu_custom_call.1} parent=1 // pred_check
      _
    $region3: #{tpu_custom_call.1} parent=1 // pred_check_branch
      %15 = sbr.rel (0) target = $region5
    $region4: #{tpu_custom_call.1} parent=1 // pred_region
      %s17 = ssub.s32 128, 128
      %18 = vsyncadd [#allocation3], %s17
      %s20 = sshll.u32 [#allocation2], 4
      %s21 = int_to_ptr.vmem [resolvable:$true] %s20
      %23 = dma.hbm_to_vmem [thread:$0]  %s0, 128, %s21, [#allocation3]
    $region5: #{tpu_custom_call.1} parent=1 // pred_fallthru
      _
    // Predicated region
    $region6: #{tpu_custom_call.1} parent=1 // pred_check
      _
    $region7: #{tpu_custom_call.1} parent=1 // pred_check_branch
      %25 = sbr.rel (0) target = $region9
    $region8: #{tpu_custom_call.1} parent=1 // pred_region
      %s27 = ssub.s32 384, 384
      %28 = vsyncadd [#allocation6], %s27
      %s29 = sshll.u32 [#allocation5], 4
      %s30 = int_to_ptr.vmem [resolvable:$true] %s29
      %35 = dma.hbm_to_vmem [thread:$0]  %s1, 384, %s30, [#allocation6], 128, 128, 8
    $region9: #{tpu_custom_call.1} parent=1 // pred_fallthru
      _
    // Predicated region
    $region10: #{tpu_custom_call.1} parent=1 // pred_check
      _
    $region11: #{tpu_custom_call.1} parent=1 // pred_check_branch
      %37 = sbr.rel (0) target = $region13
    $region12: #{tpu_custom_call.1} parent=1 // pred_region
      %s39 = ssub.s32 768, 768
      %40 = vsyncadd [#allocation6], %s39
      %s41 = sshll.u32 [#allocation7], 4
      %s42 = int_to_ptr.vmem [resolvable:$true] %s41
      %47 = dma.hbm_to_vmem [thread:$0]  %s2, 768, %s42, [#allocation6], 128, 128, 8
    $region13: #{tpu_custom_call.1} parent=1 // pred_fallthru
      _
    // Predicated region
    $region14: #{tpu_custom_call.1} parent=1 // pred_check
      _
    $region15: #{tpu_custom_call.1} parent=1 // pred_check_branch
      %49 = sbr.rel (0) target = $region17
    $region16: #{tpu_custom_call.1} parent=1 // pred_region
      %s51 = ssub.s32 29440, 29440
      %52 = vsyncadd [#allocation9], %s51
      %s53 = sshll.u32 [#allocation8], 4
      %s54 = int_to_ptr.vmem [resolvable:$true] %s53
      %59 = dma.hbm_to_vmem [thread:$0]  %s3, 29440, %s54, [#allocation9], 256, 256, 16
    $region17: #{tpu_custom_call.1} parent=1 // pred_fallthru
      _
    // Predicated region
    $region18: #{tpu_custom_call.1} parent=1 // pred_check
      _
    $region19: #{tpu_custom_call.1} parent=1 // pred_check_branch
      %61 = sbr.rel (0) target = $region21
    $region20: #{tpu_custom_call.1} parent=1 // pred_region
      %s63 = ssub.s32 384, 384
      %64 = vsyncadd [#allocation9], %s63
      %s65 = sshll.u32 [#allocation10], 4
      %s66 = int_to_ptr.vmem [resolvable:$true] %s65
      %71 = dma.hbm_to_vmem [thread:$0]  %s4, 384, %s66, [#allocation9], 128, 128, 8
    $region21: #{tpu_custom_call.1} parent=1 // pred_fallthru
      _
    // Predicated region
    $region22: #{tpu_custom_call.1} parent=1 // pred_check
      _
    $region23: #{tpu_custom_call.1} parent=1 // pred_check_branch
      %73 = sbr.rel (0) target = $region25
    $region24: #{tpu_custom_call.1} parent=1 // pred_region
      %74 = dma.done [#allocation3], 128
    $region25: #{tpu_custom_call.1} parent=1 // pred_fallthru
      _
    // Predicated region
    $region26: #{tpu_custom_call.1} parent=1 // pred_check
      _
    $region27: #{tpu_custom_call.1} parent=1 // pred_check_branch
      %76 = sbr.rel (0) target = $region29
    $region28: #{tpu_custom_call.1} parent=1 // pred_region
      %77 = dma.done [#allocation6], 384
    $region29: #{tpu_custom_call.1} parent=1 // pred_fallthru
      _
    // Predicated region
    $region30: #{tpu_custom_call.1} parent=1 // pred_check
      _
    $region31: #{tpu_custom_call.1} parent=1 // pred_check_branch
      %79 = sbr.rel (0) target = $region33
    $region32: #{tpu_custom_call.1} parent=1 // pred_region
      %80 = dma.done [#allocation6], 768
    $region33: #{tpu_custom_call.1} parent=1 // pred_fallthru
      _
    // Predicated region
    $region34: #{tpu_custom_call.1} parent=1 // pred_check
      _
    $region35: #{tpu_custom_call.1} parent=1 // pred_check_branch
      %82 = sbr.rel (0) target = $region37
    $region36: #{tpu_custom_call.1} parent=1 // pred_region
      %83 = dma.done [#allocation9], 29440
    $region37: #{tpu_custom_call.1} parent=1 // pred_fallthru
      _
    // Predicated region
    $region38: #{tpu_custom_call.1} parent=1 // pred_check
      _
    $region39: #{tpu_custom_call.1} parent=1 // pred_check_branch
      %85 = sbr.rel (0) target = $region41
    $region40: #{tpu_custom_call.1} parent=1 // pred_region
      %86 = dma.done [#allocation9], 384
    $region41: #{tpu_custom_call.1} parent=1 // pred_fallthru
      _
    %v87 = vld [vmem:[#allocation2] sm:$0x1]
    %v88 = vld [vmem:[#allocation2 + $0x1] sm:$0x1]
    %v89 = vld [vmem:[#allocation2 + $0x2] sm:$0x1]
    %v90 = vld [vmem:[#allocation2 + $0x3] sm:$0x1]
    %v91 = vlaneseq
    %v92 = vshrl.u32 %v91, 7
    %v93 = vadd.s32 %v92, 8
    %v94 = vadd.s32 %v92, 16
    %v95 = vlaneseq
    %v96 = vshrl.u32 %v95, 7
    %v97 = vsub.s32 0, %v96
    %v98 = vrot.slane %v87, %v97
    %vm99 = vcmp.eq.s32.totalorder %v92, %v98
    %vm100 = vcmp.eq.s32.totalorder %v93, %v98
    %vm101 = vcmp.eq.s32.totalorder %v94, %v98
    %v102 = vsel %vm99, 1, 0
    %v103 = vsel %vm100, 1, 0
    %v104 = vsel %vm101, 1, 0
    %v105 = vcvt.s32.f32 %v102
    %v106 = vcvt.s32.f32 %v103
    %v107 = vcvt.s32.f32 %v104
    %v108 = vlaneseq
    %v109 = vshrl.u32 %v108, 7
    %v110 = vsub.s32 0, %v109
    %v111 = vrot.slane %v88, %v110
    %vm112 = vcmp.eq.s32.totalorder %v92, %v111
    %vm113 = vcmp.eq.s32.totalorder %v93, %v111
    %vm114 = vcmp.eq.s32.totalorder %v94, %v111
    %v115 = vsel %vm112, 1, 0
    %v116 = vsel %vm113, 1, 0
    %v117 = vsel %vm114, 1, 0
    %v118 = vcvt.s32.f32 %v115
    %v119 = vcvt.s32.f32 %v116
    %v120 = vcvt.s32.f32 %v117
    %v121 = vlaneseq
    %v122 = vshrl.u32 %v121, 7
    %v123 = vsub.s32 0, %v122
    %v124 = vrot.slane %v90, %v123
    %vm125 = vcmp.eq.s32.totalorder %v92, %v124
    %v126 = vsel %vm125, 1, 0
    %v127 = vcvt.s32.f32 %v126
    %v128 = vlaneseq
    %v129 = vshrl.u32 %v128, 7
    %v130 = vsub.s32 0, %v129
    %v131 = vrot.slane %v89, %v130
    %vm132 = vcmp.eq.s32.totalorder %v92, %v131
    %v133 = vsel %vm132, 1, 0
    %v134 = vcvt.s32.f32 %v133
    %vm135 = vcmask 189440
    %v136 = vsel %vm135, %v127, 0.0
    %137 = vadd.xlane.f32.xlu0 %v136
    %v138 = vpop.xlane.xlu0 %137
    %v139 = vmax.f32 %v138, 1.0
    %vm140 = vcmask 386048
    %v141 = vsel %vm140, %v134, 0.0
    %142 = vadd.xlane.f32.xlu0 %v141
    %v143 = vpop.xlane.xlu0 %142
    %v144 = vmax.f32 %v143, 1.0
    %v145 = vld [vmem:[#allocation5] sm:$0xff]
    %v146 = vld [vmem:[#allocation5 + $0x8] sm:$0xff]
    %v147 = vld [vmem:[#allocation5 + $0x10] sm:$0xff]
    %v148 = vld [vmem:[#allocation7] sm:$0xff]
    %v149 = vld [vmem:[#allocation7 + $0x8] sm:$0xff]
    %v150 = vld [vmem:[#allocation7 + $0x10] sm:$0xff]
    %v151 = vld [vmem:[#allocation7 + $0x18] sm:$0xff]
    %v152 = vld [vmem:[#allocation7 + $0x20] sm:$0xff]
    %v153 = vld [vmem:[#allocation7 + $0x28] sm:$0xff]
    %v154 = vld [vmem:[#allocation8] sm:$0xff]
    %v155 = vld [vmem:[#allocation8 + $0x10] sm:$0xff]
    %v156 = vld [vmem:[#allocation10] sm:$0x1]
    %v157 = vlaneseq
    %v158 = vshrl.u32 %v157, 7
    %v159 = vsub.s32 0, %v158
    %v160 = vrot.slane %v156, %v159
    %vm161 = vcmask 130048
    %v163 = vsel %vm161, %v145, 0
    %v166 = vsel %vm161, %v146, 0
    %v169 = vsel %vm161, %v147, 0
    %171 = vmatprep.subr.mxu0 0.0
    %172 = vmatpush1.msra.mxu0 %v154
    %173 = vmatprep.subr.mxu0 0.0
    %174 = vmatpush1.msra.mxu0 %v155
    %175 = vmatprep.subr.mxu0 0.0
    %176 = vmatpush1.msra.mxu0 0.0
    %177 = vmatprep.subr.mxu0 0.0
    %178 = vmatpush1.msra.mxu0 0.0
    %179 = vmatprep.subr.mxu0 0.0
    %180 = vmatpush1.msra.mxu0 0.0
    %181 = vmatprep.subr.mxu0 0.0
    %182 = vmatpush1.msra.mxu0 0.0
    %183 = vmatprep.subr.mxu0 0.0
    %184 = vmatpush1.msra.mxu0 0.0
    %185 = vmatprep.subr.mxu0 0.0
    %186 = vmatpush1.msra.mxu0 0.0
    %187 = vmatprep.subr.mxu0 0.0
    %188 = vmatpush1.msra.mxu0 0.0
    %189 = vmatprep.subr.mxu0 0.0
    %190 = vmatpush1.msra.mxu0 0.0
    %191 = vmatprep.subr.mxu0 0.0
    %192 = vmatpush1.msra.mxu0 0.0
    %193 = vmatprep.subr.mxu0 0.0
    %194 = vmatpush1.msra.mxu0 0.0
    %195 = vmatprep.subr.mxu0 0.0
    %196 = vmatpush1.msra.mxu0 0.0
    %197 = vmatprep.subr.mxu0 0.0
    %198 = vmatpush1.msra.mxu0 0.0
    %199 = vmatprep.subr.mxu0 0.0
    %200 = vmatpush1.msra.mxu0 0.0
    %201 = vmatprep.subr.mxu0 0.0
    %202 = vmatpush1.msra.mxu0 0.0
    %203 = vmatprep.subr.mxu0 0.0
    %204 = vmatpush1.msra.mxu0 0.0
    %205 = vmatprep.subr.mxu0 0.0
    %206 = vmatpush1.msra.mxu0 0.0
    %207 = vmatprep.subr.mxu0 0.0
    %208 = vmatpush1.msra.mxu0 0.0
    %209 = vmatprep.subr.mxu0 0.0
    %210 = vmatpush1.msra.mxu0 0.0
    %211 = vmatprep.subr.mxu0 0.0
    %212 = vmatpush1.msra.mxu0 0.0
    %213 = vmatprep.subr.mxu0 0.0
    %214 = vmatpush1.msra.mxu0 0.0
    %215 = vmatprep.subr.mxu0 0.0
    %216 = vmatpush1.msra.mxu0 0.0
    %217 = vmatprep.subr.mxu0 0.0
    %218 = vmatpush1.msra.mxu0 0.0
    %219 = vmatprep.subr.mxu0 0.0
    %220 = vmatpush1.msra.mxu0 0.0
    %221 = vmatprep.subr.mxu0 0.0
    %222 = vmatpush1.msra.mxu0 0.0
    %223 = vmatprep.subr.mxu0 0.0
    %224 = vmatpush1.msra.mxu0 0.0
    %225 = vmatprep.subr.mxu0 0.0
    %226 = vmatpush1.msra.mxu0 0.0
    %227 = vmatprep.subr.mxu0 0.0
    %228 = vmatpush1.msra.mxu0 0.0
    %229 = vmatprep.subr.mxu0 0.0
    %230 = vmatpush1.msra.mxu0 0.0
    %231 = vmatprep.subr.mxu0 0.0
    %232 = vmatpush1.msra.mxu0 0.0
    %233 = vmatprep.subr.mxu0 0.0
    %234 = vmatpush1.msra.mxu0 0.0
    %235 = vmatprep.mubr.f32.mxu0 0.0
    %236 = vmatmul.mubr.f32.gmra.mrb[0].mxu0 %v163
    %v237 = vpop.f32.mrb[0].mxu0
    %v238 = vadd.f32 %v160, %v237
    %v239 = vpop.f32.mrb[0].mxu0
    %240 = vmatprep.mubr.f32.mxu0 0.0
    %241 = vmatmul.mubr.f32.gmra.mrb[0].mxu0 %v166
    %v242 = vpop.f32.mrb[0].mxu0
    %v243 = vadd.f32 %v160, %v242
    %v244 = vpop.f32.mrb[0].mxu0
    %245 = vmatprep.mubr.f32.mxu0 0.0
    %246 = vmatmul.mubr.f32.gmra.mrb[0].mxu0 %v169
    %v247 = vpop.f32.mrb[0].mxu0
    %v248 = vadd.f32 %v160, %v247
    %v249 = vpop.f32.mrb[0].mxu0
    %250 = vdwg.mxu0
    %v251 = vld [vmem:[#allocation8 + $0x20] sm:$0xff]
    %v252 = vld [vmem:[#allocation10 + $0x1] sm:$0x1]
    %v253 = vlaneseq
    %v254 = vshrl.u32 %v253, 7
    %v255 = vsub.s32 0, %v254
    %v256 = vrot.slane %v252, %v255
    %vm257 = vcmask 64512
    %v259 = vsel %vm257, %v148, 0
    %v262 = vsel %vm257, %v149, 0
    %v265 = vsel %vm257, %v150, 0
    %v268 = vsel %vm257, %v151, 0
    %v271 = vsel %vm257, %v152, 0
    %v274 = vsel %vm257, %v153, 0
    %276 = vmatprep.subr.mxu0 0.0
    %277 = vmatpush1.msra.mxu0 %v251
    %278 = vmatprep.subr.mxu0 0.0
    %279 = vmatpush1.msra.mxu0 0.0
    %280 = vmatprep.subr.mxu0 0.0
    %281 = vmatpush1.msra.mxu0 0.0
    %282 = vmatprep.subr.mxu0 0.0
    %283 = vmatpush1.msra.mxu0 0.0
    %284 = vmatprep.subr.mxu0 0.0
    %285 = vmatpush1.msra.mxu0 0.0
    %286 = vmatprep.subr.mxu0 0.0
    %287 = vmatpush1.msra.mxu0 0.0
    %288 = vmatprep.subr.mxu0 0.0
    %289 = vmatpush1.msra.mxu0 0.0
    %290 = vmatprep.subr.mxu0 0.0
    %291 = vmatpush1.msra.mxu0 0.0
    %292 = vmatprep.subr.mxu0 0.0
    %293 = vmatpush1.msra.mxu0 0.0
    %294 = vmatprep.subr.mxu0 0.0
    %295 = vmatpush1.msra.mxu0 0.0
    %296 = vmatprep.subr.mxu0 0.0
    %297 = vmatpush1.msra.mxu0 0.0
    %298 = vmatprep.subr.mxu0 0.0
    %299 = vmatpush1.msra.mxu0 0.0
    %300 = vmatprep.subr.mxu0 0.0
    %301 = vmatpush1.msra.mxu0 0.0
    %302 = vmatprep.subr.mxu0 0.0
    %303 = vmatpush1.msra.mxu0 0.0
    %304 = vmatprep.subr.mxu0 0.0
    %305 = vmatpush1.msra.mxu0 0.0
    %306 = vmatprep.subr.mxu0 0.0
    %307 = vmatpush1.msra.mxu0 0.0
    %308 = vmatprep.subr.mxu0 0.0
    %309 = vmatpush1.msra.mxu0 0.0
    %310 = vmatprep.subr.mxu0 0.0
    %311 = vmatpush1.msra.mxu0 0.0
    %312 = vmatprep.subr.mxu0 0.0
    %313 = vmatpush1.msra.mxu0 0.0
    %314 = vmatprep.subr.mxu0 0.0
    %315 = vmatpush1.msra.mxu0 0.0
    %316 = vmatprep.subr.mxu0 0.0
    %317 = vmatpush1.msra.mxu0 0.0
    %318 = vmatprep.subr.mxu0 0.0
    %319 = vmatpush1.msra.mxu0 0.0
    %320 = vmatprep.subr.mxu0 0.0
    %321 = vmatpush1.msra.mxu0 0.0
    %322 = vmatprep.subr.mxu0 0.0
    %323 = vmatpush1.msra.mxu0 0.0
    %324 = vmatprep.subr.mxu0 0.0
    %325 = vmatpush1.msra.mxu0 0.0
    %326 = vmatprep.subr.mxu0 0.0
    %327 = vmatpush1.msra.mxu0 0.0
    %328 = vmatprep.subr.mxu0 0.0
    %329 = vmatpush1.msra.mxu0 0.0
    %330 = vmatprep.subr.mxu0 0.0
    %331 = vmatpush1.msra.mxu0 0.0
    %332 = vmatprep.subr.mxu0 0.0
    %333 = vmatpush1.msra.mxu0 0.0
    %334 = vmatprep.subr.mxu0 0.0
    %335 = vmatpush1.msra.mxu0 0.0
    %336 = vmatprep.subr.mxu0 0.0
    %337 = vmatpush1.msra.mxu0 0.0
    %338 = vmatprep.subr.mxu0 0.0
    %339 = vmatpush1.msra.mxu0 0.0
    %340 = vmatprep.mubr.f32.mxu0 0.0
    %341 = vmatmul.mubr.f32.gmra.mrb[0].mxu0 %v259
    %v342 = vpop.f32.mrb[0].mxu0
    %v343 = vadd.f32 %v256, %v342
    %v344 = vpop.f32.mrb[0].mxu0
    %345 = vmatprep.mubr.f32.mxu0 0.0
    %346 = vmatmul.mubr.f32.gmra.mrb[0].mxu0 %v262
    %v347 = vpop.f32.mrb[0].mxu0
    %v348 = vadd.f32 %v256, %v347
    %v349 = vpop.f32.mrb[0].mxu0
    %350 = vmatprep.mubr.f32.mxu0 0.0
    %351 = vmatmul.mubr.f32.gmra.mrb[0].mxu0 %v265
    %v352 = vpop.f32.mrb[0].mxu0
    %v353 = vadd.f32 %v256, %v352
    %v354 = vpop.f32.mrb[0].mxu0
    %355 = vmatprep.mubr.f32.mxu0 0.0
    %356 = vmatmul.mubr.f32.gmra.mrb[0].mxu0 %v268
    %v357 = vpop.f32.mrb[0].mxu0
    %v358 = vadd.f32 %v256, %v357
    %v359 = vpop.f32.mrb[0].mxu0
    %360 = vmatprep.mubr.f32.mxu0 0.0
    %361 = vmatmul.mubr.f32.gmra.mrb[0].mxu0 %v271
    %v362 = vpop.f32.mrb[0].mxu0
    %v363 = vadd.f32 %v256, %v362
    %v364 = vpop.f32.mrb[0].mxu0
    %365 = vmatprep.mubr.f32.mxu0 0.0
    %366 = vmatmul.mubr.f32.gmra.mrb[0].mxu0 %v274
    %v367 = vpop.f32.mrb[0].mxu0
    %v368 = vadd.f32 %v256, %v367
    %v369 = vpop.f32.mrb[0].mxu0
    %370 = vdwg.mxu0
    %v371 = vld [vmem:[#allocation8 + $0x30] sm:$0xff]
    %v372 = vld [vmem:[#allocation8 + $0x40] sm:$0xff]
    %v373 = vld [vmem:[#allocation8 + $0x50] sm:$0xff]
    %v374 = vld [vmem:[#allocation8 + $0x60] sm:$0xff]
    %v375 = vld [vmem:[#allocation8 + $0x70] sm:$0xff]
    %v376 = vld [vmem:[#allocation8 + $0x80] sm:$0xff]
    %v377 = vld [vmem:[#allocation8 + $0x90] sm:$0xff]
    %v378 = vld [vmem:[#allocation8 + $0xa0] sm:$0xff]
    %v379 = vld [vmem:[#allocation8 + $0xb0] sm:$0xff]
    %v380 = vld [vmem:[#allocation8 + $0xc0] sm:$0xff]
    %v381 = vld [vmem:[#allocation8 + $0xd0] sm:$0xff]
    %v382 = vld [vmem:[#allocation8 + $0xe0] sm:$0xff]
    %v383 = vld [vmem:[#allocation8 + $0xf0] sm:$0xff]
    %v384 = vld [vmem:[#allocation8 + $0x100] sm:$0xff]
    %v385 = vld [vmem:[#allocation8 + $0x110] sm:$0xff]
    %v386 = vld [vmem:[#allocation8 + $0x120] sm:$0xff]
    %v387 = vld [vmem:[#allocation10 + $0x2] sm:$0x1]
    %v388 = vlaneseq
    %v389 = vshrl.u32 %v388, 7
    %v390 = vsub.s32 0, %v389
    %v391 = vrot.slane %v387, %v390
    %392 = vmatprep.subr.mxu0 0.0
    %393 = vmatpush1.msra.mxu0 %v371
    %394 = vmatprep.subr.mxu0 0.0
    %395 = vmatpush1.msra.mxu0 %v372
    %396 = vmatprep.subr.mxu0 0.0
    %397 = vmatpush1.msra.mxu0 %v373
    %398 = vmatprep.subr.mxu0 0.0
    %399 = vmatpush1.msra.mxu0 %v374
    %400 = vmatprep.subr.mxu0 0.0
    %401 = vmatpush1.msra.mxu0 %v375
    %402 = vmatprep.subr.mxu0 0.0
    %403 = vmatpush1.msra.mxu0 %v376
    %404 = vmatprep.subr.mxu0 0.0
    %405 = vmatpush1.msra.mxu0 %v377
    %406 = vmatprep.subr.mxu0 0.0
    %407 = vmatpush1.msra.mxu0 %v378
    %408 = vmatprep.subr.mxu0 0.0
    %409 = vmatpush1.msra.mxu0 %v379
    %410 = vmatprep.subr.mxu0 0.0
    %411 = vmatpush1.msra.mxu0 %v380
    %412 = vmatprep.subr.mxu0 0.0
    %413 = vmatpush1.msra.mxu0 %v381
    %414 = vmatprep.subr.mxu0 0.0
    %415 = vmatpush1.msra.mxu0 %v382
    %416 = vmatprep.subr.mxu0 0.0
    %417 = vmatpush1.msra.mxu0 %v383
    %418 = vmatprep.subr.mxu0 0.0
    %419 = vmatpush1.msra.mxu0 %v384
    %420 = vmatprep.subr.mxu0 0.0
    %421 = vmatpush1.msra.mxu0 %v385
    %422 = vmatprep.subr.mxu0 0.0
    %423 = vmatpush1.msra.mxu0 %v386
    %424 = vmatprep.subr.mxu0 0.0
    %425 = vmatpush1.msra.mxu0 0.0
    %426 = vmatprep.subr.mxu0 0.0
    %427 = vmatpush1.msra.mxu0 0.0
    %428 = vmatprep.subr.mxu0 0.0
    %429 = vmatpush1.msra.mxu0 0.0
    %430 = vmatprep.subr.mxu0 0.0
    %431 = vmatpush1.msra.mxu0 0.0
    %432 = vmatprep.subr.mxu0 0.0
    %433 = vmatpush1.msra.mxu0 0.0
    %434 = vmatprep.subr.mxu0 0.0
    %435 = vmatpush1.msra.mxu0 0.0
    %436 = vmatprep.subr.mxu0 0.0
    %437 = vmatpush1.msra.mxu0 0.0
    %438 = vmatprep.subr.mxu0 0.0
    %439 = vmatpush1.msra.mxu0 0.0
    %440 = vmatprep.subr.mxu0 0.0
    %441 = vmatpush1.msra.mxu0 0.0
    %442 = vmatprep.subr.mxu0 0.0
    %443 = vmatpush1.msra.mxu0 0.0
    %444 = vmatprep.subr.mxu0 0.0
    %445 = vmatpush1.msra.mxu0 0.0
    %446 = vmatprep.subr.mxu0 0.0
    %447 = vmatpush1.msra.mxu0 0.0
    %448 = vmatprep.subr.mxu0 0.0
    %449 = vmatpush1.msra.mxu0 0.0
    %450 = vmatprep.subr.mxu0 0.0
    %451 = vmatpush1.msra.mxu0 0.0
    %452 = vmatprep.subr.mxu0 0.0
    %453 = vmatpush1.msra.mxu0 0.0
    %454 = vmatprep.subr.mxu0 0.0
    %455 = vmatpush1.msra.mxu0 0.0
    %456 = vmatprep.mubr.f32.mxu0 0.0
    %457 = vmatmul.mubr.f32.gmra.mrb[0].mxu0 %v238
    %v458 = vpop.f32.mrb[0].mxu0
    %v459 = vadd.f32 %v391, %v458
    %v460 = vpop.f32.mrb[0].mxu0
    %461 = vmatprep.mubr.f32.mxu0 0.0
    %462 = vmatmul.mubr.f32.gmra.mrb[0].mxu0 %v243
    %v463 = vpop.f32.mrb[0].mxu0
    %v464 = vadd.f32 %v391, %v463
    %v465 = vpop.f32.mrb[0].mxu0
    %466 = vmatprep.mubr.f32.mxu0 0.0
    %467 = vmatmul.mubr.f32.gmra.mrb[0].mxu0 %v248
    %v468 = vpop.f32.mrb[0].mxu0
    %v469 = vadd.f32 %v391, %v468
    %v470 = vpop.f32.mrb[0].mxu0
    %471 = vdwg.mxu0
    %v472 = vld [vmem:[#allocation8 + $0x130] sm:$0xff]
    %v473 = vld [vmem:[#allocation8 + $0x138] sm:$0xff]
    %v474 = vld [vmem:[#allocation8 + $0x140] sm:$0xff]
    %v475 = vld [vmem:[#allocation8 + $0x148] sm:$0xff]
    %v476 = vld [vmem:[#allocation8 + $0x150] sm:$0xff]
    %v477 = vld [vmem:[#allocation8 + $0x158] sm:$0xff]
    %v478 = vld [vmem:[#allocation8 + $0x160] sm:$0xff]
    %v479 = vld [vmem:[#allocation8 + $0x168] sm:$0xff]
    %v480 = vld [vmem:[#allocation8 + $0x170] sm:$0xff]
    %v481 = vld [vmem:[#allocation8 + $0x178] sm:$0xff]
    %v482 = vld [vmem:[#allocation8 + $0x180] sm:$0xff]
    %v483 = vld [vmem:[#allocation8 + $0x188] sm:$0xff]
    %v484 = vld [vmem:[#allocation8 + $0x190] sm:$0xff]
    %v485 = vld [vmem:[#allocation8 + $0x198] sm:$0xff]
    %v486 = vld [vmem:[#allocation8 + $0x1a0] sm:$0xff]
    %v487 = vld [vmem:[#allocation8 + $0x1a8] sm:$0xff]
    %v488 = vld [vmem:[#allocation8 + $0x1b0] sm:$0xff]
    %v489 = vld [vmem:[#allocation8 + $0x1b8] sm:$0xff]
    %v490 = vld [vmem:[#allocation8 + $0x1c0] sm:$0xff]
    %v491 = vld [vmem:[#allocation8 + $0x1c8] sm:$0xff]
    %v492 = vld [vmem:[#allocation8 + $0x1d0] sm:$0xff]
    %v493 = vld [vmem:[#allocation8 + $0x1d8] sm:$0xff]
    %v494 = vld [vmem:[#allocation8 + $0x1e0] sm:$0xff]
    %v495 = vld [vmem:[#allocation8 + $0x1e8] sm:$0xff]
    %v496 = vld [vmem:[#allocation8 + $0x1f0] sm:$0xff]
    %v497 = vld [vmem:[#allocation8 + $0x1f8] sm:$0xff]
    %v498 = vld [vmem:[#allocation8 + $0x200] sm:$0xff]
    %v499 = vld [vmem:[#allocation8 + $0x208] sm:$0xff]
    %v500 = vld [vmem:[#allocation8 + $0x210] sm:$0xff]
    %v501 = vld [vmem:[#allocation8 + $0x218] sm:$0xff]
    %v502 = vld [vmem:[#allocation8 + $0x220] sm:$0xff]
    %v503 = vld [vmem:[#allocation8 + $0x228] sm:$0xff]
    %504 = vmatprep.subr.mxu0 %v473
    %505 = vmatpush1.msra.mxu0 %v472
    %506 = vmatprep.subr.mxu0 %v475
    %507 = vmatpush1.msra.mxu0 %v474
    %508 = vmatprep.subr.mxu0 %v477
    %509 = vmatpush1.msra.mxu0 %v476
    %510 = vmatprep.subr.mxu0 %v479
    %511 = vmatpush1.msra.mxu0 %v478
    %512 = vmatprep.subr.mxu0 %v481
    %513 = vmatpush1.msra.mxu0 %v480
    %514 = vmatprep.subr.mxu0 %v483
    %515 = vmatpush1.msra.mxu0 %v482
    %516 = vmatprep.subr.mxu0 %v485
    %517 = vmatpush1.msra.mxu0 %v484
    %518 = vmatprep.subr.mxu0 %v487
    %519 = vmatpush1.msra.mxu0 %v486
    %520 = vmatprep.subr.mxu0 %v489
    %521 = vmatpush1.msra.mxu0 %v488
    %522 = vmatprep.subr.mxu0 %v491
    %523 = vmatpush1.msra.mxu0 %v490
    %524 = vmatprep.subr.mxu0 %v493
    %525 = vmatpush1.msra.mxu0 %v492
    %526 = vmatprep.subr.mxu0 %v495
    %527 = vmatpush1.msra.mxu0 %v494
    %528 = vmatprep.subr.mxu0 %v497
    %529 = vmatpush1.msra.mxu0 %v496
    %530 = vmatprep.subr.mxu0 %v499
    %531 = vmatpush1.msra.mxu0 %v498
    %532 = vmatprep.subr.mxu0 %v501
    %533 = vmatpush1.msra.mxu0 %v500
    %534 = vmatprep.subr.mxu0 %v503
    %535 = vmatpush1.msra.mxu0 %v502
    %536 = vmatprep.subr.mxu0 0.0
    %537 = vmatpush1.msra.mxu0 0.0
    %538 = vmatprep.subr.mxu0 0.0
    %539 = vmatpush1.msra.mxu0 0.0
    %540 = vmatprep.subr.mxu0 0.0
    %541 = vmatpush1.msra.mxu0 0.0
    %542 = vmatprep.subr.mxu0 0.0
    %543 = vmatpush1.msra.mxu0 0.0
    %544 = vmatprep.subr.mxu0 0.0
    %545 = vmatpush1.msra.mxu0 0.0
    %546 = vmatprep.subr.mxu0 0.0
    %547 = vmatpush1.msra.mxu0 0.0
    %548 = vmatprep.subr.mxu0 0.0
    %549 = vmatpush1.msra.mxu0 0.0
    %550 = vmatprep.subr.mxu0 0.0
    %551 = vmatpush1.msra.mxu0 0.0
    %552 = vmatprep.subr.mxu0 0.0
    %553 = vmatpush1.msra.mxu0 0.0
    %554 = vmatprep.subr.mxu0 0.0
    %555 = vmatpush1.msra.mxu0 0.0
    %556 = vmatprep.subr.mxu0 0.0
    %557 = vmatpush1.msra.mxu0 0.0
    %558 = vmatprep.subr.mxu0 0.0
    %559 = vmatpush1.msra.mxu0 0.0
    %560 = vmatprep.subr.mxu0 0.0
    %561 = vmatpush1.msra.mxu0 0.0
    %562 = vmatprep.subr.mxu0 0.0
    %563 = vmatpush1.msra.mxu0 0.0
    %564 = vmatprep.subr.mxu0 0.0
    %565 = vmatpush1.msra.mxu0 0.0
    %566 = vmatprep.subr.mxu0 0.0
    %567 = vmatpush1.msra.mxu0 0.0
    %568 = vmatprep.mubr.f32.mxu0 0.0
    %569 = vmatmul.mubr.f32.gmra.mrb[0].mxu0 %v343
    %v570 = vpop.f32.mrb[0].mxu0
    %v571 = vadd.f32 0.0, %v570
    %v572 = vpop.f32.mrb[0].mxu0
    %v573 = vadd.f32 0.0, %v572
    %574 = vmatprep.mubr.f32.mxu0 0.0
    %575 = vmatmul.mubr.f32.gmra.mrb[0].mxu0 %v348
    %v576 = vpop.f32.mrb[0].mxu0
    %v577 = vadd.f32 0.0, %v576
    %v578 = vpop.f32.mrb[0].mxu0
    %v579 = vadd.f32 0.0, %v578
    %580 = vmatprep.mubr.f32.mxu0 0.0
    %581 = vmatmul.mubr.f32.gmra.mrb[0].mxu0 %v353
    %v582 = vpop.f32.mrb[0].mxu0
    %v583 = vadd.f32 0.0, %v582
    %v584 = vpop.f32.mrb[0].mxu0
    %v585 = vadd.f32 0.0, %v584
    %586 = vmatprep.mubr.f32.mxu0 0.0
    %587 = vmatmul.mubr.f32.gmra.mrb[0].mxu0 %v358
    %v588 = vpop.f32.mrb[0].mxu0
    %v589 = vadd.f32 0.0, %v588
    %v590 = vpop.f32.mrb[0].mxu0
    %v591 = vadd.f32 0.0, %v590
    %592 = vmatprep.mubr.f32.mxu0 0.0
    %593 = vmatmul.mubr.f32.gmra.mrb[0].mxu0 %v363
    %v594 = vpop.f32.mrb[0].mxu0
    %v595 = vadd.f32 0.0, %v594
    %v596 = vpop.f32.mrb[0].mxu0
    %v597 = vadd.f32 0.0, %v596
    %598 = vmatprep.mubr.f32.mxu0 0.0
    %599 = vmatmul.mubr.f32.gmra.mrb[0].mxu0 %v368
    %v600 = vpop.f32.mrb[0].mxu0
    %v601 = vadd.f32 0.0, %v600
    %v602 = vpop.f32.mrb[0].mxu0
    %v603 = vadd.f32 0.0, %v602
    %604 = vdwg.mxu0
    %v605 = vld [vmem:[#allocation10 + $0x3] sm:$0x1]
    %606 = vxpose.xlu0.b32.start [1/16] %v105, 128
    %607 = vxpose.xlu0.b32.cont [2/16] %v106, 128
    %608 = vxpose.xlu0.b32.cont [3/16] %v107, 128
    %609 = vxpose.xlu0.b32.cont [4/16] 0.0, 128
    %610 = vxpose.xlu0.b32.cont [5/16] 0.0, 128
    %611 = vxpose.xlu0.b32.cont [6/16] 0.0, 128
    %612 = vxpose.xlu0.b32.cont [7/16] 0.0, 128
    %613 = vxpose.xlu0.b32.cont [8/16] 0.0, 128
    %614 = vxpose.xlu0.b32.cont [9/16] 0.0, 128
    %615 = vxpose.xlu0.b32.cont [10/16] 0.0, 128
    %616 = vxpose.xlu0.b32.cont [11/16] 0.0, 128
    %617 = vxpose.xlu0.b32.cont [12/16] 0.0, 128
    %618 = vxpose.xlu0.b32.cont [13/16] 0.0, 128
    %619 = vxpose.xlu0.b32.cont [14/16] 0.0, 128
    %620 = vxpose.xlu0.b32.cont [15/16] 0.0, 128
    %621 = vxpose.xlu0.b32.end [16/16] 0.0, 128
    %v622 = vpop.trf.xlu0
    %v623 = vpop.trf.xlu0
    %v624 = vpop.trf.xlu0
    %v625 = vpop.trf.xlu0
    %v626 = vpop.trf.xlu0
    %v627 = vpop.trf.xlu0
    %v628 = vpop.trf.xlu0
    %v629 = vpop.trf.xlu0
    %v630 = vpop.trf.xlu0
    %v631 = vpop.trf.xlu0
    %v632 = vpop.trf.xlu0
    %v633 = vpop.trf.xlu0
    %v634 = vpop.trf.xlu0
    %v635 = vpop.trf.xlu0
    %v636 = vpop.trf.xlu0
    %v637 = vpop.trf.xlu0
    %vm638 = vcmask 195584
    %v640 = vsel %vm638, %v622, 0
    %v643 = vsel %vm638, %v623, 0
    %v646 = vsel %vm638, %v624, 0
    %v649 = vsel %vm638, %v625, 0
    %v652 = vsel %vm638, %v626, 0
    %v655 = vsel %vm638, %v627, 0
    %657 = vmatprep.subr.mxu0 0.0
    %658 = vmatpush1.msra.mxu0 %v459
    %659 = vmatprep.subr.mxu0 0.0
    %660 = vmatpush1.msra.mxu0 %v464
    %661 = vmatprep.subr.mxu0 0.0
    %662 = vmatpush1.msra.mxu0 %v469
    %663 = vmatprep.subr.mxu0 0.0
    %664 = vmatpush1.msra.mxu0 0.0
    %665 = vmatprep.subr.mxu0 0.0
    %666 = vmatpush1.msra.mxu0 0.0
    %667 = vmatprep.subr.mxu0 0.0
    %668 = vmatpush1.msra.mxu0 0.0
    %669 = vmatprep.subr.mxu0 0.0
    %670 = vmatpush1.msra.mxu0 0.0
    %671 = vmatprep.subr.mxu0 0.0
    %672 = vmatpush1.msra.mxu0 0.0
    %673 = vmatprep.subr.mxu0 0.0
    %674 = vmatpush1.msra.mxu0 0.0
    %675 = vmatprep.subr.mxu0 0.0
    %676 = vmatpush1.msra.mxu0 0.0
    %677 = vmatprep.subr.mxu0 0.0
    %678 = vmatpush1.msra.mxu0 0.0
    %679 = vmatprep.subr.mxu0 0.0
    %680 = vmatpush1.msra.mxu0 0.0
    %681 = vmatprep.subr.mxu0 0.0
    %682 = vmatpush1.msra.mxu0 0.0
    %683 = vmatprep.subr.mxu0 0.0
    %684 = vmatpush1.msra.mxu0 0.0
    %685 = vmatprep.subr.mxu0 0.0
    %686 = vmatpush1.msra.mxu0 0.0
    %687 = vmatprep.subr.mxu0 0.0
    %688 = vmatpush1.msra.mxu0 0.0
    %689 = vmatprep.subr.mxu0 0.0
    %690 = vmatpush1.msra.mxu0 0.0
    %691 = vmatprep.subr.mxu0 0.0
    %692 = vmatpush1.msra.mxu0 0.0
    %693 = vmatprep.subr.mxu0 0.0
    %694 = vmatpush1.msra.mxu0 0.0
    %695 = vmatprep.subr.mxu0 0.0
    %696 = vmatpush1.msra.mxu0 0.0
    %697 = vmatprep.subr.mxu0 0.0
    %698 = vmatpush1.msra.mxu0 0.0
    %699 = vmatprep.subr.mxu0 0.0
    %700 = vmatpush1.msra.mxu0 0.0
    %701 = vmatprep.subr.mxu0 0.0
    %702 = vmatpush1.msra.mxu0 0.0
    %703 = vmatprep.subr.mxu0 0.0
    %704 = vmatpush1.msra.mxu0 0.0
    %705 = vmatprep.subr.mxu0 0.0
    %706 = vmatpush1.msra.mxu0 0.0
    %707 = vmatprep.subr.mxu0 0.0
    %708 = vmatpush1.msra.mxu0 0.0
    %709 = vmatprep.subr.mxu0 0.0
    %710 = vmatpush1.msra.mxu0 0.0
    %711 = vmatprep.subr.mxu0 0.0
    %712 = vmatpush1.msra.mxu0 0.0
    %713 = vmatprep.subr.mxu0 0.0
    %714 = vmatpush1.msra.mxu0 0.0
    %715 = vmatprep.subr.mxu0 0.0
    %716 = vmatpush1.msra.mxu0 0.0
    %717 = vmatprep.subr.mxu0 0.0
    %718 = vmatpush1.msra.mxu0 0.0
    %719 = vmatprep.subr.mxu0 0.0
    %720 = vmatpush1.msra.mxu0 0.0
    %721 = vmatprep.mubr.f32.mxu0 0.0
    %722 = vmatmul.mubr.f32.gmra.mrb[0].mxu0 %v640
    %v723 = vpop.f32.mrb[0].mxu0
    %v724 = vadd.f32 %v571, %v723
    %v725 = vpop.f32.mrb[0].mxu0
    %726 = vmatprep.mubr.f32.mxu0 0.0
    %727 = vmatmul.mubr.f32.gmra.mrb[0].mxu0 %v643
    %v728 = vpop.f32.mrb[0].mxu0
    %v729 = vadd.f32 %v577, %v728
    %v730 = vpop.f32.mrb[0].mxu0
    %731 = vmatprep.mubr.f32.mxu0 0.0
    %732 = vmatmul.mubr.f32.gmra.mrb[0].mxu0 %v646
    %v733 = vpop.f32.mrb[0].mxu0
    %v734 = vadd.f32 %v583, %v733
    %v735 = vpop.f32.mrb[0].mxu0
    %736 = vmatprep.mubr.f32.mxu0 0.0
    %737 = vmatmul.mubr.f32.gmra.mrb[0].mxu0 %v649
    %v738 = vpop.f32.mrb[0].mxu0
    %v739 = vadd.f32 %v589, %v738
    %v740 = vpop.f32.mrb[0].mxu0
    %741 = vmatprep.mubr.f32.mxu0 0.0
    %742 = vmatmul.mubr.f32.gmra.mrb[0].mxu0 %v652
    %v743 = vpop.f32.mrb[0].mxu0
    %v744 = vadd.f32 %v595, %v743
    %v745 = vpop.f32.mrb[0].mxu0
    %746 = vmatprep.mubr.f32.mxu0 0.0
    %747 = vmatmul.mubr.f32.gmra.mrb[0].mxu0 %v655
    %v748 = vpop.f32.mrb[0].mxu0
    %v749 = vadd.f32 %v601, %v748
    %v750 = vpop.f32.mrb[0].mxu0
    %751 = vdwg.mxu0
    %v752 = vlaneseq
    %v753 = vshrl.u32 %v752, 7
    %v754 = vsub.s32 0, %v753
    %v755 = vrot.slane %v605, %v754
    %v756 = vadd.f32 %v724, %v755
    %v757 = vadd.f32 %v729, %v755
    %v758 = vadd.f32 %v734, %v755
    %v759 = vadd.f32 %v739, %v755
    %v760 = vadd.f32 %v744, %v755
    %v761 = vadd.f32 %v749, %v755
    %v762 = vxor.u32 %v756, 2147483648
    %v763 = vxor.u32 %v757, 2147483648
    %v764 = vxor.u32 %v758, 2147483648
    %v765 = vxor.u32 %v759, 2147483648
    %v766 = vxor.u32 %v760, 2147483648
    %v767 = vxor.u32 %v761, 2147483648
    %v768 = vmul.f32 %v762, 1.442695
    %v769 = vpow.pop %v768
    %v770 = vmul.f32 %v763, 1.442695
    %v771 = vpow.pop %v770
    %v772 = vmul.f32 %v764, 1.442695
    %v773 = vpow.pop %v772
    %v774 = vmul.f32 %v765, 1.442695
    %v775 = vpow.pop %v774
    %v776 = vmul.f32 %v766, 1.442695
    %v777 = vpow.pop %v776
    %v778 = vmul.f32 %v767, 1.442695
    %v779 = vpow.pop %v778
    %v780 = vadd.f32 %v769, 1.0
    %v781 = vadd.f32 %v771, 1.0
    %v782 = vadd.f32 %v773, 1.0
    %v783 = vadd.f32 %v775, 1.0
    %v784 = vadd.f32 %v777, 1.0
    %v785 = vadd.f32 %v779, 1.0
    %v786 = vrcp.pop %v780
    %v787 = vmul.f32 1.0, %v786
    %v788 = vrcp.pop %v781
    %v789 = vmul.f32 1.0, %v788
    %v790 = vrcp.pop %v782
    %v791 = vmul.f32 1.0, %v790
    %v792 = vrcp.pop %v783
    %v793 = vmul.f32 1.0, %v792
    %v794 = vrcp.pop %v784
    %v795 = vmul.f32 1.0, %v794
    %v796 = vrcp.pop %v785
    %v797 = vmul.f32 1.0, %v796
    %v798 = vmul.f32 %v756, %v787
    %v799 = vmul.f32 %v757, %v789
    %v800 = vmul.f32 %v758, %v791
    %v801 = vmul.f32 %v759, %v793
    %v802 = vmul.f32 %v760, %v795
    %v803 = vmul.f32 %v761, %v797
    %v804 = vld [vmem:[#allocation10 + $0x4] sm:$0x1]
    %v805 = vadd.f32 %v804, 1.0
    %v806 = vlaneseq
    %v807 = vshrl.u32 %v806, 7
    %v808 = vsub.s32 0, %v807
    %v809 = vrot.slane %v805, %v808
    %v810 = vmul.f32 %v809, %v459
    %v811 = vmul.f32 %v809, %v464
    %v812 = vmul.f32 %v809, %v469
    %vm813 = vcmask 392192
    %v815 = vsel %vm813, %v118, 0
    %v818 = vsel %vm813, %v119, 0
    %v821 = vsel %vm813, %v120, 0
    %823 = vmatprep.subr.mxu0 0.0
    %824 = vmatpush1.msra.mxu0 %v798
    %825 = vmatprep.subr.mxu0 0.0
    %826 = vmatpush1.msra.mxu0 %v799
    %827 = vmatprep.subr.mxu0 0.0
    %828 = vmatpush1.msra.mxu0 %v800
    %829 = vmatprep.subr.mxu0 0.0
    %830 = vmatpush1.msra.mxu0 %v801
    %831 = vmatprep.subr.mxu0 0.0
    %832 = vmatpush1.msra.mxu0 %v802
    %833 = vmatprep.subr.mxu0 0.0
    %834 = vmatpush1.msra.mxu0 %v803
    %835 = vmatprep.subr.mxu0 0.0
    %836 = vmatpush1.msra.mxu0 0.0
    %837 = vmatprep.subr.mxu0 0.0
    %838 = vmatpush1.msra.mxu0 0.0
    %839 = vmatprep.subr.mxu0 0.0
    %840 = vmatpush1.msra.mxu0 0.0
    %841 = vmatprep.subr.mxu0 0.0
    %842 = vmatpush1.msra.mxu0 0.0
    %843 = vmatprep.subr.mxu0 0.0
    %844 = vmatpush1.msra.mxu0 0.0
    %845 = vmatprep.subr.mxu0 0.0
    %846 = vmatpush1.msra.mxu0 0.0
    %847 = vmatprep.subr.mxu0 0.0
    %848 = vmatpush1.msra.mxu0 0.0
    %849 = vmatprep.subr.mxu0 0.0
    %850 = vmatpush1.msra.mxu0 0.0
    %851 = vmatprep.subr.mxu0 0.0
    %852 = vmatpush1.msra.mxu0 0.0
    %853 = vmatprep.subr.mxu0 0.0
    %854 = vmatpush1.msra.mxu0 0.0
    %855 = vmatprep.subr.mxu0 0.0
    %856 = vmatpush1.msra.mxu0 0.0
    %857 = vmatprep.subr.mxu0 0.0
    %858 = vmatpush1.msra.mxu0 0.0
    %859 = vmatprep.subr.mxu0 0.0
    %860 = vmatpush1.msra.mxu0 0.0
    %861 = vmatprep.subr.mxu0 0.0
    %862 = vmatpush1.msra.mxu0 0.0
    %863 = vmatprep.subr.mxu0 0.0
    %864 = vmatpush1.msra.mxu0 0.0
    %865 = vmatprep.subr.mxu0 0.0
    %866 = vmatpush1.msra.mxu0 0.0
    %867 = vmatprep.subr.mxu0 0.0
    %868 = vmatpush1.msra.mxu0 0.0
    %869 = vmatprep.subr.mxu0 0.0
    %870 = vmatpush1.msra.mxu0 0.0
    %871 = vmatprep.subr.mxu0 0.0
    %872 = vmatpush1.msra.mxu0 0.0
    %873 = vmatprep.subr.mxu0 0.0
    %874 = vmatpush1.msra.mxu0 0.0
    %875 = vmatprep.subr.mxu0 0.0
    %876 = vmatpush1.msra.mxu0 0.0
    %877 = vmatprep.subr.mxu0 0.0
    %878 = vmatpush1.msra.mxu0 0.0
    %879 = vmatprep.subr.mxu0 0.0
    %880 = vmatpush1.msra.mxu0 0.0
    %881 = vmatprep.subr.mxu0 0.0
    %882 = vmatpush1.msra.mxu0 0.0
    %883 = vmatprep.subr.mxu0 0.0
    %884 = vmatpush1.msra.mxu0 0.0
    %885 = vmatprep.subr.mxu0 0.0
    %886 = vmatpush1.msra.mxu0 0.0
    %887 = vmatprep.mubr.f32.mxu0 0.0
    %888 = vmatmul.mubr.f32.gmra.mrb[0].mxu0 %v815
    %v889 = vpop.f32.mrb[0].mxu0
    %v890 = vadd.f32 %v810, %v889
    %v891 = vpop.f32.mrb[0].mxu0
    %892 = vmatprep.mubr.f32.mxu0 0.0
    %893 = vmatmul.mubr.f32.gmra.mrb[0].mxu0 %v818
    %v894 = vpop.f32.mrb[0].mxu0
    %v895 = vadd.f32 %v811, %v894
    %v896 = vpop.f32.mrb[0].mxu0
    %897 = vmatprep.mubr.f32.mxu0 0.0
    %898 = vmatmul.mubr.f32.gmra.mrb[0].mxu0 %v821
    %v899 = vpop.f32.mrb[0].mxu0
    %v900 = vadd.f32 %v812, %v899
    %v901 = vpop.f32.mrb[0].mxu0
    %902 = vdwg.mxu0
    %v903 = vxor.u32 %v890, 2147483648
    %v904 = vxor.u32 %v895, 2147483648
    %v905 = vxor.u32 %v900, 2147483648
    %v906 = vmul.f32 %v903, 1.442695
    %v907 = vpow.pop %v906
    %v908 = vmul.f32 %v904, 1.442695
    %v909 = vpow.pop %v908
    %v910 = vmul.f32 %v905, 1.442695
    %v911 = vpow.pop %v910
    %v912 = vadd.f32 %v907, 1.0
    %v913 = vadd.f32 %v909, 1.0
    %v914 = vadd.f32 %v911, 1.0
    %v915 = vrcp.pop %v912
    %v916 = vmul.f32 1.0, %v915
    %v917 = vrcp.pop %v913
    %v918 = vmul.f32 1.0, %v917
    %v919 = vrcp.pop %v914
    %v920 = vmul.f32 1.0, %v919
    %v921 = vmul.f32 %v890, %v916
    %v922 = vmul.f32 %v895, %v918
    %v923 = vmul.f32 %v900, %v920
    %v924 = vld [vmem:[#allocation10 + $0x5] sm:$0x1]
    %v925 = vld [vmem:[#allocation10 + $0x6] sm:$0x1]
    %v926 = vld [vmem:[#allocation10 + $0x7] sm:$0x1]
    %v927 = vadd.f32 %v238, %v921
    %v928 = vadd.f32 %v243, %v922
    %v929 = vadd.f32 %v248, %v923
    %v931 = vsel %vm638, %v127, 0
    %933 = vmatprep.subr.mxu0 0.0
    %934 = vmatpush1.msra.mxu0 %v927
    %935 = vmatprep.subr.mxu0 0.0
    %936 = vmatpush1.msra.mxu0 %v928
    %937 = vmatprep.subr.mxu0 0.0
    %938 = vmatpush1.msra.mxu0 %v929
    %939 = vmatprep.subr.mxu0 0.0
    %940 = vmatpush1.msra.mxu0 0.0
    %941 = vmatprep.subr.mxu0 0.0
    %942 = vmatpush1.msra.mxu0 0.0
    %943 = vmatprep.subr.mxu0 0.0
    %944 = vmatpush1.msra.mxu0 0.0
    %945 = vmatprep.subr.mxu0 0.0
    %946 = vmatpush1.msra.mxu0 0.0
    %947 = vmatprep.subr.mxu0 0.0
    %948 = vmatpush1.msra.mxu0 0.0
    %949 = vmatprep.subr.mxu0 0.0
    %950 = vmatpush1.msra.mxu0 0.0
    %951 = vmatprep.subr.mxu0 0.0
    %952 = vmatpush1.msra.mxu0 0.0
    %953 = vmatprep.subr.mxu0 0.0
    %954 = vmatpush1.msra.mxu0 0.0
    %955 = vmatprep.subr.mxu0 0.0
    %956 = vmatpush1.msra.mxu0 0.0
    %957 = vmatprep.subr.mxu0 0.0
    %958 = vmatpush1.msra.mxu0 0.0
    %959 = vmatprep.subr.mxu0 0.0
    %960 = vmatpush1.msra.mxu0 0.0
    %961 = vmatprep.subr.mxu0 0.0
    %962 = vmatpush1.msra.mxu0 0.0
    %963 = vmatprep.subr.mxu0 0.0
    %964 = vmatpush1.msra.mxu0 0.0
    %965 = vmatprep.subr.mxu0 0.0
    %966 = vmatpush1.msra.mxu0 0.0
    %967 = vmatprep.subr.mxu0 0.0
    %968 = vmatpush1.msra.mxu0 0.0
    %969 = vmatprep.subr.mxu0 0.0
    %970 = vmatpush1.msra.mxu0 0.0
    %971 = vmatprep.subr.mxu0 0.0
    %972 = vmatpush1.msra.mxu0 0.0
    %973 = vmatprep.subr.mxu0 0.0
    %974 = vmatpush1.msra.mxu0 0.0
    %975 = vmatprep.subr.mxu0 0.0
    %976 = vmatpush1.msra.mxu0 0.0
    %977 = vmatprep.subr.mxu0 0.0
    %978 = vmatpush1.msra.mxu0 0.0
    %979 = vmatprep.subr.mxu0 0.0
    %980 = vmatpush1.msra.mxu0 0.0
    %981 = vmatprep.subr.mxu0 0.0
    %982 = vmatpush1.msra.mxu0 0.0
    %983 = vmatprep.subr.mxu0 0.0
    %984 = vmatpush1.msra.mxu0 0.0
    %985 = vmatprep.subr.mxu0 0.0
    %986 = vmatpush1.msra.mxu0 0.0
    %987 = vmatprep.subr.mxu0 0.0
    %988 = vmatpush1.msra.mxu0 0.0
    %989 = vmatprep.subr.mxu0 0.0
    %990 = vmatpush1.msra.mxu0 0.0
    %991 = vmatprep.subr.mxu0 0.0
    %992 = vmatpush1.msra.mxu0 0.0
    %993 = vmatprep.subr.mxu0 0.0
    %994 = vmatpush1.msra.mxu0 0.0
    %995 = vmatprep.subr.mxu0 0.0
    %996 = vmatpush1.msra.mxu0 0.0
    %997 = vmatprep.mubr.f32.mxu0 0.0
    %998 = vmatmul.mubr.f32.gmra.mrb[0].mxu0 %v931
    %v999 = vpop.f32.mrb[0].mxu0
    %v1000 = vadd.f32 0.0, %v999
    %v1001 = vpop.f32.mrb[0].mxu0
    %1002 = vdwg.mxu0
    %v1003 = vrcp.pop %v139
    %v1004 = vmul.f32 %v1000, %v1003
    %v1005 = vmul.f32 %v927, %v927
    %v1006 = vmul.f32 %v928, %v928
    %v1007 = vmul.f32 %v929, %v929
    %1008 = vmatprep.subr.mxu0 0.0
    %1009 = vmatpush1.msra.mxu0 %v1005
    %1010 = vmatprep.subr.mxu0 0.0
    %1011 = vmatpush1.msra.mxu0 %v1006
    %1012 = vmatprep.subr.mxu0 0.0
    %1013 = vmatpush1.msra.mxu0 %v1007
    %1014 = vmatprep.subr.mxu0 0.0
    %1015 = vmatpush1.msra.mxu0 0.0
    %1016 = vmatprep.subr.mxu0 0.0
    %1017 = vmatpush1.msra.mxu0 0.0
    %1018 = vmatprep.subr.mxu0 0.0
    %1019 = vmatpush1.msra.mxu0 0.0
    %1020 = vmatprep.subr.mxu0 0.0
    %1021 = vmatpush1.msra.mxu0 0.0
    %1022 = vmatprep.subr.mxu0 0.0
    %1023 = vmatpush1.msra.mxu0 0.0
    %1024 = vmatprep.subr.mxu0 0.0
    %1025 = vmatpush1.msra.mxu0 0.0
    %1026 = vmatprep.subr.mxu0 0.0
    %1027 = vmatpush1.msra.mxu0 0.0
    %1028 = vmatprep.subr.mxu0 0.0
    %1029 = vmatpush1.msra.mxu0 0.0
    %1030 = vmatprep.subr.mxu0 0.0
    %1031 = vmatpush1.msra.mxu0 0.0
    %1032 = vmatprep.subr.mxu0 0.0
    %1033 = vmatpush1.msra.mxu0 0.0
    %1034 = vmatprep.subr.mxu0 0.0
    %1035 = vmatpush1.msra.mxu0 0.0
    %1036 = vmatprep.subr.mxu0 0.0
    %1037 = vmatpush1.msra.mxu0 0.0
    %1038 = vmatprep.subr.mxu0 0.0
    %1039 = vmatpush1.msra.mxu0 0.0
    %1040 = vmatprep.subr.mxu0 0.0
    %1041 = vmatpush1.msra.mxu0 0.0
    %1042 = vmatprep.subr.mxu0 0.0
    %1043 = vmatpush1.msra.mxu0 0.0
    %1044 = vmatprep.subr.mxu0 0.0
    %1045 = vmatpush1.msra.mxu0 0.0
    %1046 = vmatprep.subr.mxu0 0.0
    %1047 = vmatpush1.msra.mxu0 0.0
    %1048 = vmatprep.subr.mxu0 0.0
    %1049 = vmatpush1.msra.mxu0 0.0
    %1050 = vmatprep.subr.mxu0 0.0
    %1051 = vmatpush1.msra.mxu0 0.0
    %1052 = vmatprep.subr.mxu0 0.0
    %1053 = vmatpush1.msra.mxu0 0.0
    %1054 = vmatprep.subr.mxu0 0.0
    %1055 = vmatpush1.msra.mxu0 0.0
    %1056 = vmatprep.subr.mxu0 0.0
    %1057 = vmatpush1.msra.mxu0 0.0
    %1058 = vmatprep.subr.mxu0 0.0
    %1059 = vmatpush1.msra.mxu0 0.0
    %1060 = vmatprep.subr.mxu0 0.0
    %1061 = vmatpush1.msra.mxu0 0.0
    %1062 = vmatprep.subr.mxu0 0.0
    %1063 = vmatpush1.msra.mxu0 0.0
    %1064 = vmatprep.subr.mxu0 0.0
    %1065 = vmatpush1.msra.mxu0 0.0
    %1066 = vmatprep.subr.mxu0 0.0
    %1067 = vmatpush1.msra.mxu0 0.0
    %1068 = vmatprep.subr.mxu0 0.0
    %1069 = vmatpush1.msra.mxu0 0.0
    %1070 = vmatprep.subr.mxu0 0.0
    %1071 = vmatpush1.msra.mxu0 0.0
    %1072 = vmatprep.mubr.f32.mxu0 0.0
    %1073 = vmatmul.mubr.f32.gmra.mrb[0].mxu0 %v931
    %v1074 = vpop.f32.mrb[0].mxu0
    %v1075 = vadd.f32 0.0, %v1074
    %v1076 = vpop.f32.mrb[0].mxu0
    %1077 = vdwg.mxu0
    %v1078 = vmul.f32 %v1075, %v1003
    %1079 = vxpose.xlu0.b32.start [1/16] %v127, 128
    %1080 = vxpose.xlu0.b32.cont [2/16] 0.0, 128
    %1081 = vxpose.xlu0.b32.cont [3/16] 0.0, 128
    %1082 = vxpose.xlu0.b32.cont [4/16] 0.0, 128
    %1083 = vxpose.xlu0.b32.cont [5/16] 0.0, 128
    %1084 = vxpose.xlu0.b32.cont [6/16] 0.0, 128
    %1085 = vxpose.xlu0.b32.cont [7/16] 0.0, 128
    %1086 = vxpose.xlu0.b32.cont [8/16] 0.0, 128
    %1087 = vxpose.xlu0.b32.cont [9/16] 0.0, 128
    %1088 = vxpose.xlu0.b32.cont [10/16] 0.0, 128
    %1089 = vxpose.xlu0.b32.cont [11/16] 0.0, 128
    %1090 = vxpose.xlu0.b32.cont [12/16] 0.0, 128
    %1091 = vxpose.xlu0.b32.cont [13/16] 0.0, 128
    %1092 = vxpose.xlu0.b32.cont [14/16] 0.0, 128
    %1093 = vxpose.xlu0.b32.cont [15/16] 0.0, 128
    %1094 = vxpose.xlu0.b32.end [16/16] 0.0, 128
    %v1095 = vpop.trf.xlu0
    %v1096 = vpop.trf.xlu0
    %v1097 = vpop.trf.xlu0
    %v1098 = vpop.trf.xlu0
    %v1099 = vpop.trf.xlu0
    %v1100 = vpop.trf.xlu0
    %v1101 = vpop.trf.xlu0
    %v1102 = vpop.trf.xlu0
    %v1103 = vpop.trf.xlu0
    %v1104 = vpop.trf.xlu0
    %v1105 = vpop.trf.xlu0
    %v1106 = vpop.trf.xlu0
    %v1107 = vpop.trf.xlu0
    %v1108 = vpop.trf.xlu0
    %v1109 = vpop.trf.xlu0
    %v1110 = vpop.trf.xlu0
    %vm1111 = vcmask 15360
    %v1113 = vsel %vm1111, %v1095, 0
    %v1116 = vsel %vm1111, %v1096, 0
    %v1119 = vsel %vm1111, %v1097, 0
    %vm1121 = vcmask 1041408
    %v1123 = vsel %vm1121, %v1004, 0
    %v1126 = vsel %vm1121, %v1078, 0
    %1128 = vmatprep.subr.mxu0 %v1126
    %1129 = vmatpush1.msra.mxu0 %v1123
    %1130 = vmatprep.subr.mxu0 0.0
    %1131 = vmatpush1.msra.mxu0 0.0
    %1132 = vmatprep.subr.mxu0 0.0
    %1133 = vmatpush1.msra.mxu0 0.0
    %1134 = vmatprep.subr.mxu0 0.0
    %1135 = vmatpush1.msra.mxu0 0.0
    %1136 = vmatprep.subr.mxu0 0.0
    %1137 = vmatpush1.msra.mxu0 0.0
    %1138 = vmatprep.subr.mxu0 0.0
    %1139 = vmatpush1.msra.mxu0 0.0
    %1140 = vmatprep.subr.mxu0 0.0
    %1141 = vmatpush1.msra.mxu0 0.0
    %1142 = vmatprep.subr.mxu0 0.0
    %1143 = vmatpush1.msra.mxu0 0.0
    %1144 = vmatprep.subr.mxu0 0.0
    %1145 = vmatpush1.msra.mxu0 0.0
    %1146 = vmatprep.subr.mxu0 0.0
    %1147 = vmatpush1.msra.mxu0 0.0
    %1148 = vmatprep.subr.mxu0 0.0
    %1149 = vmatpush1.msra.mxu0 0.0
    %1150 = vmatprep.subr.mxu0 0.0
    %1151 = vmatpush1.msra.mxu0 0.0
    %1152 = vmatprep.subr.mxu0 0.0
    %1153 = vmatpush1.msra.mxu0 0.0
    %1154 = vmatprep.subr.mxu0 0.0
    %1155 = vmatpush1.msra.mxu0 0.0
    %1156 = vmatprep.subr.mxu0 0.0
    %1157 = vmatpush1.msra.mxu0 0.0
    %1158 = vmatprep.subr.mxu0 0.0
    %1159 = vmatpush1.msra.mxu0 0.0
    %1160 = vmatprep.subr.mxu0 0.0
    %1161 = vmatpush1.msra.mxu0 0.0
    %1162 = vmatprep.subr.mxu0 0.0
    %1163 = vmatpush1.msra.mxu0 0.0
    %1164 = vmatprep.subr.mxu0 0.0
    %1165 = vmatpush1.msra.mxu0 0.0
    %1166 = vmatprep.subr.mxu0 0.0
    %1167 = vmatpush1.msra.mxu0 0.0
    %1168 = vmatprep.subr.mxu0 0.0
    %1169 = vmatpush1.msra.mxu0 0.0
    %1170 = vmatprep.subr.mxu0 0.0
    %1171 = vmatpush1.msra.mxu0 0.0
    %1172 = vmatprep.subr.mxu0 0.0
    %1173 = vmatpush1.msra.mxu0 0.0
    %1174 = vmatprep.subr.mxu0 0.0
    %1175 = vmatpush1.msra.mxu0 0.0
    %1176 = vmatprep.subr.mxu0 0.0
    %1177 = vmatpush1.msra.mxu0 0.0
    %1178 = vmatprep.subr.mxu0 0.0
    %1179 = vmatpush1.msra.mxu0 0.0
    %1180 = vmatprep.subr.mxu0 0.0
    %1181 = vmatpush1.msra.mxu0 0.0
    %1182 = vmatprep.subr.mxu0 0.0
    %1183 = vmatpush1.msra.mxu0 0.0
    %1184 = vmatprep.subr.mxu0 0.0
    %1185 = vmatpush1.msra.mxu0 0.0
    %1186 = vmatprep.subr.mxu0 0.0
    %1187 = vmatpush1.msra.mxu0 0.0
    %1188 = vmatprep.subr.mxu0 0.0
    %1189 = vmatpush1.msra.mxu0 0.0
    %1190 = vmatprep.subr.mxu0 0.0
    %1191 = vmatpush1.msra.mxu0 0.0
    %1192 = vmatprep.mubr.f32.mxu0 0.0
    %1193 = vmatmul.mubr.f32.gmra.mrb[0].mxu0 %v1113
    %v1194 = vpop.f32.mrb[0].mxu0
    %v1195 = vadd.f32 0.0, %v1194
    %v1196 = vpop.f32.mrb[0].mxu0
    %v1197 = vadd.f32 0.0, %v1196
    %1198 = vmatprep.mubr.f32.mxu0 0.0
    %1199 = vmatmul.mubr.f32.gmra.mrb[0].mxu0 %v1116
    %v1200 = vpop.f32.mrb[0].mxu0
    %v1201 = vadd.f32 0.0, %v1200
    %v1202 = vpop.f32.mrb[0].mxu0
    %v1203 = vadd.f32 0.0, %v1202
    %1204 = vmatprep.mubr.f32.mxu0 0.0
    %1205 = vmatmul.mubr.f32.gmra.mrb[0].mxu0 %v1119
    %v1206 = vpop.f32.mrb[0].mxu0
    %v1207 = vadd.f32 0.0, %v1206
    %v1208 = vpop.f32.mrb[0].mxu0
    %v1209 = vadd.f32 0.0, %v1208
    %1210 = vdwg.mxu0
    %v1211 = vlaneseq
    %v1212 = vshrl.u32 %v1211, 7
    %v1213 = vsub.s32 0, %v1212
    %v1214 = vrot.slane %v926, %v1213
    %v1215 = vmul.f32 %v1214, %v1195
    %v1216 = vmul.f32 %v1214, %v1201
    %v1217 = vmul.f32 %v1214, %v1207
    %v1218 = vsub.f32 %v927, %v1215
    %v1219 = vsub.f32 %v928, %v1216
    %v1220 = vsub.f32 %v929, %v1217
    %v1221 = vsub.f32 2.0, %v926
    %v1222 = vmul.f32 %v926, %v1221
    %v1223 = vmul.f32 %v1195, %v1195
    %v1224 = vmul.f32 %v1201, %v1201
    %v1225 = vmul.f32 %v1207, %v1207
    %v1226 = vlaneseq
    %v1227 = vshrl.u32 %v1226, 7
    %v1228 = vsub.s32 0, %v1227
    %v1229 = vrot.slane %v1222, %v1228
    %v1230 = vmul.f32 %v1229, %v1223
    %v1231 = vmul.f32 %v1229, %v1224
    %v1232 = vmul.f32 %v1229, %v1225
    %v1233 = vsub.f32 %v1197, %v1230
    %v1234 = vsub.f32 %v1203, %v1231
    %v1235 = vsub.f32 %v1209, %v1232
    %v1236 = vmax.f32 %v1233, 0.0
    %v1237 = vmax.f32 %v1234, 0.0
    %v1238 = vmax.f32 %v1235, 0.0
    %v1239 = vlaneseq
    %v1240 = vshrl.u32 %v1239, 7
    %v1241 = vsub.s32 0, %v1240
    %v1242 = vrot.slane %v924, %v1241
    %v1243 = vmul.f32 %v1242, %v1218
    %v1244 = vmul.f32 %v1242, %v1219
    %v1245 = vmul.f32 %v1242, %v1220
    %v1246 = vadd.f32 %v1236, 1e-05
    %v1247 = vadd.f32 %v1237, 1e-05
    %v1248 = vadd.f32 %v1238, 1e-05
    %v1249 = vrsqrt.pop %v1246
    %v1250 = vrsqrt.pop %v1247
    %v1251 = vrsqrt.pop %v1248
    %v1252 = vmul.f32 %v1243, %v1249
    %v1253 = vmul.f32 %v1244, %v1250
    %v1254 = vmul.f32 %v1245, %v1251
    %v1255 = vlaneseq
    %v1256 = vshrl.u32 %v1255, 7
    %v1257 = vsub.s32 0, %v1256
    %v1258 = vrot.slane %v925, %v1257
    %v1259 = vadd.f32 %v1252, %v1258
    %v1260 = vadd.f32 %v1253, %v1258
    %v1261 = vadd.f32 %v1254, %v1258
    %v1262 = vld [vmem:[#allocation8 + $0x230] sm:$0xff]
    %v1263 = vld [vmem:[#allocation8 + $0x238] sm:$0xff]
    %v1264 = vld [vmem:[#allocation8 + $0x240] sm:$0xff]
    %v1265 = vld [vmem:[#allocation8 + $0x248] sm:$0xff]
    %v1266 = vld [vmem:[#allocation8 + $0x250] sm:$0xff]
    %v1267 = vld [vmem:[#allocation8 + $0x258] sm:$0xff]
    %v1268 = vld [vmem:[#allocation8 + $0x260] sm:$0xff]
    %v1269 = vld [vmem:[#allocation8 + $0x268] sm:$0xff]
    %v1270 = vld [vmem:[#allocation8 + $0x270] sm:$0xff]
    %v1271 = vld [vmem:[#allocation8 + $0x278] sm:$0xff]
    %v1272 = vld [vmem:[#allocation8 + $0x280] sm:$0xff]
    %v1273 = vld [vmem:[#allocation8 + $0x288] sm:$0xff]
    %v1274 = vld [vmem:[#allocation8 + $0x290] sm:$0xff]
    %v1275 = vld [vmem:[#allocation8 + $0x298] sm:$0xff]
    %v1276 = vld [vmem:[#allocation8 + $0x2a0] sm:$0xff]
    %v1277 = vld [vmem:[#allocation8 + $0x2a8] sm:$0xff]
    %v1278 = vld [vmem:[#allocation8 + $0x2b0] sm:$0xff]
    %v1279 = vld [vmem:[#allocation8 + $0x2b8] sm:$0xff]
    %v1280 = vld [vmem:[#allocation8 + $0x2c0] sm:$0xff]
    %v1281 = vld [vmem:[#allocation8 + $0x2c8] sm:$0xff]
    %v1282 = vld [vmem:[#allocation8 + $0x2d0] sm:$0xff]
    %v1283 = vld [vmem:[#allocation8 + $0x2d8] sm:$0xff]
    %v1284 = vld [vmem:[#allocation8 + $0x2e0] sm:$0xff]
    %v1285 = vld [vmem:[#allocation8 + $0x2e8] sm:$0xff]
    %v1286 = vld [vmem:[#allocation8 + $0x2f0] sm:$0xff]
    %v1287 = vld [vmem:[#allocation8 + $0x2f8] sm:$0xff]
    %v1288 = vld [vmem:[#allocation8 + $0x300] sm:$0xff]
    %v1289 = vld [vmem:[#allocation8 + $0x308] sm:$0xff]
    %v1290 = vld [vmem:[#allocation8 + $0x310] sm:$0xff]
    %v1291 = vld [vmem:[#allocation8 + $0x318] sm:$0xff]
    %v1292 = vld [vmem:[#allocation8 + $0x320] sm:$0xff]
    %v1293 = vld [vmem:[#allocation8 + $0x328] sm:$0xff]
    %1294 = vmatprep.subr.mxu0 %v1263
    %1295 = vmatpush1.msra.mxu0 %v1262
    %1296 = vmatprep.subr.mxu0 %v1265
    %1297 = vmatpush1.msra.mxu0 %v1264
    %1298 = vmatprep.subr.mxu0 %v1267
    %1299 = vmatpush1.msra.mxu0 %v1266
    %1300 = vmatprep.subr.mxu0 %v1269
    %1301 = vmatpush1.msra.mxu0 %v1268
    %1302 = vmatprep.subr.mxu0 %v1271
    %1303 = vmatpush1.msra.mxu0 %v1270
    %1304 = vmatprep.subr.mxu0 %v1273
    %1305 = vmatpush1.msra.mxu0 %v1272
    %1306 = vmatprep.subr.mxu0 %v1275
    %1307 = vmatpush1.msra.mxu0 %v1274
    %1308 = vmatprep.subr.mxu0 %v1277
    %1309 = vmatpush1.msra.mxu0 %v1276
    %1310 = vmatprep.subr.mxu0 %v1279
    %1311 = vmatpush1.msra.mxu0 %v1278
    %1312 = vmatprep.subr.mxu0 %v1281
    %1313 = vmatpush1.msra.mxu0 %v1280
    %1314 = vmatprep.subr.mxu0 %v1283
    %1315 = vmatpush1.msra.mxu0 %v1282
    %1316 = vmatprep.subr.mxu0 %v1285
    %1317 = vmatpush1.msra.mxu0 %v1284
    %1318 = vmatprep.subr.mxu0 %v1287
    %1319 = vmatpush1.msra.mxu0 %v1286
    %1320 = vmatprep.subr.mxu0 %v1289
    %1321 = vmatpush1.msra.mxu0 %v1288
    %1322 = vmatprep.subr.mxu0 %v1291
    %1323 = vmatpush1.msra.mxu0 %v1290
    %1324 = vmatprep.subr.mxu0 %v1293
    %1325 = vmatpush1.msra.mxu0 %v1292
    %1326 = vmatprep.subr.mxu0 0.0
    %1327 = vmatpush1.msra.mxu0 0.0
    %1328 = vmatprep.subr.mxu0 0.0
    %1329 = vmatpush1.msra.mxu0 0.0
    %1330 = vmatprep.subr.mxu0 0.0
    %1331 = vmatpush1.msra.mxu0 0.0
    %1332 = vmatprep.subr.mxu0 0.0
    %1333 = vmatpush1.msra.mxu0 0.0
    %1334 = vmatprep.subr.mxu0 0.0
    %1335 = vmatpush1.msra.mxu0 0.0
    %1336 = vmatprep.subr.mxu0 0.0
    %1337 = vmatpush1.msra.mxu0 0.0
    %1338 = vmatprep.subr.mxu0 0.0
    %1339 = vmatpush1.msra.mxu0 0.0
    %1340 = vmatprep.subr.mxu0 0.0
    %1341 = vmatpush1.msra.mxu0 0.0
    %1342 = vmatprep.subr.mxu0 0.0
    %1343 = vmatpush1.msra.mxu0 0.0
    %1344 = vmatprep.subr.mxu0 0.0
    %1345 = vmatpush1.msra.mxu0 0.0
    %1346 = vmatprep.subr.mxu0 0.0
    %1347 = vmatpush1.msra.mxu0 0.0
    %1348 = vmatprep.subr.mxu0 0.0
    %1349 = vmatpush1.msra.mxu0 0.0
    %1350 = vmatprep.subr.mxu0 0.0
    %1351 = vmatpush1.msra.mxu0 0.0
    %1352 = vmatprep.subr.mxu0 0.0
    %1353 = vmatpush1.msra.mxu0 0.0
    %1354 = vmatprep.subr.mxu0 0.0
    %1355 = vmatpush1.msra.mxu0 0.0
    %1356 = vmatprep.subr.mxu0 0.0
    %1357 = vmatpush1.msra.mxu0 0.0
    %1358 = vmatprep.mubr.f32.mxu0 0.0
    %1359 = vmatmul.mubr.f32.gmra.mrb[0].mxu0 %v1259
    %v1360 = vpop.f32.mrb[0].mxu0
    %v1361 = vadd.f32 0.0, %v1360
    %v1362 = vpop.f32.mrb[0].mxu0
    %v1363 = vadd.f32 0.0, %v1362
    %1364 = vmatprep.mubr.f32.mxu0 0.0
    %1365 = vmatmul.mubr.f32.gmra.mrb[0].mxu0 %v1260
    %v1366 = vpop.f32.mrb[0].mxu0
    %v1367 = vadd.f32 0.0, %v1366
    %v1368 = vpop.f32.mrb[0].mxu0
    %v1369 = vadd.f32 0.0, %v1368
    %1370 = vmatprep.mubr.f32.mxu0 0.0
    %1371 = vmatmul.mubr.f32.gmra.mrb[0].mxu0 %v1261
    %v1372 = vpop.f32.mrb[0].mxu0
    %v1373 = vadd.f32 0.0, %v1372
    %v1374 = vpop.f32.mrb[0].mxu0
    %v1375 = vadd.f32 0.0, %v1374
    %1376 = vdwg.mxu0
    %v1377 = vld [vmem:[#allocation10 + $0x8] sm:$0x1]
    %1378 = vxpose.xlu0.b32.start [1/16] %v118, 128
    %1379 = vxpose.xlu0.b32.cont [2/16] %v119, 128
    %1380 = vxpose.xlu0.b32.cont [3/16] %v120, 128
    %1381 = vxpose.xlu0.b32.cont [4/16] 0.0, 128
    %1382 = vxpose.xlu0.b32.cont [5/16] 0.0, 128
    %1383 = vxpose.xlu0.b32.cont [6/16] 0.0, 128
    %1384 = vxpose.xlu0.b32.cont [7/16] 0.0, 128
    %1385 = vxpose.xlu0.b32.cont [8/16] 0.0, 128
    %1386 = vxpose.xlu0.b32.cont [9/16] 0.0, 128
    %1387 = vxpose.xlu0.b32.cont [10/16] 0.0, 128
    %1388 = vxpose.xlu0.b32.cont [11/16] 0.0, 128
    %1389 = vxpose.xlu0.b32.cont [12/16] 0.0, 128
    %1390 = vxpose.xlu0.b32.cont [13/16] 0.0, 128
    %1391 = vxpose.xlu0.b32.cont [14/16] 0.0, 128
    %1392 = vxpose.xlu0.b32.cont [15/16] 0.0, 128
    %1393 = vxpose.xlu0.b32.end [16/16] 0.0, 128
    %v1394 = vpop.trf.xlu0
    %v1395 = vpop.trf.xlu0
    %v1396 = vpop.trf.xlu0
    %v1397 = vpop.trf.xlu0
    %v1398 = vpop.trf.xlu0
    %v1399 = vpop.trf.xlu0
    %v1400 = vpop.trf.xlu0
    %v1401 = vpop.trf.xlu0
    %v1402 = vpop.trf.xlu0
    %v1403 = vpop.trf.xlu0
    %v1404 = vpop.trf.xlu0
    %v1405 = vpop.trf.xlu0
    %v1406 = vpop.trf.xlu0
    %v1407 = vpop.trf.xlu0
    %v1408 = vpop.trf.xlu0
    %v1409 = vpop.trf.xlu0
    %v1411 = vsel %vm638, %v1394, 0
    %v1414 = vsel %vm638, %v1395, 0
    %v1417 = vsel %vm638, %v1396, 0
    %v1420 = vsel %vm638, %v1397, 0
    %v1423 = vsel %vm638, %v1398, 0
    %v1426 = vsel %vm638, %v1399, 0
    %1428 = vmatprep.subr.mxu0 0.0
    %1429 = vmatpush1.msra.mxu0 %v1363
    %1430 = vmatprep.subr.mxu0 0.0
    %1431 = vmatpush1.msra.mxu0 %v1369
    %1432 = vmatprep.subr.mxu0 0.0
    %1433 = vmatpush1.msra.mxu0 %v1375
    %1434 = vmatprep.subr.mxu0 0.0
    %1435 = vmatpush1.msra.mxu0 0.0
    %1436 = vmatprep.subr.mxu0 0.0
    %1437 = vmatpush1.msra.mxu0 0.0
    %1438 = vmatprep.subr.mxu0 0.0
    %1439 = vmatpush1.msra.mxu0 0.0
    %1440 = vmatprep.subr.mxu0 0.0
    %1441 = vmatpush1.msra.mxu0 0.0
    %1442 = vmatprep.subr.mxu0 0.0
    %1443 = vmatpush1.msra.mxu0 0.0
    %1444 = vmatprep.subr.mxu0 0.0
    %1445 = vmatpush1.msra.mxu0 0.0
    %1446 = vmatprep.subr.mxu0 0.0
    %1447 = vmatpush1.msra.mxu0 0.0
    %1448 = vmatprep.subr.mxu0 0.0
    %1449 = vmatpush1.msra.mxu0 0.0
    %1450 = vmatprep.subr.mxu0 0.0
    %1451 = vmatpush1.msra.mxu0 0.0
    %1452 = vmatprep.subr.mxu0 0.0
    %1453 = vmatpush1.msra.mxu0 0.0
    %1454 = vmatprep.subr.mxu0 0.0
    %1455 = vmatpush1.msra.mxu0 0.0
    %1456 = vmatprep.subr.mxu0 0.0
    %1457 = vmatpush1.msra.mxu0 0.0
    %1458 = vmatprep.subr.mxu0 0.0
    %1459 = vmatpush1.msra.mxu0 0.0
    %1460 = vmatprep.subr.mxu0 0.0
    %1461 = vmatpush1.msra.mxu0 0.0
    %1462 = vmatprep.subr.mxu0 0.0
    %1463 = vmatpush1.msra.mxu0 0.0
    %1464 = vmatprep.subr.mxu0 0.0
    %1465 = vmatpush1.msra.mxu0 0.0
    %1466 = vmatprep.subr.mxu0 0.0
    %1467 = vmatpush1.msra.mxu0 0.0
    %1468 = vmatprep.subr.mxu0 0.0
    %1469 = vmatpush1.msra.mxu0 0.0
    %1470 = vmatprep.subr.mxu0 0.0
    %1471 = vmatpush1.msra.mxu0 0.0
    %1472 = vmatprep.subr.mxu0 0.0
    %1473 = vmatpush1.msra.mxu0 0.0
    %1474 = vmatprep.subr.mxu0 0.0
    %1475 = vmatpush1.msra.mxu0 0.0
    %1476 = vmatprep.subr.mxu0 0.0
    %1477 = vmatpush1.msra.mxu0 0.0
    %1478 = vmatprep.subr.mxu0 0.0
    %1479 = vmatpush1.msra.mxu0 0.0
    %1480 = vmatprep.subr.mxu0 0.0
    %1481 = vmatpush1.msra.mxu0 0.0
    %1482 = vmatprep.subr.mxu0 0.0
    %1483 = vmatpush1.msra.mxu0 0.0
    %1484 = vmatprep.subr.mxu0 0.0
    %1485 = vmatpush1.msra.mxu0 0.0
    %1486 = vmatprep.subr.mxu0 0.0
    %1487 = vmatpush1.msra.mxu0 0.0
    %1488 = vmatprep.subr.mxu0 0.0
    %1489 = vmatpush1.msra.mxu0 0.0
    %1490 = vmatprep.subr.mxu0 0.0
    %1491 = vmatpush1.msra.mxu0 0.0
    %1492 = vmatprep.mubr.f32.mxu0 0.0
    %1493 = vmatmul.mubr.f32.gmra.mrb[0].mxu0 %v1411
    %v1494 = vpop.f32.mrb[0].mxu0
    %v1495 = vadd.f32 0.0, %v1494
    %v1496 = vpop.f32.mrb[0].mxu0
    %1497 = vmatprep.mubr.f32.mxu0 0.0
    %1498 = vmatmul.mubr.f32.gmra.mrb[0].mxu0 %v1414
    %v1499 = vpop.f32.mrb[0].mxu0
    %v1500 = vadd.f32 0.0, %v1499
    %v1501 = vpop.f32.mrb[0].mxu0
    %1502 = vmatprep.mubr.f32.mxu0 0.0
    %1503 = vmatmul.mubr.f32.gmra.mrb[0].mxu0 %v1417
    %v1504 = vpop.f32.mrb[0].mxu0
    %v1505 = vadd.f32 0.0, %v1504
    %v1506 = vpop.f32.mrb[0].mxu0
    %1507 = vmatprep.mubr.f32.mxu0 0.0
    %1508 = vmatmul.mubr.f32.gmra.mrb[0].mxu0 %v1420
    %v1509 = vpop.f32.mrb[0].mxu0
    %v1510 = vadd.f32 0.0, %v1509
    %v1511 = vpop.f32.mrb[0].mxu0
    %1512 = vmatprep.mubr.f32.mxu0 0.0
    %1513 = vmatmul.mubr.f32.gmra.mrb[0].mxu0 %v1423
    %v1514 = vpop.f32.mrb[0].mxu0
    %v1515 = vadd.f32 0.0, %v1514
    %v1516 = vpop.f32.mrb[0].mxu0
    %1517 = vmatprep.mubr.f32.mxu0 0.0
    %1518 = vmatmul.mubr.f32.gmra.mrb[0].mxu0 %v1426
    %v1519 = vpop.f32.mrb[0].mxu0
    %v1520 = vadd.f32 0.0, %v1519
    %v1521 = vpop.f32.mrb[0].mxu0
    %1522 = vdwg.mxu0
    %1523 = vmatprep.subr.mxu0 0.0
    %1524 = vmatpush1.msra.mxu0 %v1361
    %1525 = vmatprep.subr.mxu0 0.0
    %1526 = vmatpush1.msra.mxu0 %v1367
    %1527 = vmatprep.subr.mxu0 0.0
    %1528 = vmatpush1.msra.mxu0 %v1373
    %1529 = vmatprep.subr.mxu0 0.0
    %1530 = vmatpush1.msra.mxu0 0.0
    %1531 = vmatprep.subr.mxu0 0.0
    %1532 = vmatpush1.msra.mxu0 0.0
    %1533 = vmatprep.subr.mxu0 0.0
    %1534 = vmatpush1.msra.mxu0 0.0
    %1535 = vmatprep.subr.mxu0 0.0
    %1536 = vmatpush1.msra.mxu0 0.0
    %1537 = vmatprep.subr.mxu0 0.0
    %1538 = vmatpush1.msra.mxu0 0.0
    %1539 = vmatprep.subr.mxu0 0.0
    %1540 = vmatpush1.msra.mxu0 0.0
    %1541 = vmatprep.subr.mxu0 0.0
    %1542 = vmatpush1.msra.mxu0 0.0
    %1543 = vmatprep.subr.mxu0 0.0
    %1544 = vmatpush1.msra.mxu0 0.0
    %1545 = vmatprep.subr.mxu0 0.0
    %1546 = vmatpush1.msra.mxu0 0.0
    %1547 = vmatprep.subr.mxu0 0.0
    %1548 = vmatpush1.msra.mxu0 0.0
    %1549 = vmatprep.subr.mxu0 0.0
    %1550 = vmatpush1.msra.mxu0 0.0
    %1551 = vmatprep.subr.mxu0 0.0
    %1552 = vmatpush1.msra.mxu0 0.0
    %1553 = vmatprep.subr.mxu0 0.0
    %1554 = vmatpush1.msra.mxu0 0.0
    %1555 = vmatprep.subr.mxu0 0.0
    %1556 = vmatpush1.msra.mxu0 0.0
    %1557 = vmatprep.subr.mxu0 0.0
    %1558 = vmatpush1.msra.mxu0 0.0
    %1559 = vmatprep.subr.mxu0 0.0
    %1560 = vmatpush1.msra.mxu0 0.0
    %1561 = vmatprep.subr.mxu0 0.0
    %1562 = vmatpush1.msra.mxu0 0.0
    %1563 = vmatprep.subr.mxu0 0.0
    %1564 = vmatpush1.msra.mxu0 0.0
    %1565 = vmatprep.subr.mxu0 0.0
    %1566 = vmatpush1.msra.mxu0 0.0
    %1567 = vmatprep.subr.mxu0 0.0
    %1568 = vmatpush1.msra.mxu0 0.0
    %1569 = vmatprep.subr.mxu0 0.0
    %1570 = vmatpush1.msra.mxu0 0.0
    %1571 = vmatprep.subr.mxu0 0.0
    %1572 = vmatpush1.msra.mxu0 0.0
    %1573 = vmatprep.subr.mxu0 0.0
    %1574 = vmatpush1.msra.mxu0 0.0
    %1575 = vmatprep.subr.mxu0 0.0
    %1576 = vmatpush1.msra.mxu0 0.0
    %1577 = vmatprep.subr.mxu0 0.0
    %1578 = vmatpush1.msra.mxu0 0.0
    %1579 = vmatprep.subr.mxu0 0.0
    %1580 = vmatpush1.msra.mxu0 0.0
    %1581 = vmatprep.subr.mxu0 0.0
    %1582 = vmatpush1.msra.mxu0 0.0
    %1583 = vmatprep.subr.mxu0 0.0
    %1584 = vmatpush1.msra.mxu0 0.0
    %1585 = vmatprep.subr.mxu0 0.0
    %1586 = vmatpush1.msra.mxu0 0.0
    %1587 = vmatprep.mubr.f32.mxu0 0.0
    %1588 = vmatmul.mubr.f32.gmra.mrb[0].mxu0 %v640
    %v1589 = vpop.f32.mrb[0].mxu0
    %v1590 = vadd.f32 %v1495, %v1589
    %v1591 = vpop.f32.mrb[0].mxu0
    %1592 = vmatprep.mubr.f32.mxu0 0.0
    %1593 = vmatmul.mubr.f32.gmra.mrb[0].mxu0 %v643
    %v1594 = vpop.f32.mrb[0].mxu0
    %v1595 = vadd.f32 %v1500, %v1594
    %v1596 = vpop.f32.mrb[0].mxu0
    %1597 = vmatprep.mubr.f32.mxu0 0.0
    %1598 = vmatmul.mubr.f32.gmra.mrb[0].mxu0 %v646
    %v1599 = vpop.f32.mrb[0].mxu0
    %v1600 = vadd.f32 %v1505, %v1599
    %v1601 = vpop.f32.mrb[0].mxu0
    %1602 = vmatprep.mubr.f32.mxu0 0.0
    %1603 = vmatmul.mubr.f32.gmra.mrb[0].mxu0 %v649
    %v1604 = vpop.f32.mrb[0].mxu0
    %v1605 = vadd.f32 %v1510, %v1604
    %v1606 = vpop.f32.mrb[0].mxu0
    %1607 = vmatprep.mubr.f32.mxu0 0.0
    %1608 = vmatmul.mubr.f32.gmra.mrb[0].mxu0 %v652
    %v1609 = vpop.f32.mrb[0].mxu0
    %v1610 = vadd.f32 %v1515, %v1609
    %v1611 = vpop.f32.mrb[0].mxu0
    %1612 = vmatprep.mubr.f32.mxu0 0.0
    %1613 = vmatmul.mubr.f32.gmra.mrb[0].mxu0 %v655
    %v1614 = vpop.f32.mrb[0].mxu0
    %v1615 = vadd.f32 %v1520, %v1614
    %v1616 = vpop.f32.mrb[0].mxu0
    %1617 = vdwg.mxu0
    %v1618 = vadd.f32 %v573, %v1590
    %v1619 = vadd.f32 %v579, %v1595
    %v1620 = vadd.f32 %v585, %v1600
    %v1621 = vadd.f32 %v591, %v1605
    %v1622 = vadd.f32 %v597, %v1610
    %v1623 = vadd.f32 %v603, %v1615
    %v1624 = vlaneseq
    %v1625 = vshrl.u32 %v1624, 7
    %v1626 = vsub.s32 0, %v1625
    %v1627 = vrot.slane %v1377, %v1626
    %v1628 = vadd.f32 %v1618, %v1627
    %v1629 = vadd.f32 %v1619, %v1627
    %v1630 = vadd.f32 %v1620, %v1627
    %v1631 = vadd.f32 %v1621, %v1627
    %v1632 = vadd.f32 %v1622, %v1627
    %v1633 = vadd.f32 %v1623, %v1627
    %v1634 = vxor.u32 %v1628, 2147483648
    %v1635 = vxor.u32 %v1629, 2147483648
    %v1636 = vxor.u32 %v1630, 2147483648
    %v1637 = vxor.u32 %v1631, 2147483648
    %v1638 = vxor.u32 %v1632, 2147483648
    %v1639 = vxor.u32 %v1633, 2147483648
    %v1640 = vmul.f32 %v1634, 1.442695
    %v1641 = vpow.pop %v1640
    %v1642 = vmul.f32 %v1635, 1.442695
    %v1643 = vpow.pop %v1642
    %v1644 = vmul.f32 %v1636, 1.442695
    %v1645 = vpow.pop %v1644
    %v1646 = vmul.f32 %v1637, 1.442695
    %v1647 = vpow.pop %v1646
    %v1648 = vmul.f32 %v1638, 1.442695
    %v1649 = vpow.pop %v1648
    %v1650 = vmul.f32 %v1639, 1.442695
    %v1651 = vpow.pop %v1650
    %v1652 = vadd.f32 %v1641, 1.0
    %v1653 = vadd.f32 %v1643, 1.0
    %v1654 = vadd.f32 %v1645, 1.0
    %v1655 = vadd.f32 %v1647, 1.0
    %v1656 = vadd.f32 %v1649, 1.0
    %v1657 = vadd.f32 %v1651, 1.0
    %v1658 = vrcp.pop %v1652
    %v1659 = vmul.f32 1.0, %v1658
    %v1660 = vrcp.pop %v1653
    %v1661 = vmul.f32 1.0, %v1660
    %v1662 = vrcp.pop %v1654
    %v1663 = vmul.f32 1.0, %v1662
    %v1664 = vrcp.pop %v1655
    %v1665 = vmul.f32 1.0, %v1664
    %v1666 = vrcp.pop %v1656
    %v1667 = vmul.f32 1.0, %v1666
    %v1668 = vrcp.pop %v1657
    %v1669 = vmul.f32 1.0, %v1668
    %v1670 = vmul.f32 %v1628, %v1659
    %v1671 = vmul.f32 %v1629, %v1661
    %v1672 = vmul.f32 %v1630, %v1663
    %v1673 = vmul.f32 %v1631, %v1665
    %v1674 = vmul.f32 %v1632, %v1667
    %v1675 = vmul.f32 %v1633, %v1669
    %v1676 = vld [vmem:[#allocation10 + $0x9] sm:$0x1]
    %v1677 = vld [vmem:[#allocation10 + $0xa] sm:$0x1]
    %v1678 = vld [vmem:[#allocation10 + $0xb] sm:$0x1]
    %v1679 = vadd.f32 %v343, %v1670
    %v1680 = vadd.f32 %v348, %v1671
    %v1681 = vadd.f32 %v353, %v1672
    %v1682 = vadd.f32 %v358, %v1673
    %v1683 = vadd.f32 %v363, %v1674
    %v1684 = vadd.f32 %v368, %v1675
    %v1686 = vsel %vm813, %v134, 0
    %1688 = vmatprep.subr.mxu0 0.0
    %1689 = vmatpush1.msra.mxu0 %v1679
    %1690 = vmatprep.subr.mxu0 0.0
    %1691 = vmatpush1.msra.mxu0 %v1680
    %1692 = vmatprep.subr.mxu0 0.0
    %1693 = vmatpush1.msra.mxu0 %v1681
    %1694 = vmatprep.subr.mxu0 0.0
    %1695 = vmatpush1.msra.mxu0 %v1682
    %1696 = vmatprep.subr.mxu0 0.0
    %1697 = vmatpush1.msra.mxu0 %v1683
    %1698 = vmatprep.subr.mxu0 0.0
    %1699 = vmatpush1.msra.mxu0 %v1684
    %1700 = vmatprep.subr.mxu0 0.0
    %1701 = vmatpush1.msra.mxu0 0.0
    %1702 = vmatprep.subr.mxu0 0.0
    %1703 = vmatpush1.msra.mxu0 0.0
    %1704 = vmatprep.subr.mxu0 0.0
    %1705 = vmatpush1.msra.mxu0 0.0
    %1706 = vmatprep.subr.mxu0 0.0
    %1707 = vmatpush1.msra.mxu0 0.0
    %1708 = vmatprep.subr.mxu0 0.0
    %1709 = vmatpush1.msra.mxu0 0.0
    %1710 = vmatprep.subr.mxu0 0.0
    %1711 = vmatpush1.msra.mxu0 0.0
    %1712 = vmatprep.subr.mxu0 0.0
    %1713 = vmatpush1.msra.mxu0 0.0
    %1714 = vmatprep.subr.mxu0 0.0
    %1715 = vmatpush1.msra.mxu0 0.0
    %1716 = vmatprep.subr.mxu0 0.0
    %1717 = vmatpush1.msra.mxu0 0.0
    %1718 = vmatprep.subr.mxu0 0.0
    %1719 = vmatpush1.msra.mxu0 0.0
    %1720 = vmatprep.subr.mxu0 0.0
    %1721 = vmatpush1.msra.mxu0 0.0
    %1722 = vmatprep.subr.mxu0 0.0
    %1723 = vmatpush1.msra.mxu0 0.0
    %1724 = vmatprep.subr.mxu0 0.0
    %1725 = vmatpush1.msra.mxu0 0.0
    %1726 = vmatprep.subr.mxu0 0.0
    %1727 = vmatpush1.msra.mxu0 0.0
    %1728 = vmatprep.subr.mxu0 0.0
    %1729 = vmatpush1.msra.mxu0 0.0
    %1730 = vmatprep.subr.mxu0 0.0
    %1731 = vmatpush1.msra.mxu0 0.0
    %1732 = vmatprep.subr.mxu0 0.0
    %1733 = vmatpush1.msra.mxu0 0.0
    %1734 = vmatprep.subr.mxu0 0.0
    %1735 = vmatpush1.msra.mxu0 0.0
    %1736 = vmatprep.subr.mxu0 0.0
    %1737 = vmatpush1.msra.mxu0 0.0
    %1738 = vmatprep.subr.mxu0 0.0
    %1739 = vmatpush1.msra.mxu0 0.0
    %1740 = vmatprep.subr.mxu0 0.0
    %1741 = vmatpush1.msra.mxu0 0.0
    %1742 = vmatprep.subr.mxu0 0.0
    %1743 = vmatpush1.msra.mxu0 0.0
    %1744 = vmatprep.subr.mxu0 0.0
    %1745 = vmatpush1.msra.mxu0 0.0
    %1746 = vmatprep.subr.mxu0 0.0
    %1747 = vmatpush1.msra.mxu0 0.0
    %1748 = vmatprep.subr.mxu0 0.0
    %1749 = vmatpush1.msra.mxu0 0.0
    %1750 = vmatprep.subr.mxu0 0.0
    %1751 = vmatpush1.msra.mxu0 0.0
    %1752 = vmatprep.mubr.f32.mxu0 0.0
    %1753 = vmatmul.mubr.f32.gmra.mrb[0].mxu0 %v1686
    %v1754 = vpop.f32.mrb[0].mxu0
    %v1755 = vadd.f32 0.0, %v1754
    %v1756 = vpop.f32.mrb[0].mxu0
    %1757 = vdwg.mxu0
    %v1758 = vrcp.pop %v144
    %v1759 = vmul.f32 %v1755, %v1758
    %v1760 = vmul.f32 %v1679, %v1679
    %v1761 = vmul.f32 %v1680, %v1680
    %v1762 = vmul.f32 %v1681, %v1681
    %v1763 = vmul.f32 %v1682, %v1682
    %v1764 = vmul.f32 %v1683, %v1683
    %v1765 = vmul.f32 %v1684, %v1684
    %1766 = vmatprep.subr.mxu0 0.0
    %1767 = vmatpush1.msra.mxu0 %v1760
    %1768 = vmatprep.subr.mxu0 0.0
    %1769 = vmatpush1.msra.mxu0 %v1761
    %1770 = vmatprep.subr.mxu0 0.0
    %1771 = vmatpush1.msra.mxu0 %v1762
    %1772 = vmatprep.subr.mxu0 0.0
    %1773 = vmatpush1.msra.mxu0 %v1763
    %1774 = vmatprep.subr.mxu0 0.0
    %1775 = vmatpush1.msra.mxu0 %v1764
    %1776 = vmatprep.subr.mxu0 0.0
    %1777 = vmatpush1.msra.mxu0 %v1765
    %1778 = vmatprep.subr.mxu0 0.0
    %1779 = vmatpush1.msra.mxu0 0.0
    %1780 = vmatprep.subr.mxu0 0.0
    %1781 = vmatpush1.msra.mxu0 0.0
    %1782 = vmatprep.subr.mxu0 0.0
    %1783 = vmatpush1.msra.mxu0 0.0
    %1784 = vmatprep.subr.mxu0 0.0
    %1785 = vmatpush1.msra.mxu0 0.0
    %1786 = vmatprep.subr.mxu0 0.0
    %1787 = vmatpush1.msra.mxu0 0.0
    %1788 = vmatprep.subr.mxu0 0.0
    %1789 = vmatpush1.msra.mxu0 0.0
    %1790 = vmatprep.subr.mxu0 0.0
    %1791 = vmatpush1.msra.mxu0 0.0
    %1792 = vmatprep.subr.mxu0 0.0
    %1793 = vmatpush1.msra.mxu0 0.0
    %1794 = vmatprep.subr.mxu0 0.0
    %1795 = vmatpush1.msra.mxu0 0.0
    %1796 = vmatprep.subr.mxu0 0.0
    %1797 = vmatpush1.msra.mxu0 0.0
    %1798 = vmatprep.subr.mxu0 0.0
    %1799 = vmatpush1.msra.mxu0 0.0
    %1800 = vmatprep.subr.mxu0 0.0
    %1801 = vmatpush1.msra.mxu0 0.0
    %1802 = vmatprep.subr.mxu0 0.0
    %1803 = vmatpush1.msra.mxu0 0.0
    %1804 = vmatprep.subr.mxu0 0.0
    %1805 = vmatpush1.msra.mxu0 0.0
    %1806 = vmatprep.subr.mxu0 0.0
    %1807 = vmatpush1.msra.mxu0 0.0
    %1808 = vmatprep.subr.mxu0 0.0
    %1809 = vmatpush1.msra.mxu0 0.0
    %1810 = vmatprep.subr.mxu0 0.0
    %1811 = vmatpush1.msra.mxu0 0.0
    %1812 = vmatprep.subr.mxu0 0.0
    %1813 = vmatpush1.msra.mxu0 0.0
    %1814 = vmatprep.subr.mxu0 0.0
    %1815 = vmatpush1.msra.mxu0 0.0
    %1816 = vmatprep.subr.mxu0 0.0
    %1817 = vmatpush1.msra.mxu0 0.0
    %1818 = vmatprep.subr.mxu0 0.0
    %1819 = vmatpush1.msra.mxu0 0.0
    %1820 = vmatprep.subr.mxu0 0.0
    %1821 = vmatpush1.msra.mxu0 0.0
    %1822 = vmatprep.subr.mxu0 0.0
    %1823 = vmatpush1.msra.mxu0 0.0
    %1824 = vmatprep.subr.mxu0 0.0
    %1825 = vmatpush1.msra.mxu0 0.0
    %1826 = vmatprep.subr.mxu0 0.0
    %1827 = vmatpush1.msra.mxu0 0.0
    %1828 = vmatprep.subr.mxu0 0.0
    %1829 = vmatpush1.msra.mxu0 0.0
    %1830 = vmatprep.mubr.f32.mxu0 0.0
    %1831 = vmatmul.mubr.f32.gmra.mrb[0].mxu0 %v1686
    %v1832 = vpop.f32.mrb[0].mxu0
    %v1833 = vadd.f32 0.0, %v1832
    %v1834 = vpop.f32.mrb[0].mxu0
    %1835 = vdwg.mxu0
    %v1836 = vmul.f32 %v1833, %v1758
    %1837 = vxpose.xlu0.b32.start [1/16] %v134, 128
    %1838 = vxpose.xlu0.b32.cont [2/16] 0.0, 128
    %1839 = vxpose.xlu0.b32.cont [3/16] 0.0, 128
    %1840 = vxpose.xlu0.b32.cont [4/16] 0.0, 128
    %1841 = vxpose.xlu0.b32.cont [5/16] 0.0, 128
    %1842 = vxpose.xlu0.b32.cont [6/16] 0.0, 128
    %1843 = vxpose.xlu0.b32.cont [7/16] 0.0, 128
    %1844 = vxpose.xlu0.b32.cont [8/16] 0.0, 128
    %1845 = vxpose.xlu0.b32.cont [9/16] 0.0, 128
    %1846 = vxpose.xlu0.b32.cont [10/16] 0.0, 128
    %1847 = vxpose.xlu0.b32.cont [11/16] 0.0, 128
    %1848 = vxpose.xlu0.b32.cont [12/16] 0.0, 128
    %1849 = vxpose.xlu0.b32.cont [13/16] 0.0, 128
    %1850 = vxpose.xlu0.b32.cont [14/16] 0.0, 128
    %1851 = vxpose.xlu0.b32.cont [15/16] 0.0, 128
    %1852 = vxpose.xlu0.b32.end [16/16] 0.0, 128
    %v1853 = vpop.trf.xlu0
    %v1854 = vpop.trf.xlu0
    %v1855 = vpop.trf.xlu0
    %v1856 = vpop.trf.xlu0
    %v1857 = vpop.trf.xlu0
    %v1858 = vpop.trf.xlu0
    %v1859 = vpop.trf.xlu0
    %v1860 = vpop.trf.xlu0
    %v1861 = vpop.trf.xlu0
    %v1862 = vpop.trf.xlu0
    %v1863 = vpop.trf.xlu0
    %v1864 = vpop.trf.xlu0
    %v1865 = vpop.trf.xlu0
    %v1866 = vpop.trf.xlu0
    %v1867 = vpop.trf.xlu0
    %v1868 = vpop.trf.xlu0
    %v1870 = vsel %vm1111, %v1853, 0
    %v1873 = vsel %vm1111, %v1854, 0
    %v1876 = vsel %vm1111, %v1855, 0
    %v1879 = vsel %vm1111, %v1856, 0
    %v1882 = vsel %vm1111, %v1857, 0
    %v1885 = vsel %vm1111, %v1858, 0
    %v1888 = vsel %vm1121, %v1759, 0
    %v1891 = vsel %vm1121, %v1836, 0
    %1893 = vmatprep.subr.mxu0 %v1891
    %1894 = vmatpush1.msra.mxu0 %v1888
    %1895 = vmatprep.subr.mxu0 0.0
    %1896 = vmatpush1.msra.mxu0 0.0
    %1897 = vmatprep.subr.mxu0 0.0
    %1898 = vmatpush1.msra.mxu0 0.0
    %1899 = vmatprep.subr.mxu0 0.0
    %1900 = vmatpush1.msra.mxu0 0.0
    %1901 = vmatprep.subr.mxu0 0.0
    %1902 = vmatpush1.msra.mxu0 0.0
    %1903 = vmatprep.subr.mxu0 0.0
    %1904 = vmatpush1.msra.mxu0 0.0
    %1905 = vmatprep.subr.mxu0 0.0
    %1906 = vmatpush1.msra.mxu0 0.0
    %1907 = vmatprep.subr.mxu0 0.0
    %1908 = vmatpush1.msra.mxu0 0.0
    %1909 = vmatprep.subr.mxu0 0.0
    %1910 = vmatpush1.msra.mxu0 0.0
    %1911 = vmatprep.subr.mxu0 0.0
    %1912 = vmatpush1.msra.mxu0 0.0
    %1913 = vmatprep.subr.mxu0 0.0
    %1914 = vmatpush1.msra.mxu0 0.0
    %1915 = vmatprep.subr.mxu0 0.0
    %1916 = vmatpush1.msra.mxu0 0.0
    %1917 = vmatprep.subr.mxu0 0.0
    %1918 = vmatpush1.msra.mxu0 0.0
    %1919 = vmatprep.subr.mxu0 0.0
    %1920 = vmatpush1.msra.mxu0 0.0
    %1921 = vmatprep.subr.mxu0 0.0
    %1922 = vmatpush1.msra.mxu0 0.0
    %1923 = vmatprep.subr.mxu0 0.0
    %1924 = vmatpush1.msra.mxu0 0.0
    %1925 = vmatprep.subr.mxu0 0.0
    %1926 = vmatpush1.msra.mxu0 0.0
    %1927 = vmatprep.subr.mxu0 0.0
    %1928 = vmatpush1.msra.mxu0 0.0
    %1929 = vmatprep.subr.mxu0 0.0
    %1930 = vmatpush1.msra.mxu0 0.0
    %1931 = vmatprep.subr.mxu0 0.0
    %1932 = vmatpush1.msra.mxu0 0.0
    %1933 = vmatprep.subr.mxu0 0.0
    %1934 = vmatpush1.msra.mxu0 0.0
    %1935 = vmatprep.subr.mxu0 0.0
    %1936 = vmatpush1.msra.mxu0 0.0
    %1937 = vmatprep.subr.mxu0 0.0
    %1938 = vmatpush1.msra.mxu0 0.0
    %1939 = vmatprep.subr.mxu0 0.0
    %1940 = vmatpush1.msra.mxu0 0.0
    %1941 = vmatprep.subr.mxu0 0.0
    %1942 = vmatpush1.msra.mxu0 0.0
    %1943 = vmatprep.subr.mxu0 0.0
    %1944 = vmatpush1.msra.mxu0 0.0
    %1945 = vmatprep.subr.mxu0 0.0
    %1946 = vmatpush1.msra.mxu0 0.0
    %1947 = vmatprep.subr.mxu0 0.0
    %1948 = vmatpush1.msra.mxu0 0.0
    %1949 = vmatprep.subr.mxu0 0.0
    %1950 = vmatpush1.msra.mxu0 0.0
    %1951 = vmatprep.subr.mxu0 0.0
    %1952 = vmatpush1.msra.mxu0 0.0
    %1953 = vmatprep.subr.mxu0 0.0
    %1954 = vmatpush1.msra.mxu0 0.0
    %1955 = vmatprep.subr.mxu0 0.0
    %1956 = vmatpush1.msra.mxu0 0.0
    %1957 = vmatprep.mubr.f32.mxu0 0.0
    %1958 = vmatmul.mubr.f32.gmra.mrb[0].mxu0 %v1870
    %v1959 = vpop.f32.mrb[0].mxu0
    %v1960 = vadd.f32 0.0, %v1959
    %v1961 = vpop.f32.mrb[0].mxu0
    %v1962 = vadd.f32 0.0, %v1961
    %1963 = vmatprep.mubr.f32.mxu0 0.0
    %1964 = vmatmul.mubr.f32.gmra.mrb[0].mxu0 %v1873
    %v1965 = vpop.f32.mrb[0].mxu0
    %v1966 = vadd.f32 0.0, %v1965
    %v1967 = vpop.f32.mrb[0].mxu0
    %v1968 = vadd.f32 0.0, %v1967
    %1969 = vmatprep.mubr.f32.mxu0 0.0
    %1970 = vmatmul.mubr.f32.gmra.mrb[0].mxu0 %v1876
    %v1971 = vpop.f32.mrb[0].mxu0
    %v1972 = vadd.f32 0.0, %v1971
    %v1973 = vpop.f32.mrb[0].mxu0
    %v1974 = vadd.f32 0.0, %v1973
    %1975 = vmatprep.mubr.f32.mxu0 0.0
    %1976 = vmatmul.mubr.f32.gmra.mrb[0].mxu0 %v1879
    %v1977 = vpop.f32.mrb[0].mxu0
    %v1978 = vadd.f32 0.0, %v1977
    %v1979 = vpop.f32.mrb[0].mxu0
    %v1980 = vadd.f32 0.0, %v1979
    %1981 = vmatprep.mubr.f32.mxu0 0.0
    %1982 = vmatmul.mubr.f32.gmra.mrb[0].mxu0 %v1882
    %v1983 = vpop.f32.mrb[0].mxu0
    %v1984 = vadd.f32 0.0, %v1983
    %v1985 = vpop.f32.mrb[0].mxu0
    %v1986 = vadd.f32 0.0, %v1985
    %1987 = vmatprep.mubr.f32.mxu0 0.0
    %1988 = vmatmul.mubr.f32.gmra.mrb[0].mxu0 %v1885
    %v1989 = vpop.f32.mrb[0].mxu0
    %v1990 = vadd.f32 0.0, %v1989
    %v1991 = vpop.f32.mrb[0].mxu0
    %v1992 = vadd.f32 0.0, %v1991
    %1993 = vdwg.mxu0
    %v1994 = vlaneseq
    %v1995 = vshrl.u32 %v1994, 7
    %v1996 = vsub.s32 0, %v1995
    %v1997 = vrot.slane %v1678, %v1996
    %v1998 = vmul.f32 %v1997, %v1960
    %v1999 = vmul.f32 %v1997, %v1966
    %v2000 = vmul.f32 %v1997, %v1972
    %v2001 = vmul.f32 %v1997, %v1978
    %v2002 = vmul.f32 %v1997, %v1984
    %v2003 = vmul.f32 %v1997, %v1990
    %v2004 = vsub.f32 %v1679, %v1998
    %v2005 = vsub.f32 %v1680, %v1999
    %v2006 = vsub.f32 %v1681, %v2000
    %v2007 = vsub.f32 %v1682, %v2001
    %v2008 = vsub.f32 %v1683, %v2002
    %v2009 = vsub.f32 %v1684, %v2003
    %v2010 = vsub.f32 2.0, %v1678
    %v2011 = vmul.f32 %v1678, %v2010
    %v2012 = vmul.f32 %v1960, %v1960
    %v2013 = vmul.f32 %v1966, %v1966
    %v2014 = vmul.f32 %v1972, %v1972
    %v2015 = vmul.f32 %v1978, %v1978
    %v2016 = vmul.f32 %v1984, %v1984
    %v2017 = vmul.f32 %v1990, %v1990
    %v2018 = vlaneseq
    %v2019 = vshrl.u32 %v2018, 7
    %v2020 = vsub.s32 0, %v2019
    %v2021 = vrot.slane %v2011, %v2020
    %v2022 = vmul.f32 %v2021, %v2012
    %v2023 = vmul.f32 %v2021, %v2013
    %v2024 = vmul.f32 %v2021, %v2014
    %v2025 = vmul.f32 %v2021, %v2015
    %v2026 = vmul.f32 %v2021, %v2016
    %v2027 = vmul.f32 %v2021, %v2017
    %v2028 = vsub.f32 %v1962, %v2022
    %v2029 = vsub.f32 %v1968, %v2023
    %v2030 = vsub.f32 %v1974, %v2024
    %v2031 = vsub.f32 %v1980, %v2025
    %v2032 = vsub.f32 %v1986, %v2026
    %v2033 = vsub.f32 %v1992, %v2027
    %v2034 = vmax.f32 %v2028, 0.0
    %v2035 = vmax.f32 %v2029, 0.0
    %v2036 = vmax.f32 %v2030, 0.0
    %v2037 = vmax.f32 %v2031, 0.0
    %v2038 = vmax.f32 %v2032, 0.0
    %v2039 = vmax.f32 %v2033, 0.0
    %v2040 = vlaneseq
    %v2041 = vshrl.u32 %v2040, 7
    %v2042 = vsub.s32 0, %v2041
    %v2043 = vrot.slane %v1676, %v2042
    %v2044 = vmul.f32 %v2043, %v2004
    %v2045 = vmul.f32 %v2043, %v2005
    %v2046 = vmul.f32 %v2043, %v2006
    %v2047 = vmul.f32 %v2043, %v2007
    %v2048 = vmul.f32 %v2043, %v2008
    %v2049 = vmul.f32 %v2043, %v2009
    %v2050 = vadd.f32 %v2034, 1e-05
    %v2051 = vadd.f32 %v2035, 1e-05
    %v2052 = vadd.f32 %v2036, 1e-05
    %v2053 = vadd.f32 %v2037, 1e-05
    %v2054 = vadd.f32 %v2038, 1e-05
    %v2055 = vadd.f32 %v2039, 1e-05
    %v2056 = vrsqrt.pop %v2050
    %v2057 = vrsqrt.pop %v2051
    %v2058 = vrsqrt.pop %v2052
    %v2059 = vrsqrt.pop %v2053
    %v2060 = vrsqrt.pop %v2054
    %v2061 = vrsqrt.pop %v2055
    %v2062 = vmul.f32 %v2044, %v2056
    %v2063 = vmul.f32 %v2045, %v2057
    %v2064 = vmul.f32 %v2046, %v2058
    %v2065 = vmul.f32 %v2047, %v2059
    %v2066 = vmul.f32 %v2048, %v2060
    %v2067 = vmul.f32 %v2049, %v2061
    %v2068 = vlaneseq
    %v2069 = vshrl.u32 %v2068, 7
    %v2070 = vsub.s32 0, %v2069
    %v2071 = vrot.slane %v1677, %v2070
    %v2072 = vadd.f32 %v2062, %v2071
    %v2073 = vadd.f32 %v2063, %v2071
    %v2074 = vadd.f32 %v2064, %v2071
    %v2075 = vadd.f32 %v2065, %v2071
    %v2076 = vadd.f32 %v2066, %v2071
    %v2077 = vadd.f32 %v2067, %v2071
    %v2078 = vld [vmem:[#allocation8 + $0x330] sm:$0xff]
    %v2079 = vld [vmem:[#allocation8 + $0x340] sm:$0xff]
    %v2080 = vld [vmem:[#allocation8 + $0x350] sm:$0xff]
    %v2081 = vld [vmem:[#allocation8 + $0x360] sm:$0xff]
    %v2082 = vld [vmem:[#allocation8 + $0x370] sm:$0xff]
    %v2083 = vld [vmem:[#allocation8 + $0x380] sm:$0xff]
    %v2084 = vld [vmem:[#allocation8 + $0x390] sm:$0xff]
    %v2085 = vld [vmem:[#allocation8 + $0x3a0] sm:$0xff]
    %v2086 = vld [vmem:[#allocation8 + $0x3b0] sm:$0xff]
    %v2087 = vld [vmem:[#allocation8 + $0x3c0] sm:$0xff]
    %v2088 = vld [vmem:[#allocation8 + $0x3d0] sm:$0xff]
    %v2089 = vld [vmem:[#allocation8 + $0x3e0] sm:$0xff]
    %v2090 = vld [vmem:[#allocation8 + $0x3f0] sm:$0xff]
    %v2091 = vld [vmem:[#allocation8 + $0x400] sm:$0xff]
    %v2092 = vld [vmem:[#allocation8 + $0x410] sm:$0xff]
    %v2093 = vld [vmem:[#allocation8 + $0x420] sm:$0xff]
    %v2094 = vld [vmem:[#allocation10 + $0xc] sm:$0x1]
    %v2095 = vlaneseq
    %v2096 = vshrl.u32 %v2095, 7
    %v2097 = vsub.s32 0, %v2096
    %v2098 = vrot.slane %v2094, %v2097
    %2099 = vmatprep.subr.mxu0 0.0
    %2100 = vmatpush1.msra.mxu0 %v2078
    %2101 = vmatprep.subr.mxu0 0.0
    %2102 = vmatpush1.msra.mxu0 %v2079
    %2103 = vmatprep.subr.mxu0 0.0
    %2104 = vmatpush1.msra.mxu0 %v2080
    %2105 = vmatprep.subr.mxu0 0.0
    %2106 = vmatpush1.msra.mxu0 %v2081
    %2107 = vmatprep.subr.mxu0 0.0
    %2108 = vmatpush1.msra.mxu0 %v2082
    %2109 = vmatprep.subr.mxu0 0.0
    %2110 = vmatpush1.msra.mxu0 %v2083
    %2111 = vmatprep.subr.mxu0 0.0
    %2112 = vmatpush1.msra.mxu0 %v2084
    %2113 = vmatprep.subr.mxu0 0.0
    %2114 = vmatpush1.msra.mxu0 %v2085
    %2115 = vmatprep.subr.mxu0 0.0
    %2116 = vmatpush1.msra.mxu0 %v2086
    %2117 = vmatprep.subr.mxu0 0.0
    %2118 = vmatpush1.msra.mxu0 %v2087
    %2119 = vmatprep.subr.mxu0 0.0
    %2120 = vmatpush1.msra.mxu0 %v2088
    %2121 = vmatprep.subr.mxu0 0.0
    %2122 = vmatpush1.msra.mxu0 %v2089
    %2123 = vmatprep.subr.mxu0 0.0
    %2124 = vmatpush1.msra.mxu0 %v2090
    %2125 = vmatprep.subr.mxu0 0.0
    %2126 = vmatpush1.msra.mxu0 %v2091
    %2127 = vmatprep.subr.mxu0 0.0
    %2128 = vmatpush1.msra.mxu0 %v2092
    %2129 = vmatprep.subr.mxu0 0.0
    %2130 = vmatpush1.msra.mxu0 %v2093
    %2131 = vmatprep.subr.mxu0 0.0
    %2132 = vmatpush1.msra.mxu0 0.0
    %2133 = vmatprep.subr.mxu0 0.0
    %2134 = vmatpush1.msra.mxu0 0.0
    %2135 = vmatprep.subr.mxu0 0.0
    %2136 = vmatpush1.msra.mxu0 0.0
    %2137 = vmatprep.subr.mxu0 0.0
    %2138 = vmatpush1.msra.mxu0 0.0
    %2139 = vmatprep.subr.mxu0 0.0
    %2140 = vmatpush1.msra.mxu0 0.0
    %2141 = vmatprep.subr.mxu0 0.0
    %2142 = vmatpush1.msra.mxu0 0.0
    %2143 = vmatprep.subr.mxu0 0.0
    %2144 = vmatpush1.msra.mxu0 0.0
    %2145 = vmatprep.subr.mxu0 0.0
    %2146 = vmatpush1.msra.mxu0 0.0
    %2147 = vmatprep.subr.mxu0 0.0
    %2148 = vmatpush1.msra.mxu0 0.0
    %2149 = vmatprep.subr.mxu0 0.0
    %2150 = vmatpush1.msra.mxu0 0.0
    %2151 = vmatprep.subr.mxu0 0.0
    %2152 = vmatpush1.msra.mxu0 0.0
    %2153 = vmatprep.subr.mxu0 0.0
    %2154 = vmatpush1.msra.mxu0 0.0
    %2155 = vmatprep.subr.mxu0 0.0
    %2156 = vmatpush1.msra.mxu0 0.0
    %2157 = vmatprep.subr.mxu0 0.0
    %2158 = vmatpush1.msra.mxu0 0.0
    %2159 = vmatprep.subr.mxu0 0.0
    %2160 = vmatpush1.msra.mxu0 0.0
    %2161 = vmatprep.subr.mxu0 0.0
    %2162 = vmatpush1.msra.mxu0 0.0
    %2163 = vmatprep.mubr.f32.mxu0 0.0
    %2164 = vmatmul.mubr.f32.gmra.mrb[0].mxu0 %v1259
    %v2165 = vpop.f32.mrb[0].mxu0
    %v2166 = vadd.f32 %v2098, %v2165
    %v2167 = vpop.f32.mrb[0].mxu0
    %2168 = vmatprep.mubr.f32.mxu0 0.0
    %2169 = vmatmul.mubr.f32.gmra.mrb[0].mxu0 %v1260
    %v2170 = vpop.f32.mrb[0].mxu0
    %v2171 = vadd.f32 %v2098, %v2170
    %v2172 = vpop.f32.mrb[0].mxu0
    %2173 = vmatprep.mubr.f32.mxu0 0.0
    %2174 = vmatmul.mubr.f32.gmra.mrb[0].mxu0 %v1261
    %v2175 = vpop.f32.mrb[0].mxu0
    %v2176 = vadd.f32 %v2098, %v2175
    %v2177 = vpop.f32.mrb[0].mxu0
    %2178 = vdwg.mxu0
    %v2179 = vld [vmem:[#allocation8 + $0x430] sm:$0xff]
    %v2180 = vld [vmem:[#allocation8 + $0x438] sm:$0xff]
    %v2181 = vld [vmem:[#allocation8 + $0x440] sm:$0xff]
    %v2182 = vld [vmem:[#allocation8 + $0x448] sm:$0xff]
    %v2183 = vld [vmem:[#allocation8 + $0x450] sm:$0xff]
    %v2184 = vld [vmem:[#allocation8 + $0x458] sm:$0xff]
    %v2185 = vld [vmem:[#allocation8 + $0x460] sm:$0xff]
    %v2186 = vld [vmem:[#allocation8 + $0x468] sm:$0xff]
    %v2187 = vld [vmem:[#allocation8 + $0x470] sm:$0xff]
    %v2188 = vld [vmem:[#allocation8 + $0x478] sm:$0xff]
    %v2189 = vld [vmem:[#allocation8 + $0x480] sm:$0xff]
    %v2190 = vld [vmem:[#allocation8 + $0x488] sm:$0xff]
    %v2191 = vld [vmem:[#allocation8 + $0x490] sm:$0xff]
    %v2192 = vld [vmem:[#allocation8 + $0x498] sm:$0xff]
    %v2193 = vld [vmem:[#allocation8 + $0x4a0] sm:$0xff]
    %v2194 = vld [vmem:[#allocation8 + $0x4a8] sm:$0xff]
    %v2195 = vld [vmem:[#allocation8 + $0x4b0] sm:$0xff]
    %v2196 = vld [vmem:[#allocation8 + $0x4b8] sm:$0xff]
    %v2197 = vld [vmem:[#allocation8 + $0x4c0] sm:$0xff]
    %v2198 = vld [vmem:[#allocation8 + $0x4c8] sm:$0xff]
    %v2199 = vld [vmem:[#allocation8 + $0x4d0] sm:$0xff]
    %v2200 = vld [vmem:[#allocation8 + $0x4d8] sm:$0xff]
    %v2201 = vld [vmem:[#allocation8 + $0x4e0] sm:$0xff]
    %v2202 = vld [vmem:[#allocation8 + $0x4e8] sm:$0xff]
    %v2203 = vld [vmem:[#allocation8 + $0x4f0] sm:$0xff]
    %v2204 = vld [vmem:[#allocation8 + $0x4f8] sm:$0xff]
    %v2205 = vld [vmem:[#allocation8 + $0x500] sm:$0xff]
    %v2206 = vld [vmem:[#allocation8 + $0x508] sm:$0xff]
    %v2207 = vld [vmem:[#allocation8 + $0x510] sm:$0xff]
    %v2208 = vld [vmem:[#allocation8 + $0x518] sm:$0xff]
    %v2209 = vld [vmem:[#allocation8 + $0x520] sm:$0xff]
    %v2210 = vld [vmem:[#allocation8 + $0x528] sm:$0xff]
    %2211 = vmatprep.subr.mxu0 %v2180
    %2212 = vmatpush1.msra.mxu0 %v2179
    %2213 = vmatprep.subr.mxu0 %v2182
    %2214 = vmatpush1.msra.mxu0 %v2181
    %2215 = vmatprep.subr.mxu0 %v2184
    %2216 = vmatpush1.msra.mxu0 %v2183
    %2217 = vmatprep.subr.mxu0 %v2186
    %2218 = vmatpush1.msra.mxu0 %v2185
    %2219 = vmatprep.subr.mxu0 %v2188
    %2220 = vmatpush1.msra.mxu0 %v2187
    %2221 = vmatprep.subr.mxu0 %v2190
    %2222 = vmatpush1.msra.mxu0 %v2189
    %2223 = vmatprep.subr.mxu0 %v2192
    %2224 = vmatpush1.msra.mxu0 %v2191
    %2225 = vmatprep.subr.mxu0 %v2194
    %2226 = vmatpush1.msra.mxu0 %v2193
    %2227 = vmatprep.subr.mxu0 %v2196
    %2228 = vmatpush1.msra.mxu0 %v2195
    %2229 = vmatprep.subr.mxu0 %v2198
    %2230 = vmatpush1.msra.mxu0 %v2197
    %2231 = vmatprep.subr.mxu0 %v2200
    %2232 = vmatpush1.msra.mxu0 %v2199
    %2233 = vmatprep.subr.mxu0 %v2202
    %2234 = vmatpush1.msra.mxu0 %v2201
    %2235 = vmatprep.subr.mxu0 %v2204
    %2236 = vmatpush1.msra.mxu0 %v2203
    %2237 = vmatprep.subr.mxu0 %v2206
    %2238 = vmatpush1.msra.mxu0 %v2205
    %2239 = vmatprep.subr.mxu0 %v2208
    %2240 = vmatpush1.msra.mxu0 %v2207
    %2241 = vmatprep.subr.mxu0 %v2210
    %2242 = vmatpush1.msra.mxu0 %v2209
    %2243 = vmatprep.subr.mxu0 0.0
    %2244 = vmatpush1.msra.mxu0 0.0
    %2245 = vmatprep.subr.mxu0 0.0
    %2246 = vmatpush1.msra.mxu0 0.0
    %2247 = vmatprep.subr.mxu0 0.0
    %2248 = vmatpush1.msra.mxu0 0.0
    %2249 = vmatprep.subr.mxu0 0.0
    %2250 = vmatpush1.msra.mxu0 0.0
    %2251 = vmatprep.subr.mxu0 0.0
    %2252 = vmatpush1.msra.mxu0 0.0
    %2253 = vmatprep.subr.mxu0 0.0
    %2254 = vmatpush1.msra.mxu0 0.0
    %2255 = vmatprep.subr.mxu0 0.0
    %2256 = vmatpush1.msra.mxu0 0.0
    %2257 = vmatprep.subr.mxu0 0.0
    %2258 = vmatpush1.msra.mxu0 0.0
    %2259 = vmatprep.subr.mxu0 0.0
    %2260 = vmatpush1.msra.mxu0 0.0
    %2261 = vmatprep.subr.mxu0 0.0
    %2262 = vmatpush1.msra.mxu0 0.0
    %2263 = vmatprep.subr.mxu0 0.0
    %2264 = vmatpush1.msra.mxu0 0.0
    %2265 = vmatprep.subr.mxu0 0.0
    %2266 = vmatpush1.msra.mxu0 0.0
    %2267 = vmatprep.subr.mxu0 0.0
    %2268 = vmatpush1.msra.mxu0 0.0
    %2269 = vmatprep.subr.mxu0 0.0
    %2270 = vmatpush1.msra.mxu0 0.0
    %2271 = vmatprep.subr.mxu0 0.0
    %2272 = vmatpush1.msra.mxu0 0.0
    %2273 = vmatprep.subr.mxu0 0.0
    %2274 = vmatpush1.msra.mxu0 0.0
    %2275 = vmatprep.mubr.f32.mxu0 0.0
    %2276 = vmatmul.mubr.f32.gmra.mrb[0].mxu0 %v2072
    %v2277 = vpop.f32.mrb[0].mxu0
    %v2278 = vadd.f32 0.0, %v2277
    %v2279 = vpop.f32.mrb[0].mxu0
    %2280 = vmatprep.mubr.f32.mxu0 0.0
    %2281 = vmatmul.mubr.f32.gmra.mrb[0].mxu0 %v2073
    %v2282 = vpop.f32.mrb[0].mxu0
    %v2283 = vadd.f32 0.0, %v2282
    %v2284 = vpop.f32.mrb[0].mxu0
    %2285 = vmatprep.mubr.f32.mxu0 0.0
    %2286 = vmatmul.mubr.f32.gmra.mrb[0].mxu0 %v2074
    %v2287 = vpop.f32.mrb[0].mxu0
    %v2288 = vadd.f32 0.0, %v2287
    %v2289 = vpop.f32.mrb[0].mxu0
    %2290 = vmatprep.mubr.f32.mxu0 0.0
    %2291 = vmatmul.mubr.f32.gmra.mrb[0].mxu0 %v2075
    %v2292 = vpop.f32.mrb[0].mxu0
    %v2293 = vadd.f32 0.0, %v2292
    %v2294 = vpop.f32.mrb[0].mxu0
    %2295 = vmatprep.mubr.f32.mxu0 0.0
    %2296 = vmatmul.mubr.f32.gmra.mrb[0].mxu0 %v2076
    %v2297 = vpop.f32.mrb[0].mxu0
    %v2298 = vadd.f32 0.0, %v2297
    %v2299 = vpop.f32.mrb[0].mxu0
    %2300 = vmatprep.mubr.f32.mxu0 0.0
    %2301 = vmatmul.mubr.f32.gmra.mrb[0].mxu0 %v2077
    %v2302 = vpop.f32.mrb[0].mxu0
    %v2303 = vadd.f32 0.0, %v2302
    %v2304 = vpop.f32.mrb[0].mxu0
    %2305 = vdwg.mxu0
    %v2306 = vld [vmem:[#allocation10 + $0xd] sm:$0x1]
    %2307 = vmatprep.subr.mxu0 0.0
    %2308 = vmatpush1.msra.mxu0 %v2166
    %2309 = vmatprep.subr.mxu0 0.0
    %2310 = vmatpush1.msra.mxu0 %v2171
    %2311 = vmatprep.subr.mxu0 0.0
    %2312 = vmatpush1.msra.mxu0 %v2176
    %2313 = vmatprep.subr.mxu0 0.0
    %2314 = vmatpush1.msra.mxu0 0.0
    %2315 = vmatprep.subr.mxu0 0.0
    %2316 = vmatpush1.msra.mxu0 0.0
    %2317 = vmatprep.subr.mxu0 0.0
    %2318 = vmatpush1.msra.mxu0 0.0
    %2319 = vmatprep.subr.mxu0 0.0
    %2320 = vmatpush1.msra.mxu0 0.0
    %2321 = vmatprep.subr.mxu0 0.0
    %2322 = vmatpush1.msra.mxu0 0.0
    %2323 = vmatprep.subr.mxu0 0.0
    %2324 = vmatpush1.msra.mxu0 0.0
    %2325 = vmatprep.subr.mxu0 0.0
    %2326 = vmatpush1.msra.mxu0 0.0
    %2327 = vmatprep.subr.mxu0 0.0
    %2328 = vmatpush1.msra.mxu0 0.0
    %2329 = vmatprep.subr.mxu0 0.0
    %2330 = vmatpush1.msra.mxu0 0.0
    %2331 = vmatprep.subr.mxu0 0.0
    %2332 = vmatpush1.msra.mxu0 0.0
    %2333 = vmatprep.subr.mxu0 0.0
    %2334 = vmatpush1.msra.mxu0 0.0
    %2335 = vmatprep.subr.mxu0 0.0
    %2336 = vmatpush1.msra.mxu0 0.0
    %2337 = vmatprep.subr.mxu0 0.0
    %2338 = vmatpush1.msra.mxu0 0.0
    %2339 = vmatprep.subr.mxu0 0.0
    %2340 = vmatpush1.msra.mxu0 0.0
    %2341 = vmatprep.subr.mxu0 0.0
    %2342 = vmatpush1.msra.mxu0 0.0
    %2343 = vmatprep.subr.mxu0 0.0
    %2344 = vmatpush1.msra.mxu0 0.0
    %2345 = vmatprep.subr.mxu0 0.0
    %2346 = vmatpush1.msra.mxu0 0.0
    %2347 = vmatprep.subr.mxu0 0.0
    %2348 = vmatpush1.msra.mxu0 0.0
    %2349 = vmatprep.subr.mxu0 0.0
    %2350 = vmatpush1.msra.mxu0 0.0
    %2351 = vmatprep.subr.mxu0 0.0
    %2352 = vmatpush1.msra.mxu0 0.0
    %2353 = vmatprep.subr.mxu0 0.0
    %2354 = vmatpush1.msra.mxu0 0.0
    %2355 = vmatprep.subr.mxu0 0.0
    %2356 = vmatpush1.msra.mxu0 0.0
    %2357 = vmatprep.subr.mxu0 0.0
    %2358 = vmatpush1.msra.mxu0 0.0
    %2359 = vmatprep.subr.mxu0 0.0
    %2360 = vmatpush1.msra.mxu0 0.0
    %2361 = vmatprep.subr.mxu0 0.0
    %2362 = vmatpush1.msra.mxu0 0.0
    %2363 = vmatprep.subr.mxu0 0.0
    %2364 = vmatpush1.msra.mxu0 0.0
    %2365 = vmatprep.subr.mxu0 0.0
    %2366 = vmatpush1.msra.mxu0 0.0
    %2367 = vmatprep.subr.mxu0 0.0
    %2368 = vmatpush1.msra.mxu0 0.0
    %2369 = vmatprep.subr.mxu0 0.0
    %2370 = vmatpush1.msra.mxu0 0.0
    %2371 = vmatprep.mubr.f32.mxu0 0.0
    %2372 = vmatmul.mubr.f32.gmra.mrb[0].mxu0 %v640
    %v2373 = vpop.f32.mrb[0].mxu0
    %v2374 = vadd.f32 %v2278, %v2373
    %v2375 = vpop.f32.mrb[0].mxu0
    %2376 = vmatprep.mubr.f32.mxu0 0.0
    %2377 = vmatmul.mubr.f32.gmra.mrb[0].mxu0 %v643
    %v2378 = vpop.f32.mrb[0].mxu0
    %v2379 = vadd.f32 %v2283, %v2378
    %v2380 = vpop.f32.mrb[0].mxu0
    %2381 = vmatprep.mubr.f32.mxu0 0.0
    %2382 = vmatmul.mubr.f32.gmra.mrb[0].mxu0 %v646
    %v2383 = vpop.f32.mrb[0].mxu0
    %v2384 = vadd.f32 %v2288, %v2383
    %v2385 = vpop.f32.mrb[0].mxu0
    %2386 = vmatprep.mubr.f32.mxu0 0.0
    %2387 = vmatmul.mubr.f32.gmra.mrb[0].mxu0 %v649
    %v2388 = vpop.f32.mrb[0].mxu0
    %v2389 = vadd.f32 %v2293, %v2388
    %v2390 = vpop.f32.mrb[0].mxu0
    %2391 = vmatprep.mubr.f32.mxu0 0.0
    %2392 = vmatmul.mubr.f32.gmra.mrb[0].mxu0 %v652
    %v2393 = vpop.f32.mrb[0].mxu0
    %v2394 = vadd.f32 %v2298, %v2393
    %v2395 = vpop.f32.mrb[0].mxu0
    %2396 = vmatprep.mubr.f32.mxu0 0.0
    %2397 = vmatmul.mubr.f32.gmra.mrb[0].mxu0 %v655
    %v2398 = vpop.f32.mrb[0].mxu0
    %v2399 = vadd.f32 %v2303, %v2398
    %v2400 = vpop.f32.mrb[0].mxu0
    %2401 = vdwg.mxu0
    %v2402 = vlaneseq
    %v2403 = vshrl.u32 %v2402, 7
    %v2404 = vsub.s32 0, %v2403
    %v2405 = vrot.slane %v2306, %v2404
    %v2406 = vadd.f32 %v2374, %v2405
    %v2407 = vadd.f32 %v2379, %v2405
    %v2408 = vadd.f32 %v2384, %v2405
    %v2409 = vadd.f32 %v2389, %v2405
    %v2410 = vadd.f32 %v2394, %v2405
    %v2411 = vadd.f32 %v2399, %v2405
    %v2412 = vxor.u32 %v2406, 2147483648
    %v2413 = vxor.u32 %v2407, 2147483648
    %v2414 = vxor.u32 %v2408, 2147483648
    %v2415 = vxor.u32 %v2409, 2147483648
    %v2416 = vxor.u32 %v2410, 2147483648
    %v2417 = vxor.u32 %v2411, 2147483648
    %v2418 = vmul.f32 %v2412, 1.442695
    %v2419 = vpow.pop %v2418
    %v2420 = vmul.f32 %v2413, 1.442695
    %v2421 = vpow.pop %v2420
    %v2422 = vmul.f32 %v2414, 1.442695
    %v2423 = vpow.pop %v2422
    %v2424 = vmul.f32 %v2415, 1.442695
    %v2425 = vpow.pop %v2424
    %v2426 = vmul.f32 %v2416, 1.442695
    %v2427 = vpow.pop %v2426
    %v2428 = vmul.f32 %v2417, 1.442695
    %v2429 = vpow.pop %v2428
    %v2430 = vadd.f32 %v2419, 1.0
    %v2431 = vadd.f32 %v2421, 1.0
    %v2432 = vadd.f32 %v2423, 1.0
    %v2433 = vadd.f32 %v2425, 1.0
    %v2434 = vadd.f32 %v2427, 1.0
    %v2435 = vadd.f32 %v2429, 1.0
    %v2436 = vrcp.pop %v2430
    %v2437 = vmul.f32 1.0, %v2436
    %v2438 = vrcp.pop %v2431
    %v2439 = vmul.f32 1.0, %v2438
    %v2440 = vrcp.pop %v2432
    %v2441 = vmul.f32 1.0, %v2440
    %v2442 = vrcp.pop %v2433
    %v2443 = vmul.f32 1.0, %v2442
    %v2444 = vrcp.pop %v2434
    %v2445 = vmul.f32 1.0, %v2444
    %v2446 = vrcp.pop %v2435
    %v2447 = vmul.f32 1.0, %v2446
    %v2448 = vmul.f32 %v2406, %v2437
    %v2449 = vmul.f32 %v2407, %v2439
    %v2450 = vmul.f32 %v2408, %v2441
    %v2451 = vmul.f32 %v2409, %v2443
    %v2452 = vmul.f32 %v2410, %v2445
    %v2453 = vmul.f32 %v2411, %v2447
    %v2454 = vld [vmem:[#allocation10 + $0xe] sm:$0x1]
    %v2455 = vadd.f32 %v2454, 1.0
    %v2456 = vlaneseq
    %v2457 = vshrl.u32 %v2456, 7
    %v2458 = vsub.s32 0, %v2457
    %v2459 = vrot.slane %v2455, %v2458
    %v2460 = vmul.f32 %v2459, %v2166
    %v2461 = vmul.f32 %v2459, %v2171
    %v2462 = vmul.f32 %v2459, %v2176
    %2463 = vmatprep.subr.mxu0 0.0
    %2464 = vmatpush1.msra.mxu0 %v2448
    %2465 = vmatprep.subr.mxu0 0.0
    %2466 = vmatpush1.msra.mxu0 %v2449
    %2467 = vmatprep.subr.mxu0 0.0
    %2468 = vmatpush1.msra.mxu0 %v2450
    %2469 = vmatprep.subr.mxu0 0.0
    %2470 = vmatpush1.msra.mxu0 %v2451
    %2471 = vmatprep.subr.mxu0 0.0
    %2472 = vmatpush1.msra.mxu0 %v2452
    %2473 = vmatprep.subr.mxu0 0.0
    %2474 = vmatpush1.msra.mxu0 %v2453
    %2475 = vmatprep.subr.mxu0 0.0
    %2476 = vmatpush1.msra.mxu0 0.0
    %2477 = vmatprep.subr.mxu0 0.0
    %2478 = vmatpush1.msra.mxu0 0.0
    %2479 = vmatprep.subr.mxu0 0.0
    %2480 = vmatpush1.msra.mxu0 0.0
    %2481 = vmatprep.subr.mxu0 0.0
    %2482 = vmatpush1.msra.mxu0 0.0
    %2483 = vmatprep.subr.mxu0 0.0
    %2484 = vmatpush1.msra.mxu0 0.0
    %2485 = vmatprep.subr.mxu0 0.0
    %2486 = vmatpush1.msra.mxu0 0.0
    %2487 = vmatprep.subr.mxu0 0.0
    %2488 = vmatpush1.msra.mxu0 0.0
    %2489 = vmatprep.subr.mxu0 0.0
    %2490 = vmatpush1.msra.mxu0 0.0
    %2491 = vmatprep.subr.mxu0 0.0
    %2492 = vmatpush1.msra.mxu0 0.0
    %2493 = vmatprep.subr.mxu0 0.0
    %2494 = vmatpush1.msra.mxu0 0.0
    %2495 = vmatprep.subr.mxu0 0.0
    %2496 = vmatpush1.msra.mxu0 0.0
    %2497 = vmatprep.subr.mxu0 0.0
    %2498 = vmatpush1.msra.mxu0 0.0
    %2499 = vmatprep.subr.mxu0 0.0
    %2500 = vmatpush1.msra.mxu0 0.0
    %2501 = vmatprep.subr.mxu0 0.0
    %2502 = vmatpush1.msra.mxu0 0.0
    %2503 = vmatprep.subr.mxu0 0.0
    %2504 = vmatpush1.msra.mxu0 0.0
    %2505 = vmatprep.subr.mxu0 0.0
    %2506 = vmatpush1.msra.mxu0 0.0
    %2507 = vmatprep.subr.mxu0 0.0
    %2508 = vmatpush1.msra.mxu0 0.0
    %2509 = vmatprep.subr.mxu0 0.0
    %2510 = vmatpush1.msra.mxu0 0.0
    %2511 = vmatprep.subr.mxu0 0.0
    %2512 = vmatpush1.msra.mxu0 0.0
    %2513 = vmatprep.subr.mxu0 0.0
    %2514 = vmatpush1.msra.mxu0 0.0
    %2515 = vmatprep.subr.mxu0 0.0
    %2516 = vmatpush1.msra.mxu0 0.0
    %2517 = vmatprep.subr.mxu0 0.0
    %2518 = vmatpush1.msra.mxu0 0.0
    %2519 = vmatprep.subr.mxu0 0.0
    %2520 = vmatpush1.msra.mxu0 0.0
    %2521 = vmatprep.subr.mxu0 0.0
    %2522 = vmatpush1.msra.mxu0 0.0
    %2523 = vmatprep.subr.mxu0 0.0
    %2524 = vmatpush1.msra.mxu0 0.0
    %2525 = vmatprep.subr.mxu0 0.0
    %2526 = vmatpush1.msra.mxu0 0.0
    %2527 = vmatprep.mubr.f32.mxu0 0.0
    %2528 = vmatmul.mubr.f32.gmra.mrb[0].mxu0 %v815
    %v2529 = vpop.f32.mrb[0].mxu0
    %v2530 = vadd.f32 %v2460, %v2529
    %v2531 = vpop.f32.mrb[0].mxu0
    %2532 = vmatprep.mubr.f32.mxu0 0.0
    %2533 = vmatmul.mubr.f32.gmra.mrb[0].mxu0 %v818
    %v2534 = vpop.f32.mrb[0].mxu0
    %v2535 = vadd.f32 %v2461, %v2534
    %v2536 = vpop.f32.mrb[0].mxu0
    %2537 = vmatprep.mubr.f32.mxu0 0.0
    %2538 = vmatmul.mubr.f32.gmra.mrb[0].mxu0 %v821
    %v2539 = vpop.f32.mrb[0].mxu0
    %v2540 = vadd.f32 %v2462, %v2539
    %v2541 = vpop.f32.mrb[0].mxu0
    %2542 = vdwg.mxu0
    %v2543 = vxor.u32 %v2530, 2147483648
    %v2544 = vxor.u32 %v2535, 2147483648
    %v2545 = vxor.u32 %v2540, 2147483648
    %v2546 = vmul.f32 %v2543, 1.442695
    %v2547 = vpow.pop %v2546
    %v2548 = vmul.f32 %v2544, 1.442695
    %v2549 = vpow.pop %v2548
    %v2550 = vmul.f32 %v2545, 1.442695
    %v2551 = vpow.pop %v2550
    %v2552 = vadd.f32 %v2547, 1.0
    %v2553 = vadd.f32 %v2549, 1.0
    %v2554 = vadd.f32 %v2551, 1.0
    %v2555 = vrcp.pop %v2552
    %v2556 = vmul.f32 1.0, %v2555
    %v2557 = vrcp.pop %v2553
    %v2558 = vmul.f32 1.0, %v2557
    %v2559 = vrcp.pop %v2554
    %v2560 = vmul.f32 1.0, %v2559
    %v2561 = vmul.f32 %v2530, %v2556
    %v2562 = vmul.f32 %v2535, %v2558
    %v2563 = vmul.f32 %v2540, %v2560
    %v2564 = vld [vmem:[#allocation10 + $0xf] sm:$0x1]
    %v2565 = vld [vmem:[#allocation10 + $0x10] sm:$0x1]
    %v2566 = vld [vmem:[#allocation10 + $0x11] sm:$0x1]
    %v2567 = vadd.f32 %v1259, %v2561
    %v2568 = vadd.f32 %v1260, %v2562
    %v2569 = vadd.f32 %v1261, %v2563
    %2570 = vmatprep.subr.mxu0 0.0
    %2571 = vmatpush1.msra.mxu0 %v2567
    %2572 = vmatprep.subr.mxu0 0.0
    %2573 = vmatpush1.msra.mxu0 %v2568
    %2574 = vmatprep.subr.mxu0 0.0
    %2575 = vmatpush1.msra.mxu0 %v2569
    %2576 = vmatprep.subr.mxu0 0.0
    %2577 = vmatpush1.msra.mxu0 0.0
    %2578 = vmatprep.subr.mxu0 0.0
    %2579 = vmatpush1.msra.mxu0 0.0
    %2580 = vmatprep.subr.mxu0 0.0
    %2581 = vmatpush1.msra.mxu0 0.0
    %2582 = vmatprep.subr.mxu0 0.0
    %2583 = vmatpush1.msra.mxu0 0.0
    %2584 = vmatprep.subr.mxu0 0.0
    %2585 = vmatpush1.msra.mxu0 0.0
    %2586 = vmatprep.subr.mxu0 0.0
    %2587 = vmatpush1.msra.mxu0 0.0
    %2588 = vmatprep.subr.mxu0 0.0
    %2589 = vmatpush1.msra.mxu0 0.0
    %2590 = vmatprep.subr.mxu0 0.0
    %2591 = vmatpush1.msra.mxu0 0.0
    %2592 = vmatprep.subr.mxu0 0.0
    %2593 = vmatpush1.msra.mxu0 0.0
    %2594 = vmatprep.subr.mxu0 0.0
    %2595 = vmatpush1.msra.mxu0 0.0
    %2596 = vmatprep.subr.mxu0 0.0
    %2597 = vmatpush1.msra.mxu0 0.0
    %2598 = vmatprep.subr.mxu0 0.0
    %2599 = vmatpush1.msra.mxu0 0.0
    %2600 = vmatprep.subr.mxu0 0.0
    %2601 = vmatpush1.msra.mxu0 0.0
    %2602 = vmatprep.subr.mxu0 0.0
    %2603 = vmatpush1.msra.mxu0 0.0
    %2604 = vmatprep.subr.mxu0 0.0
    %2605 = vmatpush1.msra.mxu0 0.0
    %2606 = vmatprep.subr.mxu0 0.0
    %2607 = vmatpush1.msra.mxu0 0.0
    %2608 = vmatprep.subr.mxu0 0.0
    %2609 = vmatpush1.msra.mxu0 0.0
    %2610 = vmatprep.subr.mxu0 0.0
    %2611 = vmatpush1.msra.mxu0 0.0
    %2612 = vmatprep.subr.mxu0 0.0
    %2613 = vmatpush1.msra.mxu0 0.0
    %2614 = vmatprep.subr.mxu0 0.0
    %2615 = vmatpush1.msra.mxu0 0.0
    %2616 = vmatprep.subr.mxu0 0.0
    %2617 = vmatpush1.msra.mxu0 0.0
    %2618 = vmatprep.subr.mxu0 0.0
    %2619 = vmatpush1.msra.mxu0 0.0
    %2620 = vmatprep.subr.mxu0 0.0
    %2621 = vmatpush1.msra.mxu0 0.0
    %2622 = vmatprep.subr.mxu0 0.0
    %2623 = vmatpush1.msra.mxu0 0.0
    %2624 = vmatprep.subr.mxu0 0.0
    %2625 = vmatpush1.msra.mxu0 0.0
    %2626 = vmatprep.subr.mxu0 0.0
    %2627 = vmatpush1.msra.mxu0 0.0
    %2628 = vmatprep.subr.mxu0 0.0
    %2629 = vmatpush1.msra.mxu0 0.0
    %2630 = vmatprep.subr.mxu0 0.0
    %2631 = vmatpush1.msra.mxu0 0.0
    %2632 = vmatprep.subr.mxu0 0.0
    %2633 = vmatpush1.msra.mxu0 0.0
    %2634 = vmatprep.mubr.f32.mxu0 0.0
    %2635 = vmatmul.mubr.f32.gmra.mrb[0].mxu0 %v931
    %v2636 = vpop.f32.mrb[0].mxu0
    %v2637 = vadd.f32 0.0, %v2636
    %v2638 = vpop.f32.mrb[0].mxu0
    %2639 = vdwg.mxu0
    %v2640 = vmul.f32 %v2637, %v1003
    %v2641 = vmul.f32 %v2567, %v2567
    %v2642 = vmul.f32 %v2568, %v2568
    %v2643 = vmul.f32 %v2569, %v2569
    %2644 = vmatprep.subr.mxu0 0.0
    %2645 = vmatpush1.msra.mxu0 %v2641
    %2646 = vmatprep.subr.mxu0 0.0
    %2647 = vmatpush1.msra.mxu0 %v2642
    %2648 = vmatprep.subr.mxu0 0.0
    %2649 = vmatpush1.msra.mxu0 %v2643
    %2650 = vmatprep.subr.mxu0 0.0
    %2651 = vmatpush1.msra.mxu0 0.0
    %2652 = vmatprep.subr.mxu0 0.0
    %2653 = vmatpush1.msra.mxu0 0.0
    %2654 = vmatprep.subr.mxu0 0.0
    %2655 = vmatpush1.msra.mxu0 0.0
    %2656 = vmatprep.subr.mxu0 0.0
    %2657 = vmatpush1.msra.mxu0 0.0
    %2658 = vmatprep.subr.mxu0 0.0
    %2659 = vmatpush1.msra.mxu0 0.0
    %2660 = vmatprep.subr.mxu0 0.0
    %2661 = vmatpush1.msra.mxu0 0.0
    %2662 = vmatprep.subr.mxu0 0.0
    %2663 = vmatpush1.msra.mxu0 0.0
    %2664 = vmatprep.subr.mxu0 0.0
    %2665 = vmatpush1.msra.mxu0 0.0
    %2666 = vmatprep.subr.mxu0 0.0
    %2667 = vmatpush1.msra.mxu0 0.0
    %2668 = vmatprep.subr.mxu0 0.0
    %2669 = vmatpush1.msra.mxu0 0.0
    %2670 = vmatprep.subr.mxu0 0.0
    %2671 = vmatpush1.msra.mxu0 0.0
    %2672 = vmatprep.subr.mxu0 0.0
    %2673 = vmatpush1.msra.mxu0 0.0
    %2674 = vmatprep.subr.mxu0 0.0
    %2675 = vmatpush1.msra.mxu0 0.0
    %2676 = vmatprep.subr.mxu0 0.0
    %2677 = vmatpush1.msra.mxu0 0.0
    %2678 = vmatprep.subr.mxu0 0.0
    %2679 = vmatpush1.msra.mxu0 0.0
    %2680 = vmatprep.subr.mxu0 0.0
    %2681 = vmatpush1.msra.mxu0 0.0
    %2682 = vmatprep.subr.mxu0 0.0
    %2683 = vmatpush1.msra.mxu0 0.0
    %2684 = vmatprep.subr.mxu0 0.0
    %2685 = vmatpush1.msra.mxu0 0.0
    %2686 = vmatprep.subr.mxu0 0.0
    %2687 = vmatpush1.msra.mxu0 0.0
    %2688 = vmatprep.subr.mxu0 0.0
    %2689 = vmatpush1.msra.mxu0 0.0
    %2690 = vmatprep.subr.mxu0 0.0
    %2691 = vmatpush1.msra.mxu0 0.0
    %2692 = vmatprep.subr.mxu0 0.0
    %2693 = vmatpush1.msra.mxu0 0.0
    %2694 = vmatprep.subr.mxu0 0.0
    %2695 = vmatpush1.msra.mxu0 0.0
    %2696 = vmatprep.subr.mxu0 0.0
    %2697 = vmatpush1.msra.mxu0 0.0
    %2698 = vmatprep.subr.mxu0 0.0
    %2699 = vmatpush1.msra.mxu0 0.0
    %2700 = vmatprep.subr.mxu0 0.0
    %2701 = vmatpush1.msra.mxu0 0.0
    %2702 = vmatprep.subr.mxu0 0.0
    %2703 = vmatpush1.msra.mxu0 0.0
    %2704 = vmatprep.subr.mxu0 0.0
    %2705 = vmatpush1.msra.mxu0 0.0
    %2706 = vmatprep.subr.mxu0 0.0
    %2707 = vmatpush1.msra.mxu0 0.0
    %2708 = vmatprep.mubr.f32.mxu0 0.0
    %2709 = vmatmul.mubr.f32.gmra.mrb[0].mxu0 %v931
    %v2710 = vpop.f32.mrb[0].mxu0
    %v2711 = vadd.f32 0.0, %v2710
    %v2712 = vpop.f32.mrb[0].mxu0
    %2713 = vdwg.mxu0
    %v2714 = vmul.f32 %v2711, %v1003
    %v2716 = vsel %vm1121, %v2640, 0
    %v2719 = vsel %vm1121, %v2714, 0
    %2721 = vmatprep.subr.mxu0 %v2719
    %2722 = vmatpush1.msra.mxu0 %v2716
    %2723 = vmatprep.subr.mxu0 0.0
    %2724 = vmatpush1.msra.mxu0 0.0
    %2725 = vmatprep.subr.mxu0 0.0
    %2726 = vmatpush1.msra.mxu0 0.0
    %2727 = vmatprep.subr.mxu0 0.0
    %2728 = vmatpush1.msra.mxu0 0.0
    %2729 = vmatprep.subr.mxu0 0.0
    %2730 = vmatpush1.msra.mxu0 0.0
    %2731 = vmatprep.subr.mxu0 0.0
    %2732 = vmatpush1.msra.mxu0 0.0
    %2733 = vmatprep.subr.mxu0 0.0
    %2734 = vmatpush1.msra.mxu0 0.0
    %2735 = vmatprep.subr.mxu0 0.0
    %2736 = vmatpush1.msra.mxu0 0.0
    %2737 = vmatprep.subr.mxu0 0.0
    %2738 = vmatpush1.msra.mxu0 0.0
    %2739 = vmatprep.subr.mxu0 0.0
    %2740 = vmatpush1.msra.mxu0 0.0
    %2741 = vmatprep.subr.mxu0 0.0
    %2742 = vmatpush1.msra.mxu0 0.0
    %2743 = vmatprep.subr.mxu0 0.0
    %2744 = vmatpush1.msra.mxu0 0.0
    %2745 = vmatprep.subr.mxu0 0.0
    %2746 = vmatpush1.msra.mxu0 0.0
    %2747 = vmatprep.subr.mxu0 0.0
    %2748 = vmatpush1.msra.mxu0 0.0
    %2749 = vmatprep.subr.mxu0 0.0
    %2750 = vmatpush1.msra.mxu0 0.0
    %2751 = vmatprep.subr.mxu0 0.0
    %2752 = vmatpush1.msra.mxu0 0.0
    %2753 = vmatprep.subr.mxu0 0.0
    %2754 = vmatpush1.msra.mxu0 0.0
    %2755 = vmatprep.subr.mxu0 0.0
    %2756 = vmatpush1.msra.mxu0 0.0
    %2757 = vmatprep.subr.mxu0 0.0
    %2758 = vmatpush1.msra.mxu0 0.0
    %2759 = vmatprep.subr.mxu0 0.0
    %2760 = vmatpush1.msra.mxu0 0.0
    %2761 = vmatprep.subr.mxu0 0.0
    %2762 = vmatpush1.msra.mxu0 0.0
    %2763 = vmatprep.subr.mxu0 0.0
    %2764 = vmatpush1.msra.mxu0 0.0
    %2765 = vmatprep.subr.mxu0 0.0
    %2766 = vmatpush1.msra.mxu0 0.0
    %2767 = vmatprep.subr.mxu0 0.0
    %2768 = vmatpush1.msra.mxu0 0.0
    %2769 = vmatprep.subr.mxu0 0.0
    %2770 = vmatpush1.msra.mxu0 0.0
    %2771 = vmatprep.subr.mxu0 0.0
    %2772 = vmatpush1.msra.mxu0 0.0
    %2773 = vmatprep.subr.mxu0 0.0
    %2774 = vmatpush1.msra.mxu0 0.0
    %2775 = vmatprep.subr.mxu0 0.0
    %2776 = vmatpush1.msra.mxu0 0.0
    %2777 = vmatprep.subr.mxu0 0.0
    %2778 = vmatpush1.msra.mxu0 0.0
    %2779 = vmatprep.subr.mxu0 0.0
    %2780 = vmatpush1.msra.mxu0 0.0
    %2781 = vmatprep.subr.mxu0 0.0
    %2782 = vmatpush1.msra.mxu0 0.0
    %2783 = vmatprep.subr.mxu0 0.0
    %2784 = vmatpush1.msra.mxu0 0.0
    %2785 = vmatprep.mubr.f32.mxu0 0.0
    %2786 = vmatmul.mubr.f32.gmra.mrb[0].mxu0 %v1113
    %v2787 = vpop.f32.mrb[0].mxu0
    %v2788 = vadd.f32 0.0, %v2787
    %v2789 = vpop.f32.mrb[0].mxu0
    %v2790 = vadd.f32 0.0, %v2789
    %2791 = vmatprep.mubr.f32.mxu0 0.0
    %2792 = vmatmul.mubr.f32.gmra.mrb[0].mxu0 %v1116
    %v2793 = vpop.f32.mrb[0].mxu0
    %v2794 = vadd.f32 0.0, %v2793
    %v2795 = vpop.f32.mrb[0].mxu0
    %v2796 = vadd.f32 0.0, %v2795
    %2797 = vmatprep.mubr.f32.mxu0 0.0
    %2798 = vmatmul.mubr.f32.gmra.mrb[0].mxu0 %v1119
    %v2799 = vpop.f32.mrb[0].mxu0
    %v2800 = vadd.f32 0.0, %v2799
    %v2801 = vpop.f32.mrb[0].mxu0
    %v2802 = vadd.f32 0.0, %v2801
    %2803 = vdwg.mxu0
    %v2804 = vlaneseq
    %v2805 = vshrl.u32 %v2804, 7
    %v2806 = vsub.s32 0, %v2805
    %v2807 = vrot.slane %v2566, %v2806
    %v2808 = vmul.f32 %v2807, %v2788
    %v2809 = vmul.f32 %v2807, %v2794
    %v2810 = vmul.f32 %v2807, %v2800
    %v2811 = vsub.f32 %v2567, %v2808
    %v2812 = vsub.f32 %v2568, %v2809
    %v2813 = vsub.f32 %v2569, %v2810
    %v2814 = vsub.f32 2.0, %v2566
    %v2815 = vmul.f32 %v2566, %v2814
    %v2816 = vmul.f32 %v2788, %v2788
    %v2817 = vmul.f32 %v2794, %v2794
    %v2818 = vmul.f32 %v2800, %v2800
    %v2819 = vlaneseq
    %v2820 = vshrl.u32 %v2819, 7
    %v2821 = vsub.s32 0, %v2820
    %v2822 = vrot.slane %v2815, %v2821
    %v2823 = vmul.f32 %v2822, %v2816
    %v2824 = vmul.f32 %v2822, %v2817
    %v2825 = vmul.f32 %v2822, %v2818
    %v2826 = vsub.f32 %v2790, %v2823
    %v2827 = vsub.f32 %v2796, %v2824
    %v2828 = vsub.f32 %v2802, %v2825
    %v2829 = vmax.f32 %v2826, 0.0
    %v2830 = vmax.f32 %v2827, 0.0
    %v2831 = vmax.f32 %v2828, 0.0
    %v2832 = vlaneseq
    %v2833 = vshrl.u32 %v2832, 7
    %v2834 = vsub.s32 0, %v2833
    %v2835 = vrot.slane %v2564, %v2834
    %v2836 = vmul.f32 %v2835, %v2811
    %v2837 = vmul.f32 %v2835, %v2812
    %v2838 = vmul.f32 %v2835, %v2813
    %v2839 = vadd.f32 %v2829, 1e-05
    %v2840 = vadd.f32 %v2830, 1e-05
    %v2841 = vadd.f32 %v2831, 1e-05
    %v2842 = vrsqrt.pop %v2839
    %v2843 = vrsqrt.pop %v2840
    %v2844 = vrsqrt.pop %v2841
    %v2845 = vmul.f32 %v2836, %v2842
    %v2846 = vmul.f32 %v2837, %v2843
    %v2847 = vmul.f32 %v2838, %v2844
    %v2848 = vlaneseq
    %v2849 = vshrl.u32 %v2848, 7
    %v2850 = vsub.s32 0, %v2849
    %v2851 = vrot.slane %v2565, %v2850
    %v2852 = vadd.f32 %v2845, %v2851
    %v2853 = vadd.f32 %v2846, %v2851
    %v2854 = vadd.f32 %v2847, %v2851
    %v2855 = vld [vmem:[#allocation8 + $0x630] sm:$0xff]
    %v2856 = vld [vmem:[#allocation8 + $0x640] sm:$0xff]
    %v2857 = vld [vmem:[#allocation8 + $0x650] sm:$0xff]
    %v2858 = vld [vmem:[#allocation8 + $0x660] sm:$0xff]
    %v2859 = vld [vmem:[#allocation8 + $0x670] sm:$0xff]
    %v2860 = vld [vmem:[#allocation8 + $0x680] sm:$0xff]
    %v2861 = vld [vmem:[#allocation8 + $0x690] sm:$0xff]
    %v2862 = vld [vmem:[#allocation8 + $0x6a0] sm:$0xff]
    %v2863 = vld [vmem:[#allocation8 + $0x6b0] sm:$0xff]
    %v2864 = vld [vmem:[#allocation8 + $0x6c0] sm:$0xff]
    %v2865 = vld [vmem:[#allocation8 + $0x6d0] sm:$0xff]
    %v2866 = vld [vmem:[#allocation8 + $0x6e0] sm:$0xff]
    %v2867 = vld [vmem:[#allocation8 + $0x6f0] sm:$0xff]
    %v2868 = vld [vmem:[#allocation8 + $0x700] sm:$0xff]
    %v2869 = vld [vmem:[#allocation8 + $0x710] sm:$0xff]
    %v2870 = vld [vmem:[#allocation8 + $0x720] sm:$0xff]
    %v2871 = vld [vmem:[#allocation10 + $0x16] sm:$0x1]
    %v2872 = vlaneseq
    %v2873 = vshrl.u32 %v2872, 7
    %v2874 = vsub.s32 0, %v2873
    %v2875 = vrot.slane %v2871, %v2874
    %2876 = vmatprep.subr.mxu0 0.0
    %2877 = vmatpush1.msra.mxu0 %v2855
    %2878 = vmatprep.subr.mxu0 0.0
    %2879 = vmatpush1.msra.mxu0 %v2856
    %2880 = vmatprep.subr.mxu0 0.0
    %2881 = vmatpush1.msra.mxu0 %v2857
    %2882 = vmatprep.subr.mxu0 0.0
    %2883 = vmatpush1.msra.mxu0 %v2858
    %2884 = vmatprep.subr.mxu0 0.0
    %2885 = vmatpush1.msra.mxu0 %v2859
    %2886 = vmatprep.subr.mxu0 0.0
    %2887 = vmatpush1.msra.mxu0 %v2860
    %2888 = vmatprep.subr.mxu0 0.0
    %2889 = vmatpush1.msra.mxu0 %v2861
    %2890 = vmatprep.subr.mxu0 0.0
    %2891 = vmatpush1.msra.mxu0 %v2862
    %2892 = vmatprep.subr.mxu0 0.0
    %2893 = vmatpush1.msra.mxu0 %v2863
    %2894 = vmatprep.subr.mxu0 0.0
    %2895 = vmatpush1.msra.mxu0 %v2864
    %2896 = vmatprep.subr.mxu0 0.0
    %2897 = vmatpush1.msra.mxu0 %v2865
    %2898 = vmatprep.subr.mxu0 0.0
    %2899 = vmatpush1.msra.mxu0 %v2866
    %2900 = vmatprep.subr.mxu0 0.0
    %2901 = vmatpush1.msra.mxu0 %v2867
    %2902 = vmatprep.subr.mxu0 0.0
    %2903 = vmatpush1.msra.mxu0 %v2868
    %2904 = vmatprep.subr.mxu0 0.0
    %2905 = vmatpush1.msra.mxu0 %v2869
    %2906 = vmatprep.subr.mxu0 0.0
    %2907 = vmatpush1.msra.mxu0 %v2870
    %2908 = vmatprep.subr.mxu0 0.0
    %2909 = vmatpush1.msra.mxu0 0.0
    %2910 = vmatprep.subr.mxu0 0.0
    %2911 = vmatpush1.msra.mxu0 0.0
    %2912 = vmatprep.subr.mxu0 0.0
    %2913 = vmatpush1.msra.mxu0 0.0
    %2914 = vmatprep.subr.mxu0 0.0
    %2915 = vmatpush1.msra.mxu0 0.0
    %2916 = vmatprep.subr.mxu0 0.0
    %2917 = vmatpush1.msra.mxu0 0.0
    %2918 = vmatprep.subr.mxu0 0.0
    %2919 = vmatpush1.msra.mxu0 0.0
    %2920 = vmatprep.subr.mxu0 0.0
    %2921 = vmatpush1.msra.mxu0 0.0
    %2922 = vmatprep.subr.mxu0 0.0
    %2923 = vmatpush1.msra.mxu0 0.0
    %2924 = vmatprep.subr.mxu0 0.0
    %2925 = vmatpush1.msra.mxu0 0.0
    %2926 = vmatprep.subr.mxu0 0.0
    %2927 = vmatpush1.msra.mxu0 0.0
    %2928 = vmatprep.subr.mxu0 0.0
    %2929 = vmatpush1.msra.mxu0 0.0
    %2930 = vmatprep.subr.mxu0 0.0
    %2931 = vmatpush1.msra.mxu0 0.0
    %2932 = vmatprep.subr.mxu0 0.0
    %2933 = vmatpush1.msra.mxu0 0.0
    %2934 = vmatprep.subr.mxu0 0.0
    %2935 = vmatpush1.msra.mxu0 0.0
    %2936 = vmatprep.subr.mxu0 0.0
    %2937 = vmatpush1.msra.mxu0 0.0
    %2938 = vmatprep.subr.mxu0 0.0
    %2939 = vmatpush1.msra.mxu0 0.0
    %2940 = vmatprep.mubr.f32.mxu0 0.0
    %2941 = vmatmul.mubr.f32.gmra.mrb[0].mxu0 %v2852
    %v2942 = vpop.f32.mrb[0].mxu0
    %v2943 = vadd.f32 %v2875, %v2942
    %v2944 = vpop.f32.mrb[0].mxu0
    %2945 = vmatprep.mubr.f32.mxu0 0.0
    %2946 = vmatmul.mubr.f32.gmra.mrb[0].mxu0 %v2853
    %v2947 = vpop.f32.mrb[0].mxu0
    %v2948 = vadd.f32 %v2875, %v2947
    %v2949 = vpop.f32.mrb[0].mxu0
    %2950 = vmatprep.mubr.f32.mxu0 0.0
    %2951 = vmatmul.mubr.f32.gmra.mrb[0].mxu0 %v2854
    %v2952 = vpop.f32.mrb[0].mxu0
    %v2953 = vadd.f32 %v2875, %v2952
    %v2954 = vpop.f32.mrb[0].mxu0
    %2955 = vdwg.mxu0
    %2956 = vst [vmem:[#allocation11] sm:$0xff] %v2943
    %2957 = vst [vmem:[#allocation11 + $0x8] sm:$0xff] %v2948
    %2958 = vst [vmem:[#allocation11 + $0x10] sm:$0xff] %v2953
    // Predicated region
    $region42: #{tpu_custom_call.1} parent=1 // pred_check
      _
    $region43: #{tpu_custom_call.1} parent=1 // pred_check_branch
      %2960 = sbr.rel (0) target = $region45
    $region44: #{tpu_custom_call.1} parent=1 // pred_region
      %s2962 = ssub.s32 384, 384
      %2963 = vsyncadd [#allocation4], %s2962
      %s2964 = sshll.u32 [#allocation11], 4
      %s2965 = int_to_ptr.vmem [resolvable:$true] %s2964
      %2970 = dma.vmem_to_hbm [thread:$0]  %s2965, 384, %s5, [#allocation4], 128, 128, 8
    $region45: #{tpu_custom_call.1} parent=1 // pred_fallthru
      _
    // Predicated region
    $region46: #{tpu_custom_call.1} parent=1 // pred_check
      _
    $region47: #{tpu_custom_call.1} parent=1 // pred_check_branch
      %2972 = sbr.rel (0) target = $region49
    $region48: #{tpu_custom_call.1} parent=1 // pred_region
      %2973 = dma.done [#allocation4], 384
    $region49: #{tpu_custom_call.1} parent=1 // pred_fallthru
      _
    %2974 = vsyncpa [#allocation3], 1
    %2975 = vsyncpa [#allocation6], 1
    %2976 = vsyncpa [#allocation9], 1
    %2977 = vsyncpa [#allocation4], 1

</llo_original>
